<compile_context>
chip_gen: v7x
topology: tpu7x:2x2x1
jax: 0.10.0
libtpu: 0.0.40
codegen_flags: <defaults>
</compile_context>

<pallas_src>
import functools

import jax
import jax.numpy as jnp
from jax.experimental import pallas as pl
from jax.experimental.pallas import tpu as pltpu

# ---- small synthetic BERT config (module uses hidden=768, 12 layers, 12 heads;
#      shrunk deterministically for a runnable demo, same structure) ----
NUM_AGES, NUM_GENDERS, NUM_ETH, NUM_INS = 90, 2, 6, 5
VOCAB = NUM_AGES + NUM_GENDERS + NUM_ETH + NUM_INS + 2
HIDDEN = 128
NUM_HEADS = 4
HEAD_DIM = HIDDEN // NUM_HEADS
INTERMEDIATE = 512
NUM_LAYERS = 2
MAX_POS = 512
LN_EPS = 1e-12


def _layernorm(x, g, b):
    mu = jnp.mean(x, axis=-1, keepdims=True)
    var = jnp.mean((x - mu) ** 2, axis=-1, keepdims=True)
    return (x - mu) * jax.lax.rsqrt(var + LN_EPS) * g + b


def _gelu(x):
    # tanh-approximate GELU (HF BERT's exact erf-GELU differs negligibly)
    return 0.5 * x * (1.0 + jnp.tanh(0.7978845608028654 * (x + 0.044715 * x * x * x)))


# ---------------------------- fused Pallas kernel ----------------------------

def fused_behrt_kernel(x_emb_ref, bias_ref, extra_ref, emb_g_ref, emb_b_ref,
                       wqkv_ref, bqkv_ref, wo_ref, bo_ref, ln1_g_ref, ln1_b_ref,
                       w1_ref, b1_ref, w2_ref, b2_ref, ln2_g_ref, ln2_b_ref,
                       out_ref, x_scr, *, bb, seq):
    """One grid step = (batch block, encoder layer)."""
    layer = pl.program_id(1)
    m = bb * seq                                    # token rows in this block

    @pl.when(layer == 0)
    def _():                                        # embedding LayerNorm prologue
        x_scr[...] = _layernorm(x_emb_ref[...], emb_g_ref[...], emb_b_ref[...])

    x = x_scr[...]                                  # (M, H) f32, resident in VMEM
    xb = x.astype(jnp.bfloat16)

    # Fused Q/K/V projection (attention scale already folded into Wq/bq).
    qkv = jnp.dot(xb, wqkv_ref[0], preferred_element_type=jnp.float32) + bqkv_ref[0]

    bias = bias_ref[...]                            # (bb, 1, S) additive key mask
    wo = wo_ref[0]                                  # (H, H) bf16

    attn = jnp.zeros((m, HIDDEN), jnp.float32)
    for h in range(NUM_HEADS):                      # static unroll; no lane concat
        lo = h * HEAD_DIM
        qh = qkv[:, lo:lo + HEAD_DIM].astype(jnp.bfloat16).reshape(bb, seq, HEAD_DIM)
        kh = qkv[:, HIDDEN + lo:HIDDEN + lo + HEAD_DIM].astype(jnp.bfloat16) \
            .reshape(bb, seq, HEAD_DIM)
        vh = qkv[:, 2 * HIDDEN + lo:2 * HIDDEN + lo + HEAD_DIM].astype(jnp.bfloat16) \
            .reshape(bb, seq, HEAD_DIM)

        s = jnp.einsum('bqd,bkd->bqk', qh, kh, preferred_element_type=jnp.float32)
        s = s + bias
        s = s - jnp.max(s, axis=-1, keepdims=True)
        p = jnp.exp(s)
        p = p * pl.reciprocal(jnp.sum(p, axis=-1, keepdims=True), approx=True)
        ctx = jnp.einsum('bqk,bkd->bqd', p.astype(jnp.bfloat16), vh,
                         preferred_element_type=jnp.float32)
        # concat_h(ctx_h) @ Wo  ==  sum_h ctx_h @ Wo[h*D:(h+1)*D, :]
        attn = attn + jnp.dot(ctx.reshape(m, HEAD_DIM).astype(jnp.bfloat16),
                              wo[lo:lo + HEAD_DIM, :],
                              preferred_element_type=jnp.float32)
    attn = attn + bo_ref[0]

    x1 = _layernorm(x + attn, ln1_g_ref[0], ln1_b_ref[0])

    hmid = _gelu(jnp.dot(x1.astype(jnp.bfloat16), w1_ref[0],
                         preferred_element_type=jnp.float32) + b1_ref[0])
    ff = jnp.dot(hmid.astype(jnp.bfloat16), w2_ref[0],
                 preferred_element_type=jnp.float32) + b2_ref[0]
    x2 = _layernorm(x1 + ff, ln2_g_ref[0], ln2_b_ref[0])

    x_scr[...] = x2                                 # carried to the next layer

    @pl.when(layer == pl.num_programs(1) - 1)
    def _():                                        # CLS + demographic fusion
        cls = x2.reshape(bb, seq, HIDDEN)[:, 0, :]  # (bb, H)
        out_ref[...] = cls + extra_ref[...]


# ---------------------------- wrappers ----------------------------

LAYER_KEYS = ("wqkv", "bqkv", "wo", "bo", "ln1_g", "ln1_b",
              "w1", "b1", "w2", "b2", "ln2_g", "ln2_b")


def pack_layer_params(layers):
    """Stack per-layer params to [L, ...], fuse QKV, fold the attention scale
    into Wq/bq, and cast weight matrices to bf16 (f32 accumulation in-kernel)."""
    def stack(k):
        return jnp.stack([lp[k] for lp in layers])
    scale = 1.0 / (HEAD_DIM ** 0.5)
    wqkv = jnp.concatenate([stack("wq") * scale, stack("wk"), stack("wv")], axis=-1)
    bqkv = jnp.concatenate([stack("bq") * scale, stack("bk"), stack("bv")], axis=-1)
    return {
        "wqkv": wqkv.astype(jnp.bfloat16), "bqkv": bqkv,
        "wo": stack("wo").astype(jnp.bfloat16), "bo": stack("bo"),
        "ln1_g": stack("ln1_g"), "ln1_b": stack("ln1_b"),
        "w1": stack("w1").astype(jnp.bfloat16), "b1": stack("b1"),
        "w2": stack("w2").astype(jnp.bfloat16), "b2": stack("b2"),
        "ln2_g": stack("ln2_g"), "ln2_b": stack("ln2_b"),
    }


def behrt_encoder_fused(x_emb, mask_bias, extra, emb_g, emb_b, pk, batch, seq):
    """x_emb: (B*S, H) embedding sums; mask_bias: (B, 1, S); extra: (B, H)."""
    nl = pk["wqkv"].shape[0]
    # Batch block: whole batch unless it is large enough to give every grid step
    # >= 128 token rows (keeps both v7x TensorCores fed at the real config).
    bb = min(batch, max(1, -(-128 // seq)))
    while batch % bb:
        bb -= 1
    nb = batch // bb
    m = bb * seq

    def lspec(shape):
        return pl.BlockSpec((1,) + shape[1:],
                            lambda b, l: (l,) + (0,) * (len(shape) - 1))

    in_specs = [
        pl.BlockSpec((m, HIDDEN), lambda b, l: (b, 0)),       # x_emb (flat token rows)
        pl.BlockSpec((bb, 1, seq), lambda b, l: (b, 0, 0)),   # additive key mask
        pl.BlockSpec((bb, HIDDEN), lambda b, l: (b, 0)),      # demographic extra
        pl.BlockSpec((1, HIDDEN), lambda b, l: (0, 0)),       # emb LN gamma
        pl.BlockSpec((1, HIDDEN), lambda b, l: (0, 0)),       # emb LN beta
    ] + [lspec(pk[k].shape) for k in LAYER_KEYS]

    kernel = functools.partial(fused_behrt_kernel, bb=bb, seq=seq)
    return pl.pallas_call(
        kernel,
        grid=(nb, nl),
        in_specs=in_specs,
        out_specs=pl.BlockSpec((bb, HIDDEN), lambda b, l: (b, 0)),
        out_shape=jax.ShapeDtypeStruct((batch, HIDDEN), jnp.float32),
        scratch_shapes=[pltpu.VMEM((m, HIDDEN), jnp.float32)],
        compiler_params=pltpu.CompilerParams(
            dimension_semantics=("parallel", "arbitrary")),
    )(x_emb, mask_bias, extra, emb_g, emb_b, *[pk[k] for k in LAYER_KEYS])


def behrt_demo_forward(params, input_ids, attention_mask,
                       age_ids, gender_ids, ethnicity_ids, insurance_ids):
    B, S = input_ids.shape
    age_ids = jnp.clip(age_ids, 0, NUM_AGES - 1)
    gender_ids = jnp.clip(gender_ids, 0, NUM_GENDERS - 1)
    ethnicity_ids = jnp.clip(ethnicity_ids, 0, NUM_ETH - 1)
    insurance_ids = jnp.clip(insurance_ids, 0, NUM_INS - 1)

    # Embedding-table gathers stay in plain JAX (XLA fuses them); everything
    # downstream (emb LayerNorm, encoder, CLS + demo fusion) runs in Pallas.
    we = params["word_emb"][input_ids]                     # (B,S,H)
    pe = params["pos_emb"][:S][None, :, :]                 # (1,S,H)
    te = params["type_emb"][0][None, None, :]              # token_type_ids = 0
    x_emb = (we + pe + te).reshape(B * S, HIDDEN)

    mask_bias = ((1.0 - attention_mask.astype(jnp.float32)) * -1e9).reshape(B, 1, S)

    extra = (params["age_emb"][age_ids] + params["gender_emb"][gender_ids]
             + params["ethnicity_emb"][ethnicity_ids]
             + params["insurance_emb"][insurance_ids]) * 0.25

    pk = pack_layer_params(params["layers"])
    # TODO(synk): dropout (hidden/attention dropout) omitted — eval-mode forward.
    return behrt_encoder_fused(x_emb, mask_bias, extra,
                               params["emb_ln_g"], params["emb_ln_b"], pk, B, S)


# ---------------------------- params ----------------------------

def init_params(key):
    keys = iter(jax.random.split(key, 64))

    def w(shape):
        return 0.02 * jax.random.normal(next(keys), shape, jnp.float32)

    params = {
        "word_emb": w((VOCAB, HIDDEN)),
        "pos_emb": w((MAX_POS, HIDDEN)),
        "type_emb": w((2, HIDDEN)),
        "emb_ln_g": jnp.ones((1, HIDDEN), jnp.float32),
        "emb_ln_b": jnp.zeros((1, HIDDEN), jnp.float32),
        "age_emb": w((NUM_AGES, HIDDEN)),
        "gender_emb": w((NUM_GENDERS, HIDDEN)),
        "ethnicity_emb": w((NUM_ETH, HIDDEN)),
        "insurance_emb": w((NUM_INS, HIDDEN)),
        "layers": [],
    }
    for _ in range(NUM_LAYERS):
        params["layers"].append({
            "wq": w((HIDDEN, HIDDEN)), "bq": jnp.zeros((1, HIDDEN), jnp.float32),
            "wk": w((HIDDEN, HIDDEN)), "bk": jnp.zeros((1, HIDDEN), jnp.float32),
            "wv": w((HIDDEN, HIDDEN)), "bv": jnp.zeros((1, HIDDEN), jnp.float32),
            "wo": w((HIDDEN, HIDDEN)), "bo": jnp.zeros((1, HIDDEN), jnp.float32),
            "ln1_g": jnp.ones((1, HIDDEN), jnp.float32),
            "ln1_b": jnp.zeros((1, HIDDEN), jnp.float32),
            "w1": w((HIDDEN, INTERMEDIATE)),
            "b1": jnp.zeros((1, INTERMEDIATE), jnp.float32),
            "w2": w((INTERMEDIATE, HIDDEN)),
            "b2": jnp.zeros((1, HIDDEN), jnp.float32),
            "ln2_g": jnp.ones((1, HIDDEN), jnp.float32),
            "ln2_b": jnp.zeros((1, HIDDEN), jnp.float32),
        })
    return params


if __name__ == "__main__":
    key = jax.random.PRNGKey(0)
    pkey, ikey = jax.random.split(key)
    params = init_params(pkey)

    B, S = 2, 8
    k1, k2, k3, k4, k5 = jax.random.split(ikey, 5)
    input_ids = jax.random.randint(k1, (B, S), 0, VOCAB, jnp.int32)
    attention_mask = jnp.ones((B, S), jnp.int32).at[1, S - 2:].set(0)
    age_ids = jax.random.randint(k2, (B,), 0, 120, jnp.int32)        # >max exercises clamp
    gender_ids = jax.random.randint(k3, (B,), 0, NUM_GENDERS, jnp.int32)
    ethnicity_ids = jax.random.randint(k4, (B,), 0, NUM_ETH, jnp.int32)
    insurance_ids = jax.random.randint(k5, (B,), 0, NUM_INS, jnp.int32)

    fwd = jax.jit(behrt_demo_forward)
    out = fwd(params, input_ids, attention_mask,
              age_ids, gender_ids, ethnicity_ids, insurance_ids)
    jax.block_until_ready(out)
    assert out.shape == (B, HIDDEN) and out.dtype == jnp.float32
    print("KERNEL_OK")
</pallas_src>

<mosaic_0001>
module attributes {stable_mosaic.version = 11 : i64} {
  func.func @fused_behrt_kernel(%arg0: i32, %arg1: i32, %arg2: memref<16x128xf32, #tpu.memory_space<vmem>>, %arg3: memref<2x1x8xf32, #tpu.memory_space<vmem>>, %arg4: memref<2x128xf32, #tpu.memory_space<vmem>>, %arg5: memref<1x128xf32, #tpu.memory_space<vmem>>, %arg6: memref<1x128xf32, #tpu.memory_space<vmem>>, %arg7: memref<1x128x384xbf16, #tpu.memory_space<vmem>>, %arg8: memref<1x1x384xf32, #tpu.memory_space<vmem>>, %arg9: memref<1x128x128xbf16, #tpu.memory_space<vmem>>, %arg10: memref<1x1x128xf32, #tpu.memory_space<vmem>>, %arg11: memref<1x1x128xf32, #tpu.memory_space<vmem>>, %arg12: memref<1x1x128xf32, #tpu.memory_space<vmem>>, %arg13: memref<1x128x512xbf16, #tpu.memory_space<vmem>>, %arg14: memref<1x1x512xf32, #tpu.memory_space<vmem>>, %arg15: memref<1x512x128xbf16, #tpu.memory_space<vmem>>, %arg16: memref<1x1x128xf32, #tpu.memory_space<vmem>>, %arg17: memref<1x1x128xf32, #tpu.memory_space<vmem>>, %arg18: memref<1x1x128xf32, #tpu.memory_space<vmem>>, %arg19: memref<2x128xf32, #tpu.memory_space<vmem>>, %arg20: memref<16x128xf32, #tpu.memory_space<vmem>>) attributes {dimension_semantics = [#tpu.dimension_semantics<parallel>, #tpu.dimension_semantics<arbitrary>], iteration_bounds = array<i64: 1, 2>, scalar_prefetch = 0 : i64, scratch_operands = 1 : i64, tpu.core_type = #tpu.core_type<tc>, window_params = [{transform_indices = @transform_0, window_bounds = array<i64: 16, 128>}, {transform_indices = @transform_1, window_bounds = array<i64: 2, 1, 8>}, {transform_indices = @transform_2, window_bounds = array<i64: 2, 128>}, {pipeline_mode = #tpu.pipeline_mode<synchronous>, transform_indices = @transform_3, window_bounds = array<i64: 1, 128>}, {pipeline_mode = #tpu.pipeline_mode<synchronous>, transform_indices = @transform_4, window_bounds = array<i64: 1, 128>}, {transform_indices = @transform_5, window_bounds = array<i64: 1, 128, 384>}, {transform_indices = @transform_6, window_bounds = array<i64: 1, 1, 384>}, {transform_indices = @transform_7, window_bounds = array<i64: 1, 128, 128>}, {transform_indices = @transform_8, window_bounds = array<i64: 1, 1, 128>}, {transform_indices = @transform_9, window_bounds = array<i64: 1, 1, 128>}, {transform_indices = @transform_10, window_bounds = array<i64: 1, 1, 128>}, {transform_indices = @transform_11, window_bounds = array<i64: 1, 128, 512>}, {transform_indices = @transform_12, window_bounds = array<i64: 1, 1, 512>}, {transform_indices = @transform_13, window_bounds = array<i64: 1, 512, 128>}, {transform_indices = @transform_14, window_bounds = array<i64: 1, 1, 128>}, {transform_indices = @transform_15, window_bounds = array<i64: 1, 1, 128>}, {transform_indices = @transform_16, window_bounds = array<i64: 1, 1, 128>}, {transform_indices = @transform_17, window_bounds = array<i64: 2, 128>}]} {
    %c0_i32 = arith.constant 0 : i32
    %0 = arith.cmpi eq, %arg1, %c0_i32 : i32
    %1 = arith.extui %0 : i1 to i32
    %c0_i32_0 = arith.constant 0 : i32
    %2 = arith.cmpi ne, %1, %c0_i32_0 : i32
    scf.if %2 {
      %c0_81 = arith.constant 0 : index
      %c0_82 = arith.constant 0 : index
      %223 = vector.load %arg2[%c0_81, %c0_82] : memref<16x128xf32, #tpu.memory_space<vmem>>, vector<16x128xf32>
      %c0_83 = arith.constant 0 : index
      %c0_84 = arith.constant 0 : index
      %224 = vector.load %arg5[%c0_83, %c0_84] : memref<1x128xf32, #tpu.memory_space<vmem>>, vector<1x128xf32>
      %c0_85 = arith.constant 0 : index
      %c0_86 = arith.constant 0 : index
      %225 = vector.load %arg6[%c0_85, %c0_86] : memref<1x128xf32, #tpu.memory_space<vmem>>, vector<1x128xf32>
      %cst_87 = arith.constant dense<0.000000e+00> : vector<16xf32>
      %226 = vector.multi_reduction <add>, %223, %cst_87 [1] : vector<16x128xf32> to vector<16xf32>
      %227 = vector.shape_cast %226 : vector<16xf32> to vector<16x1xf32>
      %cst_88 = arith.constant 1.280000e+02 : f32
      %228 = vector.broadcast %cst_88 : f32 to vector<16x1xf32>
      %229 = arith.divf %227, %228 : vector<16x1xf32>
      %230 = vector.broadcast %229 : vector<16x1xf32> to vector<16x128xf32>
      %231 = arith.subf %223, %230 : vector<16x128xf32>
      %232 = arith.mulf %231, %231 : vector<16x128xf32>
      %cst_89 = arith.constant dense<0.000000e+00> : vector<16xf32>
      %233 = vector.multi_reduction <add>, %232, %cst_89 [1] : vector<16x128xf32> to vector<16xf32>
      %234 = vector.shape_cast %233 : vector<16xf32> to vector<16x1xf32>
      %cst_90 = arith.constant 1.280000e+02 : f32
      %235 = vector.broadcast %cst_90 : f32 to vector<16x1xf32>
      %236 = arith.divf %234, %235 : vector<16x1xf32>
      %237 = vector.broadcast %229 : vector<16x1xf32> to vector<16x128xf32>
      %238 = arith.subf %223, %237 : vector<16x128xf32>
      %cst_91 = arith.constant 9.99999996E-13 : f32
      %239 = vector.broadcast %cst_91 : f32 to vector<16x1xf32>
      %240 = arith.addf %236, %239 : vector<16x1xf32>
      %241 = math.rsqrt %240 : vector<16x1xf32>
      %242 = vector.broadcast %241 : vector<16x1xf32> to vector<16x128xf32>
      %243 = arith.mulf %238, %242 : vector<16x128xf32>
      %244 = vector.broadcast %224 : vector<1x128xf32> to vector<16x128xf32>
      %245 = arith.mulf %243, %244 : vector<16x128xf32>
      %246 = vector.broadcast %225 : vector<1x128xf32> to vector<16x128xf32>
      %247 = arith.addf %245, %246 : vector<16x128xf32>
      %c0_92 = arith.constant 0 : index
      %c0_93 = arith.constant 0 : index
      %248 = vector.load %arg20[%c0_92, %c0_93] : memref<16x128xf32, #tpu.memory_space<vmem>>, vector<16x128xf32>
      tpu.vector_store %arg20[%c0_92, %c0_93], %247 {strides = array<i32>} : memref<16x128xf32, #tpu.memory_space<vmem>>, vector<16x128xf32>,
    } else {
    }
    %c0 = arith.constant 0 : index
    %c0_1 = arith.constant 0 : index
    %3 = vector.load %arg20[%c0, %c0_1] : memref<16x128xf32, #tpu.memory_space<vmem>>, vector<16x128xf32>
    %4 = arith.truncf %3 : vector<16x128xf32> to vector<16x128xbf16>
    %c0_2 = arith.constant 0 : index
    %c0_3 = arith.constant 0 : index
    %c0_4 = arith.constant 0 : index
    %5 = vector.load %arg7[%c0_2, %c0_3, %c0_4] : memref<1x128x384xbf16, #tpu.memory_space<vmem>>, vector<1x128x384xbf16>
    %6 = vector.shape_cast %5 : vector<1x128x384xbf16> to vector<128x384xbf16>
    %cst = arith.constant dense<0.000000e+00> : vector<16x384xf32>
    %7 = tpu.matmul %4, %6, %cst {dimension_numbers = #tpu.dot_dimension_numbers<[1], [0], [0], [1], [0, 0, 1, 1], [], []>} : vector<16x128xbf16>, vector<128x384xbf16>, vector<16x384xf32> -> vector<16x384xf32>
    %c0_5 = arith.constant 0 : index
    %c0_6 = arith.constant 0 : index
    %c0_7 = arith.constant 0 : index
    %8 = vector.load %arg8[%c0_5, %c0_6, %c0_7] : memref<1x1x384xf32, #tpu.memory_space<vmem>>, vector<1x1x384xf32>
    %9 = vector.shape_cast %8 : vector<1x1x384xf32> to vector<1x384xf32>
    %10 = vector.broadcast %9 : vector<1x384xf32> to vector<16x384xf32>
    %11 = arith.addf %7, %10 : vector<16x384xf32>
    %c0_8 = arith.constant 0 : index
    %c0_9 = arith.constant 0 : index
    %c0_10 = arith.constant 0 : index
    %12 = vector.load %arg3[%c0_8, %c0_9, %c0_10] : memref<2x1x8xf32, #tpu.memory_space<vmem>>, vector<2x1x8xf32>
    %c0_11 = arith.constant 0 : index
    %c0_12 = arith.constant 0 : index
    %c0_13 = arith.constant 0 : index
    %13 = vector.load %arg9[%c0_11, %c0_12, %c0_13] : memref<1x128x128xbf16, #tpu.memory_space<vmem>>, vector<1x128x128xbf16>
    %14 = vector.shape_cast %13 : vector<1x128x128xbf16> to vector<128x128xbf16>
    %cst_14 = arith.constant 0.000000e+00 : f32
    %15 = vector.broadcast %cst_14 : f32 to vector<16x128xf32>
    %16 = vector.extract_strided_slice %11 {offsets = [0, 0], sizes = [16, 32], strides = [1, 1]} : vector<16x384xf32> to vector<16x32xf32>
    %17 = arith.truncf %16 : vector<16x32xf32> to vector<16x32xbf16>
    %18 = vector.shape_cast %17 : vector<16x32xbf16> to vector<2x8x32xbf16>
    %19 = vector.extract_strided_slice %11 {offsets = [0, 128], sizes = [16, 32], strides = [1, 1]} : vector<16x384xf32> to vector<16x32xf32>
    %20 = arith.truncf %19 : vector<16x32xf32> to vector<16x32xbf16>
    %21 = vector.shape_cast %20 : vector<16x32xbf16> to vector<2x8x32xbf16>
    %22 = vector.extract_strided_slice %11 {offsets = [0, 256], sizes = [16, 32], strides = [1, 1]} : vector<16x384xf32> to vector<16x32xf32>
    %23 = arith.truncf %22 : vector<16x32xf32> to vector<16x32xbf16>
    %24 = vector.shape_cast %23 : vector<16x32xbf16> to vector<2x8x32xbf16>
    "tpu.trace_start"() <{level = 10 : i32, message = "bqd,bkd->bqk"}> : () -> ()
    %cst_15 = arith.constant dense<0.000000e+00> : vector<2x8x8xf32>
    %25 = tpu.matmul %18, %21, %cst_15 {dimension_numbers = #tpu.dot_dimension_numbers<[2], [2], [1], [1], [0, 0, 0, 1, 1, 1], [0], [0]>} : vector<2x8x32xbf16>, vector<2x8x32xbf16>, vector<2x8x8xf32> -> vector<2x8x8xf32>
    "tpu.trace_stop"() : () -> ()
    %26 = vector.broadcast %12 : vector<2x1x8xf32> to vector<2x8x8xf32>
    %27 = arith.addf %25, %26 : vector<2x8x8xf32>
    %cst_16 = arith.constant dense<0xFF800000> : vector<2x8xf32>
    %28 = vector.multi_reduction <maximumf>, %27, %cst_16 [2] : vector<2x8x8xf32> to vector<2x8xf32>
    %29 = vector.shape_cast %28 : vector<2x8xf32> to vector<2x8x1xf32>
    %30 = vector.broadcast %29 : vector<2x8x1xf32> to vector<2x8x8xf32>
    %31 = arith.subf %27, %30 : vector<2x8x8xf32>
    %32 = math.exp %31 : vector<2x8x8xf32>
    %cst_17 = arith.constant dense<0.000000e+00> : vector<2x8xf32>
    %33 = vector.multi_reduction <add>, %32, %cst_17 [2] : vector<2x8x8xf32> to vector<2x8xf32>
    %34 = vector.shape_cast %33 : vector<2x8xf32> to vector<2x8x1xf32>
    %35 = tpu.reciprocal %34 {approx = true} : vector<2x8x1xf32> -> vector<2x8x1xf32>
    %36 = vector.broadcast %35 : vector<2x8x1xf32> to vector<2x8x8xf32>
    %37 = arith.mulf %32, %36 : vector<2x8x8xf32>
    %38 = arith.truncf %37 : vector<2x8x8xf32> to vector<2x8x8xbf16>
    "tpu.trace_start"() <{level = 10 : i32, message = "bqk,bkd->bqd"}> : () -> ()
    %cst_18 = arith.constant dense<0.000000e+00> : vector<2x8x32xf32>
    %39 = tpu.matmul %38, %24, %cst_18 {dimension_numbers = #tpu.dot_dimension_numbers<[2], [1], [1], [2], [0, 0, 0, 1, 1, 2], [0], [0]>} : vector<2x8x8xbf16>, vector<2x8x32xbf16>, vector<2x8x32xf32> -> vector<2x8x32xf32>
    "tpu.trace_stop"() : () -> ()
    %40 = vector.shape_cast %39 : vector<2x8x32xf32> to vector<16x32xf32>
    %41 = arith.truncf %40 : vector<16x32xf32> to vector<16x32xbf16>
    %42 = vector.extract_strided_slice %14 {offsets = [0, 0], sizes = [32, 128], strides = [1, 1]} : vector<128x128xbf16> to vector<32x128xbf16>
    %cst_19 = arith.constant dense<0.000000e+00> : vector<16x128xf32>
    %43 = tpu.matmul %41, %42, %cst_19 {dimension_numbers = #tpu.dot_dimension_numbers<[1], [0], [0], [1], [0, 0, 1, 1], [], []>} : vector<16x32xbf16>, vector<32x128xbf16>, vector<16x128xf32> -> vector<16x128xf32>
    %44 = arith.addf %15, %43 : vector<16x128xf32>
    %45 = vector.extract_strided_slice %11 {offsets = [0, 32], sizes = [16, 32], strides = [1, 1]} : vector<16x384xf32> to vector<16x32xf32>
    %46 = arith.truncf %45 : vector<16x32xf32> to vector<16x32xbf16>
    %47 = vector.shape_cast %46 : vector<16x32xbf16> to vector<2x8x32xbf16>
    %48 = vector.extract_strided_slice %11 {offsets = [0, 160], sizes = [16, 32], strides = [1, 1]} : vector<16x384xf32> to vector<16x32xf32>
    %49 = arith.truncf %48 : vector<16x32xf32> to vector<16x32xbf16>
    %50 = vector.shape_cast %49 : vector<16x32xbf16> to vector<2x8x32xbf16>
    %51 = vector.extract_strided_slice %11 {offsets = [0, 288], sizes = [16, 32], strides = [1, 1]} : vector<16x384xf32> to vector<16x32xf32>
    %52 = arith.truncf %51 : vector<16x32xf32> to vector<16x32xbf16>
    %53 = vector.shape_cast %52 : vector<16x32xbf16> to vector<2x8x32xbf16>
    "tpu.trace_start"() <{level = 10 : i32, message = "bqd,bkd->bqk"}> : () -> ()
    %cst_20 = arith.constant dense<0.000000e+00> : vector<2x8x8xf32>
    %54 = tpu.matmul %47, %50, %cst_20 {dimension_numbers = #tpu.dot_dimension_numbers<[2], [2], [1], [1], [0, 0, 0, 1, 1, 1], [0], [0]>} : vector<2x8x32xbf16>, vector<2x8x32xbf16>, vector<2x8x8xf32> -> vector<2x8x8xf32>
    "tpu.trace_stop"() : () -> ()
    %55 = vector.broadcast %12 : vector<2x1x8xf32> to vector<2x8x8xf32>
    %56 = arith.addf %54, %55 : vector<2x8x8xf32>
    %cst_21 = arith.constant dense<0xFF800000> : vector<2x8xf32>
    %57 = vector.multi_reduction <maximumf>, %56, %cst_21 [2] : vector<2x8x8xf32> to vector<2x8xf32>
    %58 = vector.shape_cast %57 : vector<2x8xf32> to vector<2x8x1xf32>
    %59 = vector.broadcast %58 : vector<2x8x1xf32> to vector<2x8x8xf32>
    %60 = arith.subf %56, %59 : vector<2x8x8xf32>
    %61 = math.exp %60 : vector<2x8x8xf32>
    %cst_22 = arith.constant dense<0.000000e+00> : vector<2x8xf32>
    %62 = vector.multi_reduction <add>, %61, %cst_22 [2] : vector<2x8x8xf32> to vector<2x8xf32>
    %63 = vector.shape_cast %62 : vector<2x8xf32> to vector<2x8x1xf32>
    %64 = tpu.reciprocal %63 {approx = true} : vector<2x8x1xf32> -> vector<2x8x1xf32>
    %65 = vector.broadcast %64 : vector<2x8x1xf32> to vector<2x8x8xf32>
    %66 = arith.mulf %61, %65 : vector<2x8x8xf32>
    %67 = arith.truncf %66 : vector<2x8x8xf32> to vector<2x8x8xbf16>
    "tpu.trace_start"() <{level = 10 : i32, message = "bqk,bkd->bqd"}> : () -> ()
    %cst_23 = arith.constant dense<0.000000e+00> : vector<2x8x32xf32>
    %68 = tpu.matmul %67, %53, %cst_23 {dimension_numbers = #tpu.dot_dimension_numbers<[2], [1], [1], [2], [0, 0, 0, 1, 1, 2], [0], [0]>} : vector<2x8x8xbf16>, vector<2x8x32xbf16>, vector<2x8x32xf32> -> vector<2x8x32xf32>
    "tpu.trace_stop"() : () -> ()
    %69 = vector.shape_cast %68 : vector<2x8x32xf32> to vector<16x32xf32>
    %70 = arith.truncf %69 : vector<16x32xf32> to vector<16x32xbf16>
    %71 = vector.extract_strided_slice %14 {offsets = [32, 0], sizes = [32, 128], strides = [1, 1]} : vector<128x128xbf16> to vector<32x128xbf16>
    %cst_24 = arith.constant dense<0.000000e+00> : vector<16x128xf32>
    %72 = tpu.matmul %70, %71, %cst_24 {dimension_numbers = #tpu.dot_dimension_numbers<[1], [0], [0], [1], [0, 0, 1, 1], [], []>} : vector<16x32xbf16>, vector<32x128xbf16>, vector<16x128xf32> -> vector<16x128xf32>
    %73 = arith.addf %44, %72 : vector<16x128xf32>
    %74 = vector.extract_strided_slice %11 {offsets = [0, 64], sizes = [16, 32], strides = [1, 1]} : vector<16x384xf32> to vector<16x32xf32>
    %75 = arith.truncf %74 : vector<16x32xf32> to vector<16x32xbf16>
    %76 = vector.shape_cast %75 : vector<16x32xbf16> to vector<2x8x32xbf16>
    %77 = vector.extract_strided_slice %11 {offsets = [0, 192], sizes = [16, 32], strides = [1, 1]} : vector<16x384xf32> to vector<16x32xf32>
    %78 = arith.truncf %77 : vector<16x32xf32> to vector<16x32xbf16>
    %79 = vector.shape_cast %78 : vector<16x32xbf16> to vector<2x8x32xbf16>
    %80 = vector.extract_strided_slice %11 {offsets = [0, 320], sizes = [16, 32], strides = [1, 1]} : vector<16x384xf32> to vector<16x32xf32>
    %81 = arith.truncf %80 : vector<16x32xf32> to vector<16x32xbf16>
    %82 = vector.shape_cast %81 : vector<16x32xbf16> to vector<2x8x32xbf16>
    "tpu.trace_start"() <{level = 10 : i32, message = "bqd,bkd->bqk"}> : () -> ()
    %cst_25 = arith.constant dense<0.000000e+00> : vector<2x8x8xf32>
    %83 = tpu.matmul %76, %79, %cst_25 {dimension_numbers = #tpu.dot_dimension_numbers<[2], [2], [1], [1], [0, 0, 0, 1, 1, 1], [0], [0]>} : vector<2x8x32xbf16>, vector<2x8x32xbf16>, vector<2x8x8xf32> -> vector<2x8x8xf32>
    "tpu.trace_stop"() : () -> ()
    %84 = vector.broadcast %12 : vector<2x1x8xf32> to vector<2x8x8xf32>
    %85 = arith.addf %83, %84 : vector<2x8x8xf32>
    %cst_26 = arith.constant dense<0xFF800000> : vector<2x8xf32>
    %86 = vector.multi_reduction <maximumf>, %85, %cst_26 [2] : vector<2x8x8xf32> to vector<2x8xf32>
    %87 = vector.shape_cast %86 : vector<2x8xf32> to vector<2x8x1xf32>
    %88 = vector.broadcast %87 : vector<2x8x1xf32> to vector<2x8x8xf32>
    %89 = arith.subf %85, %88 : vector<2x8x8xf32>
    %90 = math.exp %89 : vector<2x8x8xf32>
    %cst_27 = arith.constant dense<0.000000e+00> : vector<2x8xf32>
    %91 = vector.multi_reduction <add>, %90, %cst_27 [2] : vector<2x8x8xf32> to vector<2x8xf32>
    %92 = vector.shape_cast %91 : vector<2x8xf32> to vector<2x8x1xf32>
    %93 = tpu.reciprocal %92 {approx = true} : vector<2x8x1xf32> -> vector<2x8x1xf32>
    %94 = vector.broadcast %93 : vector<2x8x1xf32> to vector<2x8x8xf32>
    %95 = arith.mulf %90, %94 : vector<2x8x8xf32>
    %96 = arith.truncf %95 : vector<2x8x8xf32> to vector<2x8x8xbf16>
    "tpu.trace_start"() <{level = 10 : i32, message = "bqk,bkd->bqd"}> : () -> ()
    %cst_28 = arith.constant dense<0.000000e+00> : vector<2x8x32xf32>
    %97 = tpu.matmul %96, %82, %cst_28 {dimension_numbers = #tpu.dot_dimension_numbers<[2], [1], [1], [2], [0, 0, 0, 1, 1, 2], [0], [0]>} : vector<2x8x8xbf16>, vector<2x8x32xbf16>, vector<2x8x32xf32> -> vector<2x8x32xf32>
    "tpu.trace_stop"() : () -> ()
    %98 = vector.shape_cast %97 : vector<2x8x32xf32> to vector<16x32xf32>
    %99 = arith.truncf %98 : vector<16x32xf32> to vector<16x32xbf16>
    %100 = vector.extract_strided_slice %14 {offsets = [64, 0], sizes = [32, 128], strides = [1, 1]} : vector<128x128xbf16> to vector<32x128xbf16>
    %cst_29 = arith.constant dense<0.000000e+00> : vector<16x128xf32>
    %101 = tpu.matmul %99, %100, %cst_29 {dimension_numbers = #tpu.dot_dimension_numbers<[1], [0], [0], [1], [0, 0, 1, 1], [], []>} : vector<16x32xbf16>, vector<32x128xbf16>, vector<16x128xf32> -> vector<16x128xf32>
    %102 = arith.addf %73, %101 : vector<16x128xf32>
    %103 = vector.extract_strided_slice %11 {offsets = [0, 96], sizes = [16, 32], strides = [1, 1]} : vector<16x384xf32> to vector<16x32xf32>
    %104 = arith.truncf %103 : vector<16x32xf32> to vector<16x32xbf16>
    %105 = vector.shape_cast %104 : vector<16x32xbf16> to vector<2x8x32xbf16>
    %106 = vector.extract_strided_slice %11 {offsets = [0, 224], sizes = [16, 32], strides = [1, 1]} : vector<16x384xf32> to vector<16x32xf32>
    %107 = arith.truncf %106 : vector<16x32xf32> to vector<16x32xbf16>
    %108 = vector.shape_cast %107 : vector<16x32xbf16> to vector<2x8x32xbf16>
    %109 = vector.extract_strided_slice %11 {offsets = [0, 352], sizes = [16, 32], strides = [1, 1]} : vector<16x384xf32> to vector<16x32xf32>
    %110 = arith.truncf %109 : vector<16x32xf32> to vector<16x32xbf16>
    %111 = vector.shape_cast %110 : vector<16x32xbf16> to vector<2x8x32xbf16>
    "tpu.trace_start"() <{level = 10 : i32, message = "bqd,bkd->bqk"}> : () -> ()
    %cst_30 = arith.constant dense<0.000000e+00> : vector<2x8x8xf32>
    %112 = tpu.matmul %105, %108, %cst_30 {dimension_numbers = #tpu.dot_dimension_numbers<[2], [2], [1], [1], [0, 0, 0, 1, 1, 1], [0], [0]>} : vector<2x8x32xbf16>, vector<2x8x32xbf16>, vector<2x8x8xf32> -> vector<2x8x8xf32>
    "tpu.trace_stop"() : () -> ()
    %113 = vector.broadcast %12 : vector<2x1x8xf32> to vector<2x8x8xf32>
    %114 = arith.addf %112, %113 : vector<2x8x8xf32>
    %cst_31 = arith.constant dense<0xFF800000> : vector<2x8xf32>
    %115 = vector.multi_reduction <maximumf>, %114, %cst_31 [2] : vector<2x8x8xf32> to vector<2x8xf32>
    %116 = vector.shape_cast %115 : vector<2x8xf32> to vector<2x8x1xf32>
    %117 = vector.broadcast %116 : vector<2x8x1xf32> to vector<2x8x8xf32>
    %118 = arith.subf %114, %117 : vector<2x8x8xf32>
    %119 = math.exp %118 : vector<2x8x8xf32>
    %cst_32 = arith.constant dense<0.000000e+00> : vector<2x8xf32>
    %120 = vector.multi_reduction <add>, %119, %cst_32 [2] : vector<2x8x8xf32> to vector<2x8xf32>
    %121 = vector.shape_cast %120 : vector<2x8xf32> to vector<2x8x1xf32>
    %122 = tpu.reciprocal %121 {approx = true} : vector<2x8x1xf32> -> vector<2x8x1xf32>
    %123 = vector.broadcast %122 : vector<2x8x1xf32> to vector<2x8x8xf32>
    %124 = arith.mulf %119, %123 : vector<2x8x8xf32>
    %125 = arith.truncf %124 : vector<2x8x8xf32> to vector<2x8x8xbf16>
    "tpu.trace_start"() <{level = 10 : i32, message = "bqk,bkd->bqd"}> : () -> ()
    %cst_33 = arith.constant dense<0.000000e+00> : vector<2x8x32xf32>
    %126 = tpu.matmul %125, %111, %cst_33 {dimension_numbers = #tpu.dot_dimension_numbers<[2], [1], [1], [2], [0, 0, 0, 1, 1, 2], [0], [0]>} : vector<2x8x8xbf16>, vector<2x8x32xbf16>, vector<2x8x32xf32> -> vector<2x8x32xf32>
    "tpu.trace_stop"() : () -> ()
    %127 = vector.shape_cast %126 : vector<2x8x32xf32> to vector<16x32xf32>
    %128 = arith.truncf %127 : vector<16x32xf32> to vector<16x32xbf16>
    %129 = vector.extract_strided_slice %14 {offsets = [96, 0], sizes = [32, 128], strides = [1, 1]} : vector<128x128xbf16> to vector<32x128xbf16>
    %cst_34 = arith.constant dense<0.000000e+00> : vector<16x128xf32>
    %130 = tpu.matmul %128, %129, %cst_34 {dimension_numbers = #tpu.dot_dimension_numbers<[1], [0], [0], [1], [0, 0, 1, 1], [], []>} : vector<16x32xbf16>, vector<32x128xbf16>, vector<16x128xf32> -> vector<16x128xf32>
    %131 = arith.addf %102, %130 : vector<16x128xf32>
    %c0_35 = arith.constant 0 : index
    %c0_36 = arith.constant 0 : index
    %c0_37 = arith.constant 0 : index
    %132 = vector.load %arg10[%c0_35, %c0_36, %c0_37] : memref<1x1x128xf32, #tpu.memory_space<vmem>>, vector<1x1x128xf32>
    %133 = vector.shape_cast %132 : vector<1x1x128xf32> to vector<1x128xf32>
    %134 = vector.broadcast %133 : vector<1x128xf32> to vector<16x128xf32>
    %135 = arith.addf %131, %134 : vector<16x128xf32>
    %136 = arith.addf %3, %135 : vector<16x128xf32>
    %c0_38 = arith.constant 0 : index
    %c0_39 = arith.constant 0 : index
    %c0_40 = arith.constant 0 : index
    %137 = vector.load %arg11[%c0_38, %c0_39, %c0_40] : memref<1x1x128xf32, #tpu.memory_space<vmem>>, vector<1x1x128xf32>
    %138 = vector.shape_cast %137 : vector<1x1x128xf32> to vector<1x128xf32>
    %c0_41 = arith.constant 0 : index
    %c0_42 = arith.constant 0 : index
    %c0_43 = arith.constant 0 : index
    %139 = vector.load %arg12[%c0_41, %c0_42, %c0_43] : memref<1x1x128xf32, #tpu.memory_space<vmem>>, vector<1x1x128xf32>
    %140 = vector.shape_cast %139 : vector<1x1x128xf32> to vector<1x128xf32>
    %cst_44 = arith.constant dense<0.000000e+00> : vector<16xf32>
    %141 = vector.multi_reduction <add>, %136, %cst_44 [1] : vector<16x128xf32> to vector<16xf32>
    %142 = vector.shape_cast %141 : vector<16xf32> to vector<16x1xf32>
    %cst_45 = arith.constant 1.280000e+02 : f32
    %143 = vector.broadcast %cst_45 : f32 to vector<16x1xf32>
    %144 = arith.divf %142, %143 : vector<16x1xf32>
    %145 = vector.broadcast %144 : vector<16x1xf32> to vector<16x128xf32>
    %146 = arith.subf %136, %145 : vector<16x128xf32>
    %147 = arith.mulf %146, %146 : vector<16x128xf32>
    %cst_46 = arith.constant dense<0.000000e+00> : vector<16xf32>
    %148 = vector.multi_reduction <add>, %147, %cst_46 [1] : vector<16x128xf32> to vector<16xf32>
    %149 = vector.shape_cast %148 : vector<16xf32> to vector<16x1xf32>
    %cst_47 = arith.constant 1.280000e+02 : f32
    %150 = vector.broadcast %cst_47 : f32 to vector<16x1xf32>
    %151 = arith.divf %149, %150 : vector<16x1xf32>
    %152 = vector.broadcast %144 : vector<16x1xf32> to vector<16x128xf32>
    %153 = arith.subf %136, %152 : vector<16x128xf32>
    %cst_48 = arith.constant 9.99999996E-13 : f32
    %154 = vector.broadcast %cst_48 : f32 to vector<16x1xf32>
    %155 = arith.addf %151, %154 : vector<16x1xf32>
    %156 = math.rsqrt %155 : vector<16x1xf32>
    %157 = vector.broadcast %156 : vector<16x1xf32> to vector<16x128xf32>
    %158 = arith.mulf %153, %157 : vector<16x128xf32>
    %159 = vector.broadcast %138 : vector<1x128xf32> to vector<16x128xf32>
    %160 = arith.mulf %158, %159 : vector<16x128xf32>
    %161 = vector.broadcast %140 : vector<1x128xf32> to vector<16x128xf32>
    %162 = arith.addf %160, %161 : vector<16x128xf32>
    %163 = arith.truncf %162 : vector<16x128xf32> to vector<16x128xbf16>
    %c0_49 = arith.constant 0 : index
    %c0_50 = arith.constant 0 : index
    %c0_51 = arith.constant 0 : index
    %164 = vector.load %arg13[%c0_49, %c0_50, %c0_51] : memref<1x128x512xbf16, #tpu.memory_space<vmem>>, vector<1x128x512xbf16>
    %165 = vector.shape_cast %164 : vector<1x128x512xbf16> to vector<128x512xbf16>
    %cst_52 = arith.constant dense<0.000000e+00> : vector<16x512xf32>
    %166 = tpu.matmul %163, %165, %cst_52 {dimension_numbers = #tpu.dot_dimension_numbers<[1], [0], [0], [1], [0, 0, 1, 1], [], []>} : vector<16x128xbf16>, vector<128x512xbf16>, vector<16x512xf32> -> vector<16x512xf32>
    %c0_53 = arith.constant 0 : index
    %c0_54 = arith.constant 0 : index
    %c0_55 = arith.constant 0 : index
    %167 = vector.load %arg14[%c0_53, %c0_54, %c0_55] : memref<1x1x512xf32, #tpu.memory_space<vmem>>, vector<1x1x512xf32>
    %168 = vector.shape_cast %167 : vector<1x1x512xf32> to vector<1x512xf32>
    %169 = vector.broadcast %168 : vector<1x512xf32> to vector<16x512xf32>
    %170 = arith.addf %166, %169 : vector<16x512xf32>
    %cst_56 = arith.constant 5.000000e-01 : f32
    %171 = vector.broadcast %cst_56 : f32 to vector<16x512xf32>
    %172 = arith.mulf %171, %170 : vector<16x512xf32>
    %cst_57 = arith.constant 4.471500e-02 : f32
    %173 = vector.broadcast %cst_57 : f32 to vector<16x512xf32>
    %174 = arith.mulf %173, %170 : vector<16x512xf32>
    %175 = arith.mulf %174, %170 : vector<16x512xf32>
    %176 = arith.mulf %175, %170 : vector<16x512xf32>
    %177 = arith.addf %170, %176 : vector<16x512xf32>
    %cst_58 = arith.constant 0.797884583 : f32
    %178 = vector.broadcast %cst_58 : f32 to vector<16x512xf32>
    %179 = arith.mulf %178, %177 : vector<16x512xf32>
    %180 = math.tanh %179 : vector<16x512xf32>
    %cst_59 = arith.constant 1.000000e+00 : f32
    %181 = vector.broadcast %cst_59 : f32 to vector<16x512xf32>
    %182 = arith.addf %181, %180 : vector<16x512xf32>
    %183 = arith.mulf %172, %182 : vector<16x512xf32>
    %184 = arith.truncf %183 : vector<16x512xf32> to vector<16x512xbf16>
    %c0_60 = arith.constant 0 : index
    %c0_61 = arith.constant 0 : index
    %c0_62 = arith.constant 0 : index
    %185 = vector.load %arg15[%c0_60, %c0_61, %c0_62] : memref<1x512x128xbf16, #tpu.memory_space<vmem>>, vector<1x512x128xbf16>
    %186 = vector.shape_cast %185 : vector<1x512x128xbf16> to vector<512x128xbf16>
    %cst_63 = arith.constant dense<0.000000e+00> : vector<16x128xf32>
    %187 = tpu.matmul %184, %186, %cst_63 {dimension_numbers = #tpu.dot_dimension_numbers<[1], [0], [0], [1], [0, 0, 1, 1], [], []>} : vector<16x512xbf16>, vector<512x128xbf16>, vector<16x128xf32> -> vector<16x128xf32>
    %c0_64 = arith.constant 0 : index
    %c0_65 = arith.constant 0 : index
    %c0_66 = arith.constant 0 : index
    %188 = vector.load %arg16[%c0_64, %c0_65, %c0_66] : memref<1x1x128xf32, #tpu.memory_space<vmem>>, vector<1x1x128xf32>
    %189 = vector.shape_cast %188 : vector<1x1x128xf32> to vector<1x128xf32>
    %190 = vector.broadcast %189 : vector<1x128xf32> to vector<16x128xf32>
    %191 = arith.addf %187, %190 : vector<16x128xf32>
    %192 = arith.addf %162, %191 : vector<16x128xf32>
    %c0_67 = arith.constant 0 : index
    %c0_68 = arith.constant 0 : index
    %c0_69 = arith.constant 0 : index
    %193 = vector.load %arg17[%c0_67, %c0_68, %c0_69] : memref<1x1x128xf32, #tpu.memory_space<vmem>>, vector<1x1x128xf32>
    %194 = vector.shape_cast %193 : vector<1x1x128xf32> to vector<1x128xf32>
    %c0_70 = arith.constant 0 : index
    %c0_71 = arith.constant 0 : index
    %c0_72 = arith.constant 0 : index
    %195 = vector.load %arg18[%c0_70, %c0_71, %c0_72] : memref<1x1x128xf32, #tpu.memory_space<vmem>>, vector<1x1x128xf32>
    %196 = vector.shape_cast %195 : vector<1x1x128xf32> to vector<1x128xf32>
    %cst_73 = arith.constant dense<0.000000e+00> : vector<16xf32>
    %197 = vector.multi_reduction <add>, %192, %cst_73 [1] : vector<16x128xf32> to vector<16xf32>
    %198 = vector.shape_cast %197 : vector<16xf32> to vector<16x1xf32>
    %cst_74 = arith.constant 1.280000e+02 : f32
    %199 = vector.broadcast %cst_74 : f32 to vector<16x1xf32>
    %200 = arith.divf %198, %199 : vector<16x1xf32>
    %201 = vector.broadcast %200 : vector<16x1xf32> to vector<16x128xf32>
    %202 = arith.subf %192, %201 : vector<16x128xf32>
    %203 = arith.mulf %202, %202 : vector<16x128xf32>
    %cst_75 = arith.constant dense<0.000000e+00> : vector<16xf32>
    %204 = vector.multi_reduction <add>, %203, %cst_75 [1] : vector<16x128xf32> to vector<16xf32>
    %205 = vector.shape_cast %204 : vector<16xf32> to vector<16x1xf32>
    %cst_76 = arith.constant 1.280000e+02 : f32
    %206 = vector.broadcast %cst_76 : f32 to vector<16x1xf32>
    %207 = arith.divf %205, %206 : vector<16x1xf32>
    %208 = vector.broadcast %200 : vector<16x1xf32> to vector<16x128xf32>
    %209 = arith.subf %192, %208 : vector<16x128xf32>
    %cst_77 = arith.constant 9.99999996E-13 : f32
    %210 = vector.broadcast %cst_77 : f32 to vector<16x1xf32>
    %211 = arith.addf %207, %210 : vector<16x1xf32>
    %212 = math.rsqrt %211 : vector<16x1xf32>
    %213 = vector.broadcast %212 : vector<16x1xf32> to vector<16x128xf32>
    %214 = arith.mulf %209, %213 : vector<16x128xf32>
    %215 = vector.broadcast %194 : vector<1x128xf32> to vector<16x128xf32>
    %216 = arith.mulf %214, %215 : vector<16x128xf32>
    %217 = vector.broadcast %196 : vector<1x128xf32> to vector<16x128xf32>
    %218 = arith.addf %216, %217 : vector<16x128xf32>
    %c0_78 = arith.constant 0 : index
    %c0_79 = arith.constant 0 : index
    %219 = vector.load %arg20[%c0_78, %c0_79] : memref<16x128xf32, #tpu.memory_space<vmem>>, vector<16x128xf32>
    tpu.vector_store %arg20[%c0_78, %c0_79], %218 {strides = array<i32>} : memref<16x128xf32, #tpu.memory_space<vmem>>, vector<16x128xf32>,
    %c1_i32 = arith.constant 1 : i32
    %220 = arith.cmpi eq, %arg1, %c1_i32 : i32
    %221 = arith.extui %220 : i1 to i32
    %c0_i32_80 = arith.constant 0 : i32
    %222 = arith.cmpi ne, %221, %c0_i32_80 : i32
    scf.if %222 {
      %223 = vector.shape_cast %218 : vector<16x128xf32> to vector<2x8x128xf32>
      %224 = vector.extract_strided_slice %223 {offsets = [0, 0, 0], sizes = [2, 1, 128], strides = [1, 1, 1]} : vector<2x8x128xf32> to vector<2x1x128xf32>
      %225 = vector.shape_cast %224 : vector<2x1x128xf32> to vector<2x128xf32>
      %c0_81 = arith.constant 0 : index
      %c0_82 = arith.constant 0 : index
      %226 = vector.load %arg4[%c0_81, %c0_82] : memref<2x128xf32, #tpu.memory_space<vmem>>, vector<2x128xf32>
      %227 = arith.addf %225, %226 : vector<2x128xf32>
      %c0_83 = arith.constant 0 : index
      %c0_84 = arith.constant 0 : index
      %228 = vector.load %arg19[%c0_83, %c0_84] : memref<2x128xf32, #tpu.memory_space<vmem>>, vector<2x128xf32>
      tpu.vector_store %arg19[%c0_83, %c0_84], %227 {strides = array<i32>} : memref<2x128xf32, #tpu.memory_space<vmem>>, vector<2x128xf32>,
    } else {
    }
    return
  }
  func.func @transform_0(%arg0: i32, %arg1: i32) -> (i32, i32) {
    %c0_i32 = arith.constant 0 : i32
    %c0_i32_0 = arith.constant 0 : i32
    return %arg0, %c0_i32 : i32, i32
  }
  func.func @transform_1(%arg0: i32, %arg1: i32) -> (i32, i32, i32) {
    %c0_i32 = arith.constant 0 : i32
    %c0_i32_0 = arith.constant 0 : i32
    %c0_i32_1 = arith.constant 0 : i32
    return %arg0, %c0_i32, %c0_i32_0 : i32, i32, i32
  }
  func.func @transform_2(%arg0: i32, %arg1: i32) -> (i32, i32) {
    %c0_i32 = arith.constant 0 : i32
    %c0_i32_0 = arith.constant 0 : i32
    return %arg0, %c0_i32 : i32, i32
  }
  func.func @transform_3(%arg0: i32, %arg1: i32) -> (i32, i32) {
    %c0_i32 = arith.constant 0 : i32
    %c0_i32_0 = arith.constant 0 : i32
    %c0_i32_1 = arith.constant 0 : i32
    return %c0_i32, %c0_i32_0 : i32, i32
  }
  func.func @transform_4(%arg0: i32, %arg1: i32) -> (i32, i32) {
    %c0_i32 = arith.constant 0 : i32
    %c0_i32_0 = arith.constant 0 : i32
    %c0_i32_1 = arith.constant 0 : i32
    return %c0_i32, %c0_i32_0 : i32, i32
  }
  func.func @transform_5(%arg0: i32, %arg1: i32) -> (i32, i32, i32) {
    %c0_i32 = arith.constant 0 : i32
    %c0_i32_0 = arith.constant 0 : i32
    %c0_i32_1 = arith.constant 0 : i32
    return %arg1, %c0_i32, %c0_i32_0 : i32, i32, i32
  }
  func.func @transform_6(%arg0: i32, %arg1: i32) -> (i32, i32, i32) {
    %c0_i32 = arith.constant 0 : i32
    %c0_i32_0 = arith.constant 0 : i32
    %c0_i32_1 = arith.constant 0 : i32
    return %arg1, %c0_i32, %c0_i32_0 : i32, i32, i32
  }
  func.func @transform_7(%arg0: i32, %arg1: i32) -> (i32, i32, i32) {
    %c0_i32 = arith.constant 0 : i32
    %c0_i32_0 = arith.constant 0 : i32
    %c0_i32_1 = arith.constant 0 : i32
    return %arg1, %c0_i32, %c0_i32_0 : i32, i32, i32
  }
  func.func @transform_8(%arg0: i32, %arg1: i32) -> (i32, i32, i32) {
    %c0_i32 = arith.constant 0 : i32
    %c0_i32_0 = arith.constant 0 : i32
    %c0_i32_1 = arith.constant 0 : i32
    return %arg1, %c0_i32, %c0_i32_0 : i32, i32, i32
  }
  func.func @transform_9(%arg0: i32, %arg1: i32) -> (i32, i32, i32) {
    %c0_i32 = arith.constant 0 : i32
    %c0_i32_0 = arith.constant 0 : i32
    %c0_i32_1 = arith.constant 0 : i32
    return %arg1, %c0_i32, %c0_i32_0 : i32, i32, i32
  }
  func.func @transform_10(%arg0: i32, %arg1: i32) -> (i32, i32, i32) {
    %c0_i32 = arith.constant 0 : i32
    %c0_i32_0 = arith.constant 0 : i32
    %c0_i32_1 = arith.constant 0 : i32
    return %arg1, %c0_i32, %c0_i32_0 : i32, i32, i32
  }
  func.func @transform_11(%arg0: i32, %arg1: i32) -> (i32, i32, i32) {
    %c0_i32 = arith.constant 0 : i32
    %c0_i32_0 = arith.constant 0 : i32
    %c0_i32_1 = arith.constant 0 : i32
    return %arg1, %c0_i32, %c0_i32_0 : i32, i32, i32
  }
  func.func @transform_12(%arg0: i32, %arg1: i32) -> (i32, i32, i32) {
    %c0_i32 = arith.constant 0 : i32
    %c0_i32_0 = arith.constant 0 : i32
    %c0_i32_1 = arith.constant 0 : i32
    return %arg1, %c0_i32, %c0_i32_0 : i32, i32, i32
  }
  func.func @transform_13(%arg0: i32, %arg1: i32) -> (i32, i32, i32) {
    %c0_i32 = arith.constant 0 : i32
    %c0_i32_0 = arith.constant 0 : i32
    %c0_i32_1 = arith.constant 0 : i32
    return %arg1, %c0_i32, %c0_i32_0 : i32, i32, i32
  }
  func.func @transform_14(%arg0: i32, %arg1: i32) -> (i32, i32, i32) {
    %c0_i32 = arith.constant 0 : i32
    %c0_i32_0 = arith.constant 0 : i32
    %c0_i32_1 = arith.constant 0 : i32
    return %arg1, %c0_i32, %c0_i32_0 : i32, i32, i32
  }
  func.func @transform_15(%arg0: i32, %arg1: i32) -> (i32, i32, i32) {
    %c0_i32 = arith.constant 0 : i32
    %c0_i32_0 = arith.constant 0 : i32
    %c0_i32_1 = arith.constant 0 : i32
    return %arg1, %c0_i32, %c0_i32_0 : i32, i32, i32
  }
  func.func @transform_16(%arg0: i32, %arg1: i32) -> (i32, i32, i32) {
    %c0_i32 = arith.constant 0 : i32
    %c0_i32_0 = arith.constant 0 : i32
    %c0_i32_1 = arith.constant 0 : i32
    return %arg1, %c0_i32, %c0_i32_0 : i32, i32, i32
  }
  func.func @transform_17(%arg0: i32, %arg1: i32) -> (i32, i32) {
    %c0_i32 = arith.constant 0 : i32
    %c0_i32_0 = arith.constant 0 : i32
    return %arg0, %c0_i32 : i32, i32
  }
}

</mosaic_0001>

<llo_original>
// kernel: behrt_demo_forward.1
$region0: #{behrt_demo_forward.1}
  #allocation0 [shape = 'u32[]', space=smem, size = 0x4, offset = 0x4, fixed_abs, tag = 'smem constant byte address 0x4 - core index']
  #allocation1 [shape = 'u32[144,128]{1,0:T(1,128)}', space=vmem, size = 0x12000, scoped, tag = 'internal scratch']
  #allocation2 [shape = 'f32[16,128]{1,0:T(8,128)}', space=vmem, size = 0x2000, scoped, tag = 'scratch operand']
  %s0 = inlined_call_operand.vmem [shape: f32[16,128], index: 0, kind: input, shape index: {}]
  %s1 = inlined_call_operand.vmem [shape: f32[2,1,8], index: 1, kind: input, shape index: {}]
  %s2 = inlined_call_operand.vmem [shape: f32[2,128], index: 2, kind: input, shape index: {}]
  %s3 = inlined_call_operand.vmem [shape: f32[1,128], index: 3, kind: input, shape index: {}]
  %s4 = inlined_call_operand.vmem [shape: f32[1,128], index: 4, kind: input, shape index: {}]
  %s5 = inlined_call_operand.vmem [shape: bf16[2,128,384], index: 5, kind: input, shape index: {}]
  %s6 = inlined_call_operand.vmem [shape: f32[2,1,384], index: 6, kind: input, shape index: {}]
  %s7 = inlined_call_operand.vmem [shape: bf16[2,128,128], index: 7, kind: input, shape index: {}]
  %s8 = inlined_call_operand.vmem [shape: f32[2,1,128], index: 8, kind: input, shape index: {}]
  %s9 = inlined_call_operand.vmem [shape: f32[2,1,128], index: 9, kind: input, shape index: {}]
  %s10 = inlined_call_operand.vmem [shape: f32[2,1,128], index: 10, kind: input, shape index: {}]
  %s11 = inlined_call_operand.vmem [shape: bf16[2,128,512], index: 11, kind: input, shape index: {}]
  %s12 = inlined_call_operand.vmem [shape: f32[2,1,512], index: 12, kind: input, shape index: {}]
  %s13 = inlined_call_operand.vmem [shape: bf16[2,512,128], index: 13, kind: input, shape index: {}]
  %s14 = inlined_call_operand.vmem [shape: f32[2,1,128], index: 14, kind: input, shape index: {}]
  %s15 = inlined_call_operand.vmem [shape: f32[2,1,128], index: 15, kind: input, shape index: {}]
  %s16 = inlined_call_operand.vmem [shape: f32[2,1,128], index: 16, kind: input, shape index: {}]
  %s17 = inlined_call_operand.hbm [shape: f32[2,128], index: 17, kind: output, shape index: {}]
  %s18 = sld [smem:[#allocation0]]
  $region109: #{behrt_demo_forward.1} parent=0
    _
  %s20 = ssub.s32 1, %s18
  %s21 = scalar_select 0, %s20, %s18
  $region1: #{behrt_demo_forward.1} parent=0
    #allocation3 [shape = 'u8[1024]{0}', space=vmem, size = 0x400, scoped, tag = 'output window, operand 0, single buffered']
    #allocation4 [shape = 's32[2]{0}', space=sflag, size = 0x8, scoped, tag = 'scoped memory for behrt_demo_forward.1']
    %22 = vsyncpa [#allocation4], 0
    loop: start=0, step=1, limit=4
    $region2: #{behrt_demo_forward.1} parent=1 // loop_pre_header
      _
    $region3: #{behrt_demo_forward.1} parent=1 // loop_header
      %s24 = sphi 0, %s28
      %p25 = scmp.ge.s32.totalorder %s24, 4
      %s31 = sphi 0, %s43
      %s32 = sphi 0, %s39
      %s33 = sphi 0, %s31
      %s34 = sphi 0, %s32
      %s35 = sphi 0, %s33
      %s36 = sphi 0, %s34
      %s46 = sphi 0, %s48
      %s49 = sphi 0, %s46
      %s50 = sphi 0, %s49
      %s66 = sphi 0, %s50
      %s72 = sphi 0, %s74
      %s75 = sphi 0, %s72
      %s76 = sphi 0, %s75
      %s92 = sphi 0, %s76
      %s98 = sphi 0, %s100
      %s101 = sphi 0, %s98
      %s102 = sphi 0, %s101
      %s118 = sphi 0, %s102
      %s122 = sphi 0, %s122
      %s124 = sphi 0, %s122
      %s125 = sphi 0, %s124
      %s139 = sphi 0, %s125
      %s143 = sphi 0, %s143
      %s145 = sphi 0, %s143
      %s146 = sphi 0, %s145
      %s160 = sphi 0, %s146
      %s166 = sphi 0, %s168
      %s169 = sphi 0, %s166
      %s170 = sphi 0, %s169
      %s186 = sphi 0, %s170
      %s192 = sphi 0, %s194
      %s195 = sphi 0, %s192
      %s196 = sphi 0, %s195
      %s212 = sphi 0, %s196
      %s218 = sphi 0, %s220
      %s221 = sphi 0, %s218
      %s222 = sphi 0, %s221
      %s238 = sphi 0, %s222
      %s244 = sphi 0, %s246
      %s247 = sphi 0, %s244
      %s248 = sphi 0, %s247
      %s264 = sphi 0, %s248
      %s270 = sphi 0, %s272
      %s273 = sphi 0, %s270
      %s274 = sphi 0, %s273
      %s290 = sphi 0, %s274
      %s296 = sphi 0, %s298
      %s299 = sphi 0, %s296
      %s300 = sphi 0, %s299
      %s316 = sphi 0, %s300
      %s322 = sphi 0, %s324
      %s325 = sphi 0, %s322
      %s326 = sphi 0, %s325
      %s342 = sphi 0, %s326
      %s348 = sphi 0, %s350
      %s351 = sphi 0, %s348
      %s352 = sphi 0, %s351
      %s368 = sphi 0, %s352
      %s374 = sphi 0, %s376
      %s377 = sphi 0, %s374
      %s378 = sphi 0, %s377
      %s394 = sphi 0, %s378
      %s400 = sphi 0, %s402
      %s403 = sphi 0, %s400
      %s404 = sphi 0, %s403
      %s420 = sphi 0, %s404
      %s426 = sphi 0, %s428
      %s429 = sphi 0, %s426
      %s430 = sphi 0, %s429
      %s446 = sphi 0, %s430
      %s452 = sphi 0, %s454
      %s455 = sphi 0, %s452
      %s456 = sphi 0, %s455
      %s472 = sphi 0, %s456
      %s478 = sphi 0, %s480
      %s481 = sphi 0, %s478
      %s482 = sphi 0, %s481
      %s498 = sphi 0, %s482
    $region4: #{behrt_demo_forward.1} parent=1 // loop_header_branch
      %27 = sbr.rel (%p25) target = $region8
    $region5: #{behrt_demo_forward.1} parent=1 // loop_body
      %s29 = ssub.s32 %s24, 1
      %s30 = ssub.s32 %s24, 2
      %s37 = sadd.s32 1, %s32
      %p38 = scmp.ge.s32.totalorder %s37, 2
      %s39 = scalar_select %p38, 0, %s37
      %s40 = sadd.s32 1, %s31
      %s41 = scalar_select %p38, %s40, %s31
      %p42 = scmp.ge.s32.totalorder %s41, 1
      %s43 = scalar_select %p42, 0, %s41
      %s44 = ssub.s32 %s31, %s43
      %p45 = scmp.eq.s32.totalorder %s44, 0
      %s47 = sadd.s32 %s46, 1
      %s48 = scalar_select %p45, %s46, %s47
      %p51 = pneg %p45
      %p52 = scmp.eq.s32.totalorder %s24, 1
      %p53 = por %p51, %p52
      %p54 = scmp.ne.s32.totalorder %s46, %s49
      %p55 = scmp.eq.s32.totalorder %s24, 0
      %p56 = por %p54, %p55
      %p57 = scmp.ne.s32.totalorder %s46, %s49
      %p58 = scmp.eq.s32.totalorder %s29, 1
      %p59 = por %p57, %p58
      %p60 = scmp.ne.s32.totalorder %s49, %s50
      %p61 = scmp.eq.s32.totalorder %s29, 0
      %p62 = por %p60, %p61
      %p63 = scmp.ne.s32.totalorder %s49, %s50
      %p64 = scmp.eq.s32.totalorder %s30, 1
      %p65 = por %p63, %p64
      %p67 = scmp.ne.s32.totalorder %s50, %s66
      %p68 = scmp.eq.s32.totalorder %s30, 0
      %p69 = por %p67, %p68
      %s70 = ssub.s32 %s31, %s43
      %p71 = scmp.eq.s32.totalorder %s70, 0
      %s73 = sadd.s32 %s72, 1
      %s74 = scalar_select %p71, %s72, %s73
      %p77 = pneg %p71
      %p78 = scmp.eq.s32.totalorder %s24, 1
      %p79 = por %p77, %p78
      %p80 = scmp.ne.s32.totalorder %s72, %s75
      %p81 = scmp.eq.s32.totalorder %s24, 0
      %p82 = por %p80, %p81
      %p83 = scmp.ne.s32.totalorder %s72, %s75
      %p84 = scmp.eq.s32.totalorder %s29, 1
      %p85 = por %p83, %p84
      %p86 = scmp.ne.s32.totalorder %s75, %s76
      %p87 = scmp.eq.s32.totalorder %s29, 0
      %p88 = por %p86, %p87
      %p89 = scmp.ne.s32.totalorder %s75, %s76
      %p90 = scmp.eq.s32.totalorder %s30, 1
      %p91 = por %p89, %p90
      %p93 = scmp.ne.s32.totalorder %s76, %s92
      %p94 = scmp.eq.s32.totalorder %s30, 0
      %p95 = por %p93, %p94
      %s96 = ssub.s32 %s31, %s43
      %p97 = scmp.eq.s32.totalorder %s96, 0
      %s99 = sadd.s32 %s98, 1
      %s100 = scalar_select %p97, %s98, %s99
      %p103 = pneg %p97
      %p104 = scmp.eq.s32.totalorder %s24, 1
      %p105 = por %p103, %p104
      %p106 = scmp.ne.s32.totalorder %s98, %s101
      %p107 = scmp.eq.s32.totalorder %s24, 0
      %p108 = por %p106, %p107
      %p109 = scmp.ne.s32.totalorder %s98, %s101
      %p110 = scmp.eq.s32.totalorder %s29, 1
      %p111 = por %p109, %p110
      %p112 = scmp.ne.s32.totalorder %s101, %s102
      %p113 = scmp.eq.s32.totalorder %s29, 0
      %p114 = por %p112, %p113
      %p115 = scmp.ne.s32.totalorder %s101, %s102
      %p116 = scmp.eq.s32.totalorder %s30, 1
      %p117 = por %p115, %p116
      %p119 = scmp.ne.s32.totalorder %s102, %s118
      %p120 = scmp.eq.s32.totalorder %s30, 0
      %p121 = por %p119, %p120
      %s123 = sadd.s32 %s122, 1
      %p126 = scmp.eq.s32.totalorder %s24, 1
      %p127 = scmp.ne.s32.totalorder %s122, %s124
      %p128 = scmp.eq.s32.totalorder %s24, 0
      %p129 = por %p127, %p128
      %p130 = scmp.ne.s32.totalorder %s122, %s124
      %p131 = scmp.eq.s32.totalorder %s29, 1
      %p132 = por %p130, %p131
      %p133 = scmp.ne.s32.totalorder %s124, %s125
      %p134 = scmp.eq.s32.totalorder %s29, 0
      %p135 = por %p133, %p134
      %p136 = scmp.ne.s32.totalorder %s124, %s125
      %p137 = scmp.eq.s32.totalorder %s30, 1
      %p138 = por %p136, %p137
      %p140 = scmp.ne.s32.totalorder %s125, %s139
      %p141 = scmp.eq.s32.totalorder %s30, 0
      %p142 = por %p140, %p141
      %s144 = sadd.s32 %s143, 1
      %p147 = scmp.eq.s32.totalorder %s24, 1
      %p148 = scmp.ne.s32.totalorder %s143, %s145
      %p149 = scmp.eq.s32.totalorder %s24, 0
      %p150 = por %p148, %p149
      %p151 = scmp.ne.s32.totalorder %s143, %s145
      %p152 = scmp.eq.s32.totalorder %s29, 1
      %p153 = por %p151, %p152
      %p154 = scmp.ne.s32.totalorder %s145, %s146
      %p155 = scmp.eq.s32.totalorder %s29, 0
      %p156 = por %p154, %p155
      %p157 = scmp.ne.s32.totalorder %s145, %s146
      %p158 = scmp.eq.s32.totalorder %s30, 1
      %p159 = por %p157, %p158
      %p161 = scmp.ne.s32.totalorder %s146, %s160
      %p162 = scmp.eq.s32.totalorder %s30, 0
      %p163 = por %p161, %p162
      %s164 = ssub.s32 %s32, %s39
      %p165 = scmp.eq.s32.totalorder %s164, 0
      %s167 = sadd.s32 %s166, 1
      %s168 = scalar_select %p165, %s166, %s167
      %p171 = pneg %p165
      %p172 = scmp.eq.s32.totalorder %s24, 1
      %p173 = por %p171, %p172
      %p174 = scmp.ne.s32.totalorder %s166, %s169
      %p175 = scmp.eq.s32.totalorder %s24, 0
      %p176 = por %p174, %p175
      %p177 = scmp.ne.s32.totalorder %s166, %s169
      %p178 = scmp.eq.s32.totalorder %s29, 1
      %p179 = por %p177, %p178
      %p180 = scmp.ne.s32.totalorder %s169, %s170
      %p181 = scmp.eq.s32.totalorder %s29, 0
      %p182 = por %p180, %p181
      %p183 = scmp.ne.s32.totalorder %s169, %s170
      %p184 = scmp.eq.s32.totalorder %s30, 1
      %p185 = por %p183, %p184
      %p187 = scmp.ne.s32.totalorder %s170, %s186
      %p188 = scmp.eq.s32.totalorder %s30, 0
      %p189 = por %p187, %p188
      %s190 = ssub.s32 %s32, %s39
      %p191 = scmp.eq.s32.totalorder %s190, 0
      %s193 = sadd.s32 %s192, 1
      %s194 = scalar_select %p191, %s192, %s193
      %p197 = pneg %p191
      %p198 = scmp.eq.s32.totalorder %s24, 1
      %p199 = por %p197, %p198
      %p200 = scmp.ne.s32.totalorder %s192, %s195
      %p201 = scmp.eq.s32.totalorder %s24, 0
      %p202 = por %p200, %p201
      %p203 = scmp.ne.s32.totalorder %s192, %s195
      %p204 = scmp.eq.s32.totalorder %s29, 1
      %p205 = por %p203, %p204
      %p206 = scmp.ne.s32.totalorder %s195, %s196
      %p207 = scmp.eq.s32.totalorder %s29, 0
      %p208 = por %p206, %p207
      %p209 = scmp.ne.s32.totalorder %s195, %s196
      %p210 = scmp.eq.s32.totalorder %s30, 1
      %p211 = por %p209, %p210
      %p213 = scmp.ne.s32.totalorder %s196, %s212
      %p214 = scmp.eq.s32.totalorder %s30, 0
      %p215 = por %p213, %p214
      %s216 = ssub.s32 %s32, %s39
      %p217 = scmp.eq.s32.totalorder %s216, 0
      %s219 = sadd.s32 %s218, 1
      %s220 = scalar_select %p217, %s218, %s219
      %p223 = pneg %p217
      %p224 = scmp.eq.s32.totalorder %s24, 1
      %p225 = por %p223, %p224
      %p226 = scmp.ne.s32.totalorder %s218, %s221
      %p227 = scmp.eq.s32.totalorder %s24, 0
      %p228 = por %p226, %p227
      %p229 = scmp.ne.s32.totalorder %s218, %s221
      %p230 = scmp.eq.s32.totalorder %s29, 1
      %p231 = por %p229, %p230
      %p232 = scmp.ne.s32.totalorder %s221, %s222
      %p233 = scmp.eq.s32.totalorder %s29, 0
      %p234 = por %p232, %p233
      %p235 = scmp.ne.s32.totalorder %s221, %s222
      %p236 = scmp.eq.s32.totalorder %s30, 1
      %p237 = por %p235, %p236
      %p239 = scmp.ne.s32.totalorder %s222, %s238
      %p240 = scmp.eq.s32.totalorder %s30, 0
      %p241 = por %p239, %p240
      %s242 = ssub.s32 %s32, %s39
      %p243 = scmp.eq.s32.totalorder %s242, 0
      %s245 = sadd.s32 %s244, 1
      %s246 = scalar_select %p243, %s244, %s245
      %p249 = pneg %p243
      %p250 = scmp.eq.s32.totalorder %s24, 1
      %p251 = por %p249, %p250
      %p252 = scmp.ne.s32.totalorder %s244, %s247
      %p253 = scmp.eq.s32.totalorder %s24, 0
      %p254 = por %p252, %p253
      %p255 = scmp.ne.s32.totalorder %s244, %s247
      %p256 = scmp.eq.s32.totalorder %s29, 1
      %p257 = por %p255, %p256
      %p258 = scmp.ne.s32.totalorder %s247, %s248
      %p259 = scmp.eq.s32.totalorder %s29, 0
      %p260 = por %p258, %p259
      %p261 = scmp.ne.s32.totalorder %s247, %s248
      %p262 = scmp.eq.s32.totalorder %s30, 1
      %p263 = por %p261, %p262
      %p265 = scmp.ne.s32.totalorder %s248, %s264
      %p266 = scmp.eq.s32.totalorder %s30, 0
      %p267 = por %p265, %p266
      %s268 = ssub.s32 %s32, %s39
      %p269 = scmp.eq.s32.totalorder %s268, 0
      %s271 = sadd.s32 %s270, 1
      %s272 = scalar_select %p269, %s270, %s271
      %p275 = pneg %p269
      %p276 = scmp.eq.s32.totalorder %s24, 1
      %p277 = por %p275, %p276
      %p278 = scmp.ne.s32.totalorder %s270, %s273
      %p279 = scmp.eq.s32.totalorder %s24, 0
      %p280 = por %p278, %p279
      %p281 = scmp.ne.s32.totalorder %s270, %s273
      %p282 = scmp.eq.s32.totalorder %s29, 1
      %p283 = por %p281, %p282
      %p284 = scmp.ne.s32.totalorder %s273, %s274
      %p285 = scmp.eq.s32.totalorder %s29, 0
      %p286 = por %p284, %p285
      %p287 = scmp.ne.s32.totalorder %s273, %s274
      %p288 = scmp.eq.s32.totalorder %s30, 1
      %p289 = por %p287, %p288
      %p291 = scmp.ne.s32.totalorder %s274, %s290
      %p292 = scmp.eq.s32.totalorder %s30, 0
      %p293 = por %p291, %p292
      %s294 = ssub.s32 %s32, %s39
      %p295 = scmp.eq.s32.totalorder %s294, 0
      %s297 = sadd.s32 %s296, 1
      %s298 = scalar_select %p295, %s296, %s297
      %p301 = pneg %p295
      %p302 = scmp.eq.s32.totalorder %s24, 1
      %p303 = por %p301, %p302
      %p304 = scmp.ne.s32.totalorder %s296, %s299
      %p305 = scmp.eq.s32.totalorder %s24, 0
      %p306 = por %p304, %p305
      %p307 = scmp.ne.s32.totalorder %s296, %s299
      %p308 = scmp.eq.s32.totalorder %s29, 1
      %p309 = por %p307, %p308
      %p310 = scmp.ne.s32.totalorder %s299, %s300
      %p311 = scmp.eq.s32.totalorder %s29, 0
      %p312 = por %p310, %p311
      %p313 = scmp.ne.s32.totalorder %s299, %s300
      %p314 = scmp.eq.s32.totalorder %s30, 1
      %p315 = por %p313, %p314
      %p317 = scmp.ne.s32.totalorder %s300, %s316
      %p318 = scmp.eq.s32.totalorder %s30, 0
      %p319 = por %p317, %p318
      %s320 = ssub.s32 %s32, %s39
      %p321 = scmp.eq.s32.totalorder %s320, 0
      %s323 = sadd.s32 %s322, 1
      %s324 = scalar_select %p321, %s322, %s323
      %p327 = pneg %p321
      %p328 = scmp.eq.s32.totalorder %s24, 1
      %p329 = por %p327, %p328
      %p330 = scmp.ne.s32.totalorder %s322, %s325
      %p331 = scmp.eq.s32.totalorder %s24, 0
      %p332 = por %p330, %p331
      %p333 = scmp.ne.s32.totalorder %s322, %s325
      %p334 = scmp.eq.s32.totalorder %s29, 1
      %p335 = por %p333, %p334
      %p336 = scmp.ne.s32.totalorder %s325, %s326
      %p337 = scmp.eq.s32.totalorder %s29, 0
      %p338 = por %p336, %p337
      %p339 = scmp.ne.s32.totalorder %s325, %s326
      %p340 = scmp.eq.s32.totalorder %s30, 1
      %p341 = por %p339, %p340
      %p343 = scmp.ne.s32.totalorder %s326, %s342
      %p344 = scmp.eq.s32.totalorder %s30, 0
      %p345 = por %p343, %p344
      %s346 = ssub.s32 %s32, %s39
      %p347 = scmp.eq.s32.totalorder %s346, 0
      %s349 = sadd.s32 %s348, 1
      %s350 = scalar_select %p347, %s348, %s349
      %p353 = pneg %p347
      %p354 = scmp.eq.s32.totalorder %s24, 1
      %p355 = por %p353, %p354
      %p356 = scmp.ne.s32.totalorder %s348, %s351
      %p357 = scmp.eq.s32.totalorder %s24, 0
      %p358 = por %p356, %p357
      %p359 = scmp.ne.s32.totalorder %s348, %s351
      %p360 = scmp.eq.s32.totalorder %s29, 1
      %p361 = por %p359, %p360
      %p362 = scmp.ne.s32.totalorder %s351, %s352
      %p363 = scmp.eq.s32.totalorder %s29, 0
      %p364 = por %p362, %p363
      %p365 = scmp.ne.s32.totalorder %s351, %s352
      %p366 = scmp.eq.s32.totalorder %s30, 1
      %p367 = por %p365, %p366
      %p369 = scmp.ne.s32.totalorder %s352, %s368
      %p370 = scmp.eq.s32.totalorder %s30, 0
      %p371 = por %p369, %p370
      %s372 = ssub.s32 %s32, %s39
      %p373 = scmp.eq.s32.totalorder %s372, 0
      %s375 = sadd.s32 %s374, 1
      %s376 = scalar_select %p373, %s374, %s375
      %p379 = pneg %p373
      %p380 = scmp.eq.s32.totalorder %s24, 1
      %p381 = por %p379, %p380
      %p382 = scmp.ne.s32.totalorder %s374, %s377
      %p383 = scmp.eq.s32.totalorder %s24, 0
      %p384 = por %p382, %p383
      %p385 = scmp.ne.s32.totalorder %s374, %s377
      %p386 = scmp.eq.s32.totalorder %s29, 1
      %p387 = por %p385, %p386
      %p388 = scmp.ne.s32.totalorder %s377, %s378
      %p389 = scmp.eq.s32.totalorder %s29, 0
      %p390 = por %p388, %p389
      %p391 = scmp.ne.s32.totalorder %s377, %s378
      %p392 = scmp.eq.s32.totalorder %s30, 1
      %p393 = por %p391, %p392
      %p395 = scmp.ne.s32.totalorder %s378, %s394
      %p396 = scmp.eq.s32.totalorder %s30, 0
      %p397 = por %p395, %p396
      %s398 = ssub.s32 %s32, %s39
      %p399 = scmp.eq.s32.totalorder %s398, 0
      %s401 = sadd.s32 %s400, 1
      %s402 = scalar_select %p399, %s400, %s401
      %p405 = pneg %p399
      %p406 = scmp.eq.s32.totalorder %s24, 1
      %p407 = por %p405, %p406
      %p408 = scmp.ne.s32.totalorder %s400, %s403
      %p409 = scmp.eq.s32.totalorder %s24, 0
      %p410 = por %p408, %p409
      %p411 = scmp.ne.s32.totalorder %s400, %s403
      %p412 = scmp.eq.s32.totalorder %s29, 1
      %p413 = por %p411, %p412
      %p414 = scmp.ne.s32.totalorder %s403, %s404
      %p415 = scmp.eq.s32.totalorder %s29, 0
      %p416 = por %p414, %p415
      %p417 = scmp.ne.s32.totalorder %s403, %s404
      %p418 = scmp.eq.s32.totalorder %s30, 1
      %p419 = por %p417, %p418
      %p421 = scmp.ne.s32.totalorder %s404, %s420
      %p422 = scmp.eq.s32.totalorder %s30, 0
      %p423 = por %p421, %p422
      %s424 = ssub.s32 %s32, %s39
      %p425 = scmp.eq.s32.totalorder %s424, 0
      %s427 = sadd.s32 %s426, 1
      %s428 = scalar_select %p425, %s426, %s427
      %p431 = pneg %p425
      %p432 = scmp.eq.s32.totalorder %s24, 1
      %p433 = por %p431, %p432
      %p434 = scmp.ne.s32.totalorder %s426, %s429
      %p435 = scmp.eq.s32.totalorder %s24, 0
      %p436 = por %p434, %p435
      %p437 = scmp.ne.s32.totalorder %s426, %s429
      %p438 = scmp.eq.s32.totalorder %s29, 1
      %p439 = por %p437, %p438
      %p440 = scmp.ne.s32.totalorder %s429, %s430
      %p441 = scmp.eq.s32.totalorder %s29, 0
      %p442 = por %p440, %p441
      %p443 = scmp.ne.s32.totalorder %s429, %s430
      %p444 = scmp.eq.s32.totalorder %s30, 1
      %p445 = por %p443, %p444
      %p447 = scmp.ne.s32.totalorder %s430, %s446
      %p448 = scmp.eq.s32.totalorder %s30, 0
      %p449 = por %p447, %p448
      %s450 = ssub.s32 %s32, %s39
      %p451 = scmp.eq.s32.totalorder %s450, 0
      %s453 = sadd.s32 %s452, 1
      %s454 = scalar_select %p451, %s452, %s453
      %p457 = pneg %p451
      %p458 = scmp.eq.s32.totalorder %s24, 1
      %p459 = por %p457, %p458
      %p460 = scmp.ne.s32.totalorder %s452, %s455
      %p461 = scmp.eq.s32.totalorder %s24, 0
      %p462 = por %p460, %p461
      %p463 = scmp.ne.s32.totalorder %s452, %s455
      %p464 = scmp.eq.s32.totalorder %s29, 1
      %p465 = por %p463, %p464
      %p466 = scmp.ne.s32.totalorder %s455, %s456
      %p467 = scmp.eq.s32.totalorder %s29, 0
      %p468 = por %p466, %p467
      %p469 = scmp.ne.s32.totalorder %s455, %s456
      %p470 = scmp.eq.s32.totalorder %s30, 1
      %p471 = por %p469, %p470
      %p473 = scmp.ne.s32.totalorder %s456, %s472
      %p474 = scmp.eq.s32.totalorder %s30, 0
      %p475 = por %p473, %p474
      %s476 = ssub.s32 %s31, %s43
      %p477 = scmp.eq.s32.totalorder %s476, 0
      %s479 = sadd.s32 %s478, 1
      %s480 = scalar_select %p477, %s478, %s479
      %p483 = pneg %p477
      %p484 = scmp.eq.s32.totalorder %s24, 1
      %p485 = por %p483, %p484
      %p486 = scmp.ne.s32.totalorder %s478, %s481
      %p487 = scmp.eq.s32.totalorder %s24, 0
      %p488 = por %p486, %p487
      %p489 = scmp.ne.s32.totalorder %s478, %s481
      %p490 = scmp.eq.s32.totalorder %s29, 1
      %p491 = por %p489, %p490
      %p492 = scmp.ne.s32.totalorder %s481, %s482
      %p493 = scmp.eq.s32.totalorder %s29, 0
      %p494 = por %p492, %p493
      %p495 = scmp.ne.s32.totalorder %s481, %s482
      %p496 = scmp.eq.s32.totalorder %s30, 1
      %p497 = por %p495, %p496
      %p499 = scmp.ne.s32.totalorder %s482, %s498
      %p500 = scmp.eq.s32.totalorder %s30, 0
      %p501 = por %p499, %p500
      %p502 = scmp.le.s32.totalorder 1, %s24
      %p503 = scmp.lt.s32.totalorder %s24, 3
      %p504 = pnand %p502, %p503
      %p505 = pneg %p504
      // Predicated region
      $region9: #{behrt_demo_forward.1} parent=5 // pred_check
        _
      $region10: #{behrt_demo_forward.1} parent=5 // pred_check_branch
        %507 = sbr.rel (%p504) target = $region12
      $region11: #{behrt_demo_forward.1} parent=5 // pred_region
        %s508 = ssub.s32 %s24, 1
        // Predicated region
        $region13: #{behrt_demo_forward.1} parent=11 // pred_check
          %p509 = pneg %p62
        $region14: #{behrt_demo_forward.1} parent=11 // pred_check_branch
          %511 = sbr.rel (%p509) target = $region16
        $region15: #{behrt_demo_forward.1} parent=11 // pred_region
          %s512 = smul.u32 2, %s33
          %p513 = scmp.lt.s32.totalorder %s512, 1
          %s514 = scalar_select %p513, %s512, 1
          %s515 = smul.addr %s514, 8
          %s516 = scalar_lea.vmem %s0, %s515
          %s517 = smul.u32 2, %s33
        $region16: #{behrt_demo_forward.1} parent=11 // pred_fallthru
          _
        // Predicated region
        $region17: #{behrt_demo_forward.1} parent=11 // pred_check
          %p518 = pneg %p88
        $region18: #{behrt_demo_forward.1} parent=11 // pred_check_branch
          %520 = sbr.rel (%p518) target = $region20
        $region19: #{behrt_demo_forward.1} parent=11 // pred_region
          %s521 = smul.u32 2, %s33
          %p522 = scmp.lt.s32.totalorder %s521, 1
          %s523 = scalar_select %p522, %s521, 1
          %s524 = scalar_lea.vmem %s1, %s523
          %s525 = smul.u32 2, %s33
        $region20: #{behrt_demo_forward.1} parent=11 // pred_fallthru
          _
        // Predicated region
        $region21: #{behrt_demo_forward.1} parent=11 // pred_check
          %p526 = pneg %p114
        $region22: #{behrt_demo_forward.1} parent=11 // pred_check_branch
          %528 = sbr.rel (%p526) target = $region24
        $region23: #{behrt_demo_forward.1} parent=11 // pred_region
          %p529 = scmp.lt.s32.totalorder %s33, 0
          %s530 = scalar_select %p529, %s33, 0
          %s531 = smul.addr %s530, 2
          %s532 = scalar_lea.vmem %s2, %s531
        $region24: #{behrt_demo_forward.1} parent=11 // pred_fallthru
          _
        // Predicated region
        $region25: #{behrt_demo_forward.1} parent=11 // pred_check
          %p533 = pneg %p135
        $region26: #{behrt_demo_forward.1} parent=11 // pred_check_branch
          %535 = sbr.rel (%p533) target = $region28
        $region27: #{behrt_demo_forward.1} parent=11 // pred_region
          _
        $region28: #{behrt_demo_forward.1} parent=11 // pred_fallthru
          _
        // Predicated region
        $region29: #{behrt_demo_forward.1} parent=11 // pred_check
          %p536 = pneg %p156
        $region30: #{behrt_demo_forward.1} parent=11 // pred_check_branch
          %538 = sbr.rel (%p536) target = $region32
        $region31: #{behrt_demo_forward.1} parent=11 // pred_region
          _
        $region32: #{behrt_demo_forward.1} parent=11 // pred_fallthru
          _
      $region12: #{behrt_demo_forward.1} parent=5 // pred_fallthru
        _
      %p539 = scmp.lt.s32.totalorder %s24, 2
      // Predicated region
      $region33: #{behrt_demo_forward.1} parent=5 // pred_check
        %p540 = pneg %p539
      $region34: #{behrt_demo_forward.1} parent=5 // pred_check_branch
        %542 = sbr.rel (%p540) target = $region36
      $region35: #{behrt_demo_forward.1} parent=5 // pred_region
        // Predicated region
        $region37: #{behrt_demo_forward.1} parent=35 // pred_check
          %p543 = pneg %p176
        $region38: #{behrt_demo_forward.1} parent=35 // pred_check_branch
          %545 = sbr.rel (%p543) target = $region40
        $region39: #{behrt_demo_forward.1} parent=35 // pred_region
          %p546 = scmp.lt.s32.totalorder %s32, 1
          %s547 = scalar_select %p546, %s32, 1
          %s548 = smul.addr %s547, 48
          %s549 = smul.addr %s548, 4
          %s550 = scalar_lea.vmem %s5, %s549
        $region40: #{behrt_demo_forward.1} parent=35 // pred_fallthru
          _
        // Predicated region
        $region41: #{behrt_demo_forward.1} parent=35 // pred_check
          %p551 = pneg %p202
        $region42: #{behrt_demo_forward.1} parent=35 // pred_check_branch
          %553 = sbr.rel (%p551) target = $region44
        $region43: #{behrt_demo_forward.1} parent=35 // pred_region
          %p554 = scmp.lt.s32.totalorder %s32, 1
          %s555 = scalar_select %p554, %s32, 1
          %s556 = smul.addr %s555, 3
          %s557 = scalar_lea.vmem %s6, %s556
        $region44: #{behrt_demo_forward.1} parent=35 // pred_fallthru
          _
        // Predicated region
        $region45: #{behrt_demo_forward.1} parent=35 // pred_check
          %p558 = pneg %p228
        $region46: #{behrt_demo_forward.1} parent=35 // pred_check_branch
          %560 = sbr.rel (%p558) target = $region48
        $region47: #{behrt_demo_forward.1} parent=35 // pred_region
          %p561 = scmp.lt.s32.totalorder %s32, 1
          %s562 = scalar_select %p561, %s32, 1
          %s563 = smul.addr %s562, 16
          %s564 = smul.addr %s563, 4
          %s565 = scalar_lea.vmem %s7, %s564
        $region48: #{behrt_demo_forward.1} parent=35 // pred_fallthru
          _
        // Predicated region
        $region49: #{behrt_demo_forward.1} parent=35 // pred_check
          %p566 = pneg %p254
        $region50: #{behrt_demo_forward.1} parent=35 // pred_check_branch
          %568 = sbr.rel (%p566) target = $region52
        $region51: #{behrt_demo_forward.1} parent=35 // pred_region
          %p569 = scmp.lt.s32.totalorder %s32, 1
          %s570 = scalar_select %p569, %s32, 1
          %s571 = scalar_lea.vmem %s8, %s570
        $region52: #{behrt_demo_forward.1} parent=35 // pred_fallthru
          _
        // Predicated region
        $region53: #{behrt_demo_forward.1} parent=35 // pred_check
          %p572 = pneg %p280
        $region54: #{behrt_demo_forward.1} parent=35 // pred_check_branch
          %574 = sbr.rel (%p572) target = $region56
        $region55: #{behrt_demo_forward.1} parent=35 // pred_region
          %p575 = scmp.lt.s32.totalorder %s32, 1
          %s576 = scalar_select %p575, %s32, 1
          %s577 = scalar_lea.vmem %s9, %s576
        $region56: #{behrt_demo_forward.1} parent=35 // pred_fallthru
          _
        // Predicated region
        $region57: #{behrt_demo_forward.1} parent=35 // pred_check
          %p578 = pneg %p306
        $region58: #{behrt_demo_forward.1} parent=35 // pred_check_branch
          %580 = sbr.rel (%p578) target = $region60
        $region59: #{behrt_demo_forward.1} parent=35 // pred_region
          %p581 = scmp.lt.s32.totalorder %s32, 1
          %s582 = scalar_select %p581, %s32, 1
          %s583 = scalar_lea.vmem %s10, %s582
        $region60: #{behrt_demo_forward.1} parent=35 // pred_fallthru
          _
        // Predicated region
        $region61: #{behrt_demo_forward.1} parent=35 // pred_check
          %p584 = pneg %p332
        $region62: #{behrt_demo_forward.1} parent=35 // pred_check_branch
          %586 = sbr.rel (%p584) target = $region64
        $region63: #{behrt_demo_forward.1} parent=35 // pred_region
          %p587 = scmp.lt.s32.totalorder %s32, 1
          %s588 = scalar_select %p587, %s32, 1
          %s589 = smul.addr %s588, 64
          %s590 = smul.addr %s589, 4
          %s591 = scalar_lea.vmem %s11, %s590
        $region64: #{behrt_demo_forward.1} parent=35 // pred_fallthru
          _
        // Predicated region
        $region65: #{behrt_demo_forward.1} parent=35 // pred_check
          %p592 = pneg %p358
        $region66: #{behrt_demo_forward.1} parent=35 // pred_check_branch
          %594 = sbr.rel (%p592) target = $region68
        $region67: #{behrt_demo_forward.1} parent=35 // pred_region
          %p595 = scmp.lt.s32.totalorder %s32, 1
          %s596 = scalar_select %p595, %s32, 1
          %s597 = smul.addr %s596, 4
          %s598 = scalar_lea.vmem %s12, %s597
        $region68: #{behrt_demo_forward.1} parent=35 // pred_fallthru
          _
        // Predicated region
        $region69: #{behrt_demo_forward.1} parent=35 // pred_check
          %p599 = pneg %p384
        $region70: #{behrt_demo_forward.1} parent=35 // pred_check_branch
          %601 = sbr.rel (%p599) target = $region72
        $region71: #{behrt_demo_forward.1} parent=35 // pred_region
          %p602 = scmp.lt.s32.totalorder %s32, 1
          %s603 = scalar_select %p602, %s32, 1
          %s604 = smul.addr %s603, 64
          %s605 = smul.addr %s604, 4
          %s606 = scalar_lea.vmem %s13, %s605
        $region72: #{behrt_demo_forward.1} parent=35 // pred_fallthru
          _
        // Predicated region
        $region73: #{behrt_demo_forward.1} parent=35 // pred_check
          %p607 = pneg %p410
        $region74: #{behrt_demo_forward.1} parent=35 // pred_check_branch
          %609 = sbr.rel (%p607) target = $region76
        $region75: #{behrt_demo_forward.1} parent=35 // pred_region
          %p610 = scmp.lt.s32.totalorder %s32, 1
          %s611 = scalar_select %p610, %s32, 1
          %s612 = scalar_lea.vmem %s14, %s611
        $region76: #{behrt_demo_forward.1} parent=35 // pred_fallthru
          _
        // Predicated region
        $region77: #{behrt_demo_forward.1} parent=35 // pred_check
          %p613 = pneg %p436
        $region78: #{behrt_demo_forward.1} parent=35 // pred_check_branch
          %615 = sbr.rel (%p613) target = $region80
        $region79: #{behrt_demo_forward.1} parent=35 // pred_region
          %p616 = scmp.lt.s32.totalorder %s32, 1
          %s617 = scalar_select %p616, %s32, 1
          %s618 = scalar_lea.vmem %s15, %s617
        $region80: #{behrt_demo_forward.1} parent=35 // pred_fallthru
          _
        // Predicated region
        $region81: #{behrt_demo_forward.1} parent=35 // pred_check
          %p619 = pneg %p462
        $region82: #{behrt_demo_forward.1} parent=35 // pred_check_branch
          %621 = sbr.rel (%p619) target = $region84
        $region83: #{behrt_demo_forward.1} parent=35 // pred_region
          %p622 = scmp.lt.s32.totalorder %s32, 1
          %s623 = scalar_select %p622, %s32, 1
          %s624 = scalar_lea.vmem %s16, %s623
        $region84: #{behrt_demo_forward.1} parent=35 // pred_fallthru
          _
      $region36: #{behrt_demo_forward.1} parent=5 // pred_fallthru
        _
      %p625 = scmp.le.s32.totalorder 1, %s24
      %p626 = scmp.lt.s32.totalorder %s24, 3
      %p627 = pnand %p625, %p626
      %p628 = pneg %p627
      // Predicated region
      $region85: #{behrt_demo_forward.1} parent=5 // pred_check
        _
      $region86: #{behrt_demo_forward.1} parent=5 // pred_check_branch
        %630 = sbr.rel (%p627) target = $region88
      $region87: #{behrt_demo_forward.1} parent=5 // pred_region
        %s631 = ssub.s32 %s24, 1
        %s632 = smul.u32 2, %s33
        %p633 = scmp.lt.s32.totalorder %s632, 1
        %s634 = scalar_select %p633, %s632, 1
        %s635 = smul.addr %s634, 8
        %s636 = scalar_lea.vmem %s0, %s635
        %p637 = pneg %p62
        %p638 = pneg %p59
        %s639 = smul.u32 2, %s33
        %p640 = scmp.lt.s32.totalorder %s639, 1
        %s641 = scalar_select %p640, %s639, 1
        %s642 = scalar_lea.vmem %s1, %s641
        %p643 = pneg %p88
        %p644 = pneg %p85
        %p645 = scmp.lt.s32.totalorder %s33, 0
        %s646 = scalar_select %p645, %s33, 0
        %s647 = smul.addr %s646, 2
        %s648 = scalar_lea.vmem %s2, %s647
        %p649 = pneg %p114
        %p650 = pneg %p111
        %p651 = pneg %p135
        %p652 = pneg %p132
        %p653 = pneg %p156
        %p654 = pneg %p153
        %p655 = scmp.lt.s32.totalorder %s34, 1
        %s656 = scalar_select %p655, %s34, 1
        %s657 = smul.addr %s656, 48
        %s658 = smul.addr %s657, 4
        %s659 = scalar_lea.vmem %s5, %s658
        %p660 = pneg %p182
        %p661 = pneg %p179
        %p662 = scmp.lt.s32.totalorder %s34, 1
        %s663 = scalar_select %p662, %s34, 1
        %s664 = smul.addr %s663, 3
        %s665 = scalar_lea.vmem %s6, %s664
        %p666 = pneg %p208
        %p667 = pneg %p205
        %p668 = scmp.lt.s32.totalorder %s34, 1
        %s669 = scalar_select %p668, %s34, 1
        %s670 = smul.addr %s669, 16
        %s671 = smul.addr %s670, 4
        %s672 = scalar_lea.vmem %s7, %s671
        %p673 = pneg %p234
        %p674 = pneg %p231
        %p675 = scmp.lt.s32.totalorder %s34, 1
        %s676 = scalar_select %p675, %s34, 1
        %s677 = scalar_lea.vmem %s8, %s676
        %p678 = pneg %p260
        %p679 = pneg %p257
        %p680 = scmp.lt.s32.totalorder %s34, 1
        %s681 = scalar_select %p680, %s34, 1
        %s682 = scalar_lea.vmem %s9, %s681
        %p683 = pneg %p286
        %p684 = pneg %p283
        %p685 = scmp.lt.s32.totalorder %s34, 1
        %s686 = scalar_select %p685, %s34, 1
        %s687 = scalar_lea.vmem %s10, %s686
        %p688 = pneg %p312
        %p689 = pneg %p309
        %p690 = scmp.lt.s32.totalorder %s34, 1
        %s691 = scalar_select %p690, %s34, 1
        %s692 = smul.addr %s691, 64
        %s693 = smul.addr %s692, 4
        %s694 = scalar_lea.vmem %s11, %s693
        %p695 = pneg %p338
        %p696 = pneg %p335
        %p697 = scmp.lt.s32.totalorder %s34, 1
        %s698 = scalar_select %p697, %s34, 1
        %s699 = smul.addr %s698, 4
        %s700 = scalar_lea.vmem %s12, %s699
        %p701 = pneg %p364
        %p702 = pneg %p361
        %p703 = scmp.lt.s32.totalorder %s34, 1
        %s704 = scalar_select %p703, %s34, 1
        %s705 = smul.addr %s704, 64
        %s706 = smul.addr %s705, 4
        %s707 = scalar_lea.vmem %s13, %s706
        %p708 = pneg %p390
        %p709 = pneg %p387
        %p710 = scmp.lt.s32.totalorder %s34, 1
        %s711 = scalar_select %p710, %s34, 1
        %s712 = scalar_lea.vmem %s14, %s711
        %p713 = pneg %p416
        %p714 = pneg %p413
        %p715 = scmp.lt.s32.totalorder %s34, 1
        %s716 = scalar_select %p715, %s34, 1
        %s717 = scalar_lea.vmem %s15, %s716
        %p718 = pneg %p442
        %p719 = pneg %p439
        %p720 = scmp.lt.s32.totalorder %s34, 1
        %s721 = scalar_select %p720, %s34, 1
        %s722 = scalar_lea.vmem %s16, %s721
        %p723 = pneg %p468
        %p724 = pneg %p465
        %p725 = pneg %p494
        %p726 = pneg %p491
        %s727 = smul.u32 2, %s33
        %p728 = scmp.lt.s32.totalorder %s727, 1
        %s729 = scalar_select %p728, %s727, 1
        %s730 = smul.addr %s729, 8
        %s731 = scalar_lea.vmem %s0, %s730
        %s732 = smul.u32 2, %s33
        %s733 = smul.u32 2, %s33
        %p734 = scmp.lt.s32.totalorder %s733, 1
        %s735 = scalar_select %p734, %s733, 1
        %s736 = scalar_lea.vmem %s1, %s735
        %s737 = smul.u32 2, %s33
        %p738 = scmp.lt.s32.totalorder %s33, 0
        %s739 = scalar_select %p738, %s33, 0
        %s740 = smul.addr %s739, 2
        %s741 = scalar_lea.vmem %s2, %s740
        %p742 = scmp.lt.s32.totalorder %s34, 1
        %s743 = scalar_select %p742, %s34, 1
        %s744 = smul.addr %s743, 48
        %s745 = smul.addr %s744, 4
        %s746 = scalar_lea.vmem %s5, %s745
        %p747 = scmp.lt.s32.totalorder %s34, 1
        %s748 = scalar_select %p747, %s34, 1
        %s749 = smul.addr %s748, 3
        %s750 = scalar_lea.vmem %s6, %s749
        %p751 = scmp.lt.s32.totalorder %s34, 1
        %s752 = scalar_select %p751, %s34, 1
        %s753 = smul.addr %s752, 16
        %s754 = smul.addr %s753, 4
        %s755 = scalar_lea.vmem %s7, %s754
        %p756 = scmp.lt.s32.totalorder %s34, 1
        %s757 = scalar_select %p756, %s34, 1
        %s758 = scalar_lea.vmem %s8, %s757
        %p759 = scmp.lt.s32.totalorder %s34, 1
        %s760 = scalar_select %p759, %s34, 1
        %s761 = scalar_lea.vmem %s9, %s760
        %p762 = scmp.lt.s32.totalorder %s34, 1
        %s763 = scalar_select %p762, %s34, 1
        %s764 = scalar_lea.vmem %s10, %s763
        %p765 = scmp.lt.s32.totalorder %s34, 1
        %s766 = scalar_select %p765, %s34, 1
        %s767 = smul.addr %s766, 64
        %s768 = smul.addr %s767, 4
        %s769 = scalar_lea.vmem %s11, %s768
        %p770 = scmp.lt.s32.totalorder %s34, 1
        %s771 = scalar_select %p770, %s34, 1
        %s772 = smul.addr %s771, 4
        %s773 = scalar_lea.vmem %s12, %s772
        %p774 = scmp.lt.s32.totalorder %s34, 1
        %s775 = scalar_select %p774, %s34, 1
        %s776 = smul.addr %s775, 64
        %s777 = smul.addr %s776, 4
        %s778 = scalar_lea.vmem %s13, %s777
        %p779 = scmp.lt.s32.totalorder %s34, 1
        %s780 = scalar_select %p779, %s34, 1
        %s781 = scalar_lea.vmem %s14, %s780
        %p782 = scmp.lt.s32.totalorder %s34, 1
        %s783 = scalar_select %p782, %s34, 1
        %s784 = scalar_lea.vmem %s15, %s783
        %p785 = scmp.lt.s32.totalorder %s34, 1
        %s786 = scalar_select %p785, %s34, 1
        %s787 = scalar_lea.vmem %s16, %s786
        %p789 = scmp.eq.s32.totalorder %s34, 0
        // Predicated region
        $region89: #{behrt_demo_forward.1} parent=87 // pred_check
          %p790 = pneg %p789
        $region90: #{behrt_demo_forward.1} parent=87 // pred_check_branch
          %792 = sbr.rel (%p790) target = $region92
        $region91: #{behrt_demo_forward.1} parent=87 // pred_region
          %v793 = vld [vmem:[%s731] sm:$0xff]
          %v794 = vld [vmem:[%s731 + $0x8] sm:$0xff]
          %v795 = vld [vmem:[%s3] sm:$0x1]
          %v796 = vld [vmem:[%s4] sm:$0x1]
          %797 = vadd.xlane.f32.xlu0 %v793
          %v798 = vpop.xlane.xlu0 %797
          %799 = vadd.xlane.f32.xlu0 %v794
          %v800 = vpop.xlane.xlu0 %799
          %v801 = vrcp.pop 128.0
          %v802 = vmul.f32 %v798, %v801
          %v803 = vmul.f32 %v800, %v801
          %v804 = vsub.f32 %v793, %v802
          %v805 = vsub.f32 %v794, %v803
          %v806 = vmul.f32 %v804, %v804
          %v807 = vmul.f32 %v805, %v805
          %808 = vadd.xlane.f32.xlu0 %v806
          %v809 = vpop.xlane.xlu0 %808
          %810 = vadd.xlane.f32.xlu0 %v807
          %v811 = vpop.xlane.xlu0 %810
          %v812 = vmul.f32 %v809, %v801
          %v813 = vmul.f32 %v811, %v801
          %v814 = vadd.f32 %v812, 1e-12
          %v815 = vadd.f32 %v813, 1e-12
          %v816 = vrsqrt.pop %v814
          %v817 = vrsqrt.pop %v815
          %v818 = vmul.f32 %v804, %v816
          %v819 = vmul.f32 %v805, %v817
          %v821 = vlaneseq
          %v822 = vshrl.u32 %v821, 7
          %v823 = vsub.s32 0, %v822
          %v824 = vrot.slane %v795, %v823
          %v826 = vmul.f32 %v818, %v824
          %v827 = vmul.f32 %v819, %v824
          %v829 = vlaneseq
          %v830 = vshrl.u32 %v829, 7
          %v831 = vsub.s32 0, %v830
          %v832 = vrot.slane %v796, %v831
          %v834 = vadd.f32 %v826, %v832
          %v835 = vadd.f32 %v827, %v832
          %836 = vst [vmem:[#allocation2] sm:$0xff] %v834
          %837 = vst [vmem:[#allocation2 + $0x8] sm:$0xff] %v835
        $region92: #{behrt_demo_forward.1} parent=87 // pred_fallthru
          _
        %v838 = vld [vmem:[#allocation2] sm:$0xff]
        %v839 = vld [vmem:[#allocation2 + $0x8] sm:$0xff]
        %v840 = vpack.c.bf16 %v839, %v838
        %v841 = vld [vmem:[%s746] sm:$0xff]
        %v842 = vld [vmem:[%s746 + $0x8] sm:$0xf]
        %v843 = vld [vmem:[%s746 + $0xc] sm:$0xff]
        %v844 = vld [vmem:[%s746 + $0x14] sm:$0xf]
        %v845 = vld [vmem:[%s746 + $0x18] sm:$0xff]
        %v846 = vld [vmem:[%s746 + $0x20] sm:$0xf]
        %v847 = vld [vmem:[%s746 + $0x24] sm:$0xff]
        %v848 = vld [vmem:[%s746 + $0x2c] sm:$0xf]
        %v849 = vld [vmem:[%s746 + $0x30] sm:$0xff]
        %v850 = vld [vmem:[%s746 + $0x38] sm:$0xf]
        %v851 = vld [vmem:[%s746 + $0x3c] sm:$0xff]
        %v852 = vld [vmem:[%s746 + $0x44] sm:$0xf]
        %v853 = vld [vmem:[%s746 + $0x48] sm:$0xff]
        %v854 = vld [vmem:[%s746 + $0x50] sm:$0xf]
        %v855 = vld [vmem:[%s746 + $0x54] sm:$0xff]
        %v856 = vld [vmem:[%s746 + $0x5c] sm:$0xf]
        %v857 = vld [vmem:[%s746 + $0x60] sm:$0xff]
        %v858 = vld [vmem:[%s746 + $0x68] sm:$0xf]
        %v859 = vld [vmem:[%s746 + $0x6c] sm:$0xff]
        %v860 = vld [vmem:[%s746 + $0x74] sm:$0xf]
        %v861 = vld [vmem:[%s746 + $0x78] sm:$0xff]
        %v862 = vld [vmem:[%s746 + $0x80] sm:$0xf]
        %v863 = vld [vmem:[%s746 + $0x84] sm:$0xff]
        %v864 = vld [vmem:[%s746 + $0x8c] sm:$0xf]
        %v865 = vld [vmem:[%s746 + $0x90] sm:$0xff]
        %v866 = vld [vmem:[%s746 + $0x98] sm:$0xf]
        %v867 = vld [vmem:[%s746 + $0x9c] sm:$0xff]
        %v868 = vld [vmem:[%s746 + $0xa4] sm:$0xf]
        %v869 = vld [vmem:[%s746 + $0xa8] sm:$0xff]
        %v870 = vld [vmem:[%s746 + $0xb0] sm:$0xf]
        %v871 = vld [vmem:[%s746 + $0xb4] sm:$0xff]
        %v872 = vld [vmem:[%s746 + $0xbc] sm:$0xf]
        %v873 = vld [vmem:[%s750] sm:$0x7]
        %v875 = vlaneseq
        %v876 = vshrl.u32 %v875, 7
        %v877 = vsub.s32 0, %v876
        %v878 = vrot.slane %v873, %v877
        %v879 = vlaneseq
        %v880 = vshrl.u32 %v879, 7
        %v881 = vsub.s32 1, %v880
        %v882 = vrot.slane %v873, %v881
        %v883 = vlaneseq
        %v884 = vshrl.u32 %v883, 7
        %v885 = vsub.s32 2, %v884
        %v886 = vrot.slane %v873, %v885
        %v922 = vunpack.c.l.b16 %v841
        %v923 = vunpack.c.h.b16 %v841
        %v924 = vunpack.c.l.b16 %v842
        %v925 = vunpack.c.l.b16 %v843
        %v926 = vunpack.c.h.b16 %v843
        %v927 = vunpack.c.l.b16 %v844
        %v928 = vunpack.c.l.b16 %v845
        %v929 = vunpack.c.h.b16 %v845
        %v930 = vunpack.c.l.b16 %v846
        %v931 = vunpack.c.l.b16 %v847
        %v932 = vunpack.c.h.b16 %v847
        %v933 = vunpack.c.l.b16 %v848
        %v934 = vunpack.c.l.b16 %v849
        %v935 = vunpack.c.h.b16 %v849
        %v936 = vunpack.c.l.b16 %v850
        %v937 = vunpack.c.l.b16 %v851
        %v938 = vunpack.c.h.b16 %v851
        %v939 = vunpack.c.l.b16 %v852
        %v940 = vunpack.c.l.b16 %v853
        %v941 = vunpack.c.h.b16 %v853
        %v942 = vunpack.c.l.b16 %v854
        %v943 = vunpack.c.l.b16 %v855
        %v944 = vunpack.c.h.b16 %v855
        %v945 = vunpack.c.l.b16 %v856
        %v946 = vunpack.c.l.b16 %v857
        %v947 = vunpack.c.h.b16 %v857
        %v948 = vunpack.c.l.b16 %v858
        %v949 = vunpack.c.l.b16 %v859
        %v950 = vunpack.c.h.b16 %v859
        %v951 = vunpack.c.l.b16 %v860
        %v952 = vunpack.c.l.b16 %v861
        %v953 = vunpack.c.h.b16 %v861
        %v954 = vunpack.c.l.b16 %v862
        %v955 = vunpack.c.l.b16 %v863
        %v956 = vunpack.c.h.b16 %v863
        %v957 = vunpack.c.l.b16 %v864
        %v958 = vunpack.c.l.b16 %v865
        %v959 = vunpack.c.h.b16 %v865
        %v960 = vunpack.c.l.b16 %v866
        %v961 = vunpack.c.l.b16 %v867
        %v962 = vunpack.c.h.b16 %v867
        %v963 = vunpack.c.l.b16 %v868
        %v964 = vunpack.c.l.b16 %v869
        %v965 = vunpack.c.h.b16 %v869
        %v966 = vunpack.c.l.b16 %v870
        %v967 = vunpack.c.l.b16 %v871
        %v968 = vunpack.c.h.b16 %v871
        %v969 = vunpack.c.l.b16 %v872
        %v970 = vpack.c.b16 %v925, %v922
        %v971 = vpack.c.b16 %v926, %v923
        %v972 = vpack.c.b16 %v927, %v924
        %v973 = vpack.c.b16 %v931, %v928
        %v974 = vpack.c.b16 %v932, %v929
        %v975 = vpack.c.b16 %v933, %v930
        %v976 = vpack.c.b16 %v937, %v934
        %v977 = vpack.c.b16 %v938, %v935
        %v978 = vpack.c.b16 %v939, %v936
        %v979 = vpack.c.b16 %v943, %v940
        %v980 = vpack.c.b16 %v944, %v941
        %v981 = vpack.c.b16 %v945, %v942
        %v982 = vpack.c.b16 %v949, %v946
        %v983 = vpack.c.b16 %v950, %v947
        %v984 = vpack.c.b16 %v951, %v948
        %v985 = vpack.c.b16 %v955, %v952
        %v986 = vpack.c.b16 %v956, %v953
        %v987 = vpack.c.b16 %v957, %v954
        %v988 = vpack.c.b16 %v961, %v958
        %v989 = vpack.c.b16 %v962, %v959
        %v990 = vpack.c.b16 %v963, %v960
        %v991 = vpack.c.b16 %v967, %v964
        %v992 = vpack.c.b16 %v968, %v965
        %v993 = vpack.c.b16 %v969, %v966
        %1018 = vmatprep.subr.bf16.mxu0 %v971
        %1019 = vmatpush1.bf16.msra.mxu0 %v970
        %1020 = vmatprep.subr.bf16.mxu0 %v974
        %1021 = vmatpush1.bf16.msra.mxu0 %v973
        %1022 = vmatprep.subr.bf16.mxu0 %v977
        %1023 = vmatpush1.bf16.msra.mxu0 %v976
        %1024 = vmatprep.subr.bf16.mxu0 %v980
        %1025 = vmatpush1.bf16.msra.mxu0 %v979
        %1026 = vmatprep.subr.bf16.mxu0 %v983
        %1027 = vmatpush1.bf16.msra.mxu0 %v982
        %1028 = vmatprep.subr.bf16.mxu0 %v986
        %1029 = vmatpush1.bf16.msra.mxu0 %v985
        %1030 = vmatprep.subr.bf16.mxu0 %v989
        %1031 = vmatpush1.bf16.msra.mxu0 %v988
        %1032 = vmatprep.subr.bf16.mxu0 %v992
        %1033 = vmatpush1.bf16.msra.mxu0 %v991
        %1034 = vmatprep.subr.bf16.mxu0 0
        %1035 = vmatpush1.bf16.msra.mxu0 0
        %1036 = vmatprep.subr.bf16.mxu0 0
        %1037 = vmatpush1.bf16.msra.mxu0 0
        %1038 = vmatprep.subr.bf16.mxu0 0
        %1039 = vmatpush1.bf16.msra.mxu0 0
        %1040 = vmatprep.subr.bf16.mxu0 0
        %1041 = vmatpush1.bf16.msra.mxu0 0
        %1042 = vmatprep.subr.bf16.mxu0 0
        %1043 = vmatpush1.bf16.msra.mxu0 0
        %1044 = vmatprep.subr.bf16.mxu0 0
        %1045 = vmatpush1.bf16.msra.mxu0 0
        %1046 = vmatprep.subr.bf16.mxu0 0
        %1047 = vmatpush1.bf16.msra.mxu0 0
        %1048 = vmatprep.subr.bf16.mxu0 0
        %1049 = vmatpush1.bf16.msra.mxu0 0
        %1050 = vmatprep.mubr.bf16.mxu0 0
        %1051 = vmatmul.mubr.bf16.gmra.mrb[0].mxu0 %v840
        %v1052 = vpop.f32.mrb[0].mxu0
        %v1053 = vadd.f32 %v878, %v1052
        %v1054 = vpop.f32.mrb[0].mxu0
        %v1055 = vadd.f32 %v882, %v1054
        %v1056 = vpop.f32.mrb[0].mxu0
        %v1057 = vadd.f32 %v878, %v1056
        %v1058 = vpop.f32.mrb[0].mxu0
        %v1059 = vadd.f32 %v882, %v1058
        %1060 = vdwg.mxu0
        %1061 = vmatprep.subr.bf16.mxu0 0
        %1062 = vmatpush1.bf16.msra.mxu0 %v972
        %1063 = vmatprep.subr.bf16.mxu0 0
        %1064 = vmatpush1.bf16.msra.mxu0 %v975
        %1065 = vmatprep.subr.bf16.mxu0 0
        %1066 = vmatpush1.bf16.msra.mxu0 %v978
        %1067 = vmatprep.subr.bf16.mxu0 0
        %1068 = vmatpush1.bf16.msra.mxu0 %v981
        %1069 = vmatprep.subr.bf16.mxu0 0
        %1070 = vmatpush1.bf16.msra.mxu0 %v984
        %1071 = vmatprep.subr.bf16.mxu0 0
        %1072 = vmatpush1.bf16.msra.mxu0 %v987
        %1073 = vmatprep.subr.bf16.mxu0 0
        %1074 = vmatpush1.bf16.msra.mxu0 %v990
        %1075 = vmatprep.subr.bf16.mxu0 0
        %1076 = vmatpush1.bf16.msra.mxu0 %v993
        %1077 = vmatprep.subr.bf16.mxu0 0
        %1078 = vmatpush1.bf16.msra.mxu0 0
        %1079 = vmatprep.subr.bf16.mxu0 0
        %1080 = vmatpush1.bf16.msra.mxu0 0
        %1081 = vmatprep.subr.bf16.mxu0 0
        %1082 = vmatpush1.bf16.msra.mxu0 0
        %1083 = vmatprep.subr.bf16.mxu0 0
        %1084 = vmatpush1.bf16.msra.mxu0 0
        %1085 = vmatprep.subr.bf16.mxu0 0
        %1086 = vmatpush1.bf16.msra.mxu0 0
        %1087 = vmatprep.subr.bf16.mxu0 0
        %1088 = vmatpush1.bf16.msra.mxu0 0
        %1089 = vmatprep.subr.bf16.mxu0 0
        %1090 = vmatpush1.bf16.msra.mxu0 0
        %1091 = vmatprep.subr.bf16.mxu0 0
        %1092 = vmatpush1.bf16.msra.mxu0 0
        %1093 = vmatprep.mubr.bf16.mxu0 0
        %1094 = vmatmul.mubr.bf16.gmra.mrb[0].mxu0 %v840
        %v1095 = vpop.f32.mrb[0].mxu0
        %v1096 = vadd.f32 %v886, %v1095
        %v1097 = vpop.f32.mrb[0].mxu0
        %v1098 = vpop.f32.mrb[0].mxu0
        %v1099 = vadd.f32 %v886, %v1098
        %v1100 = vpop.f32.mrb[0].mxu0
        %1101 = vdwg.mxu0
        %v1102 = vld [vmem:[%s736] sm:$0x1]
        %v1103 = vld [vmem:[%s736 + $0x1] sm:$0x1]
        %v1104 = vld [vmem:[%s755] sm:$0xf]
        %v1105 = vld [vmem:[%s755 + $0x4] sm:$0xf]
        %v1106 = vld [vmem:[%s755 + $0x8] sm:$0xf]
        %v1107 = vld [vmem:[%s755 + $0xc] sm:$0xf]
        %v1108 = vld [vmem:[%s755 + $0x10] sm:$0xf]
        %v1109 = vld [vmem:[%s755 + $0x14] sm:$0xf]
        %v1110 = vld [vmem:[%s755 + $0x18] sm:$0xf]
        %v1111 = vld [vmem:[%s755 + $0x1c] sm:$0xf]
        %v1112 = vld [vmem:[%s755 + $0x20] sm:$0xf]
        %v1113 = vld [vmem:[%s755 + $0x24] sm:$0xf]
        %v1114 = vld [vmem:[%s755 + $0x28] sm:$0xf]
        %v1115 = vld [vmem:[%s755 + $0x2c] sm:$0xf]
        %v1116 = vld [vmem:[%s755 + $0x30] sm:$0xf]
        %v1117 = vld [vmem:[%s755 + $0x34] sm:$0xf]
        %v1118 = vld [vmem:[%s755 + $0x38] sm:$0xf]
        %v1119 = vld [vmem:[%s755 + $0x3c] sm:$0xf]
        %v1120 = vpack.c.bf16 %v1057, %v1053
        %v1122 = vunpack.c.l.b16 %v1120
        %v1123 = vunpack.c.h.b16 %v1120
        %v1124 = vpack.c.b16 %v1122, %v1122
        %v1125 = vpack.c.b16 %v1123, %v1123
        %v1126 = vpack.c.bf16 %v1059, %v1055
        %v1128 = vunpack.c.l.b16 %v1126
        %v1129 = vunpack.c.h.b16 %v1126
        %v1130 = vpack.c.b16 %v1128, %v1128
        %v1131 = vpack.c.b16 %v1129, %v1129
        %v1132 = vpack.c.bf16 %v1099, %v1096
        %v1134 = vunpack.c.l.b16 %v1132
        %v1135 = vunpack.c.h.b16 %v1132
        %v1136 = vpack.c.b16 %v1134, %v1134
        %v1137 = vpack.c.b16 %v1135, %v1135
        %v1140 = vlaneseq
        %v1141 = vshrl.u32 %v1140, 7
        %v1142 = vsub.s32 0, %v1141
        %v1143 = vrot.slane %v1102, %v1142
        %v1144 = vlaneseq
        %v1145 = vshrl.u32 %v1144, 7
        %v1146 = vsub.s32 0, %v1145
        %v1147 = vrot.slane %v1103, %v1146
        %vm1150 = vcmask 261120
        %v1152 = vsel %vm1150, %v1124, 0
        %v1155 = vsel %vm1150, %v1130, 0
        %1157 = vmatprep.subr.bf16.mxu0 0
        %1158 = vmatpush1.bf16.xpose.msra.mxu0 %v1155
        %1159 = vmatprep.subr.bf16.mxu0 0
        %1160 = vmatpush1.bf16.xpose.msra.mxu0 0
        %1161 = vmatprep.subr.bf16.mxu0 0
        %1162 = vmatpush1.bf16.xpose.msra.mxu0 0
        %1163 = vmatprep.subr.bf16.mxu0 0
        %1164 = vmatpush1.bf16.xpose.msra.mxu0 0
        %1165 = vmatprep.subr.bf16.mxu0 0
        %1166 = vmatpush1.bf16.xpose.msra.mxu0 0
        %1167 = vmatprep.subr.bf16.mxu0 0
        %1168 = vmatpush1.bf16.xpose.msra.mxu0 0
        %1169 = vmatprep.subr.bf16.mxu0 0
        %1170 = vmatpush1.bf16.xpose.msra.mxu0 0
        %1171 = vmatprep.subr.bf16.mxu0 0
        %1172 = vmatpush1.bf16.xpose.msra.mxu0 0
        %1173 = vmatprep.subr.bf16.mxu0 0
        %1174 = vmatpush1.bf16.xpose.msra.mxu0 0
        %1175 = vmatprep.subr.bf16.mxu0 0
        %1176 = vmatpush1.bf16.xpose.msra.mxu0 0
        %1177 = vmatprep.subr.bf16.mxu0 0
        %1178 = vmatpush1.bf16.xpose.msra.mxu0 0
        %1179 = vmatprep.subr.bf16.mxu0 0
        %1180 = vmatpush1.bf16.xpose.msra.mxu0 0
        %1181 = vmatprep.subr.bf16.mxu0 0
        %1182 = vmatpush1.bf16.xpose.msra.mxu0 0
        %1183 = vmatprep.subr.bf16.mxu0 0
        %1184 = vmatpush1.bf16.xpose.msra.mxu0 0
        %1185 = vmatprep.subr.bf16.mxu0 0
        %1186 = vmatpush1.bf16.xpose.msra.mxu0 0
        %1187 = vmatprep.subr.bf16.mxu0 0
        %1188 = vmatpush1.bf16.xpose.msra.mxu0 0
        %1189 = vmatprep.mubr.bf16.mxu0 0
        %1190 = vmatmul.mubr.bf16.gmra.mrb[0].mxu0 %v1152
        %v1191 = vpop.f32.mrb[0].mxu0
        %v1192 = vadd.f32 %v1143, %v1191
        %v1193 = vpop.f32.mrb[0].mxu0
        %v1194 = vpop.f32.mrb[0].mxu0
        %v1195 = vpop.f32.mrb[0].mxu0
        %1196 = vdwg.mxu0
        %v1198 = vsel %vm1150, %v1125, 0
        %v1201 = vsel %vm1150, %v1131, 0
        %1203 = vmatprep.subr.bf16.mxu0 0
        %1204 = vmatpush1.bf16.xpose.msra.mxu0 %v1201
        %1205 = vmatprep.subr.bf16.mxu0 0
        %1206 = vmatpush1.bf16.xpose.msra.mxu0 0
        %1207 = vmatprep.subr.bf16.mxu0 0
        %1208 = vmatpush1.bf16.xpose.msra.mxu0 0
        %1209 = vmatprep.subr.bf16.mxu0 0
        %1210 = vmatpush1.bf16.xpose.msra.mxu0 0
        %1211 = vmatprep.subr.bf16.mxu0 0
        %1212 = vmatpush1.bf16.xpose.msra.mxu0 0
        %1213 = vmatprep.subr.bf16.mxu0 0
        %1214 = vmatpush1.bf16.xpose.msra.mxu0 0
        %1215 = vmatprep.subr.bf16.mxu0 0
        %1216 = vmatpush1.bf16.xpose.msra.mxu0 0
        %1217 = vmatprep.subr.bf16.mxu0 0
        %1218 = vmatpush1.bf16.xpose.msra.mxu0 0
        %1219 = vmatprep.subr.bf16.mxu0 0
        %1220 = vmatpush1.bf16.xpose.msra.mxu0 0
        %1221 = vmatprep.subr.bf16.mxu0 0
        %1222 = vmatpush1.bf16.xpose.msra.mxu0 0
        %1223 = vmatprep.subr.bf16.mxu0 0
        %1224 = vmatpush1.bf16.xpose.msra.mxu0 0
        %1225 = vmatprep.subr.bf16.mxu0 0
        %1226 = vmatpush1.bf16.xpose.msra.mxu0 0
        %1227 = vmatprep.subr.bf16.mxu0 0
        %1228 = vmatpush1.bf16.xpose.msra.mxu0 0
        %1229 = vmatprep.subr.bf16.mxu0 0
        %1230 = vmatpush1.bf16.xpose.msra.mxu0 0
        %1231 = vmatprep.subr.bf16.mxu0 0
        %1232 = vmatpush1.bf16.xpose.msra.mxu0 0
        %1233 = vmatprep.subr.bf16.mxu0 0
        %1234 = vmatpush1.bf16.xpose.msra.mxu0 0
        %1235 = vmatprep.mubr.bf16.mxu0 0
        %1236 = vmatmul.mubr.bf16.gmra.mrb[0].mxu0 %v1198
        %v1237 = vpop.f32.mrb[0].mxu0
        %v1238 = vadd.f32 %v1147, %v1237
        %v1239 = vpop.f32.mrb[0].mxu0
        %v1240 = vpop.f32.mrb[0].mxu0
        %v1241 = vpop.f32.mrb[0].mxu0
        %1242 = vdwg.mxu0
        %vm1243 = vcmask 64512
        %v1244 = vsel %vm1243, %v1192, -inf
        %1245 = vmax.xlane.f32.xlu0 %v1244
        %v1246 = vpop.xlane.xlu0 %1245
        %v1247 = vsel %vm1243, %v1238, -inf
        %1248 = vmax.xlane.f32.xlu0 %v1247
        %v1249 = vpop.xlane.xlu0 %1248
        %v1250 = vsub.f32 %v1192, %v1246
        %v1251 = vsub.f32 %v1238, %v1249
        %v1252 = vmul.f32 %v1250, 1.442695
        %v1253 = vpow.pop %v1252
        %v1254 = vmul.f32 %v1251, 1.442695
        %v1255 = vpow.pop %v1254
        %v1256 = vsel %vm1243, %v1253, 0.0
        %1257 = vadd.xlane.f32.xlu0 %v1256
        %v1258 = vpop.xlane.xlu0 %1257
        %v1259 = vsel %vm1243, %v1255, 0.0
        %1260 = vadd.xlane.f32.xlu0 %v1259
        %v1261 = vpop.xlane.xlu0 %1260
        %v1262 = vrcp.pop %v1258
        %v1263 = vrcp.pop %v1261
        %v1264 = vmul.f32 %v1253, %v1262
        %v1265 = vmul.f32 %v1255, %v1263
        %v1266 = vpack.c.bf16 %v1264, %v1264
        %v1267 = vpack.c.bf16 %v1265, %v1265
        %v1269 = vsel %vm1243, %v1266, 0
        %vm1271 = vcmask 1043456
        %v1273 = vsel %vm1271, %v1136, 0
        %1275 = vmatprep.subr.bf16.mxu0 0
        %1276 = vmatpush1.bf16.msra.mxu0 %v1273
        %1277 = vmatprep.subr.bf16.mxu0 0
        %1278 = vmatpush1.bf16.msra.mxu0 0
        %1279 = vmatprep.subr.bf16.mxu0 0
        %1280 = vmatpush1.bf16.msra.mxu0 0
        %1281 = vmatprep.subr.bf16.mxu0 0
        %1282 = vmatpush1.bf16.msra.mxu0 0
        %1283 = vmatprep.subr.bf16.mxu0 0
        %1284 = vmatpush1.bf16.msra.mxu0 0
        %1285 = vmatprep.subr.bf16.mxu0 0
        %1286 = vmatpush1.bf16.msra.mxu0 0
        %1287 = vmatprep.subr.bf16.mxu0 0
        %1288 = vmatpush1.bf16.msra.mxu0 0
        %1289 = vmatprep.subr.bf16.mxu0 0
        %1290 = vmatpush1.bf16.msra.mxu0 0
        %1291 = vmatprep.subr.bf16.mxu0 0
        %1292 = vmatpush1.bf16.msra.mxu0 0
        %1293 = vmatprep.subr.bf16.mxu0 0
        %1294 = vmatpush1.bf16.msra.mxu0 0
        %1295 = vmatprep.subr.bf16.mxu0 0
        %1296 = vmatpush1.bf16.msra.mxu0 0
        %1297 = vmatprep.subr.bf16.mxu0 0
        %1298 = vmatpush1.bf16.msra.mxu0 0
        %1299 = vmatprep.subr.bf16.mxu0 0
        %1300 = vmatpush1.bf16.msra.mxu0 0
        %1301 = vmatprep.subr.bf16.mxu0 0
        %1302 = vmatpush1.bf16.msra.mxu0 0
        %1303 = vmatprep.subr.bf16.mxu0 0
        %1304 = vmatpush1.bf16.msra.mxu0 0
        %1305 = vmatprep.subr.bf16.mxu0 0
        %1306 = vmatpush1.bf16.msra.mxu0 0
        %1307 = vmatprep.mubr.bf16.mxu0 0
        %1308 = vmatmul.mubr.bf16.gmra.mrb[0].mxu0 %v1269
        %v1309 = vpop.f32.mrb[0].mxu0
        %v1310 = vadd.f32 0.0, %v1309
        %v1311 = vpop.f32.mrb[0].mxu0
        %v1312 = vpop.f32.mrb[0].mxu0
        %v1313 = vpop.f32.mrb[0].mxu0
        %1314 = vdwg.mxu0
        %v1316 = vsel %vm1243, %v1267, 0
        %v1319 = vsel %vm1271, %v1137, 0
        %1321 = vmatprep.subr.bf16.mxu0 0
        %1322 = vmatpush1.bf16.msra.mxu0 %v1319
        %1323 = vmatprep.subr.bf16.mxu0 0
        %1324 = vmatpush1.bf16.msra.mxu0 0
        %1325 = vmatprep.subr.bf16.mxu0 0
        %1326 = vmatpush1.bf16.msra.mxu0 0
        %1327 = vmatprep.subr.bf16.mxu0 0
        %1328 = vmatpush1.bf16.msra.mxu0 0
        %1329 = vmatprep.subr.bf16.mxu0 0
        %1330 = vmatpush1.bf16.msra.mxu0 0
        %1331 = vmatprep.subr.bf16.mxu0 0
        %1332 = vmatpush1.bf16.msra.mxu0 0
        %1333 = vmatprep.subr.bf16.mxu0 0
        %1334 = vmatpush1.bf16.msra.mxu0 0
        %1335 = vmatprep.subr.bf16.mxu0 0
        %1336 = vmatpush1.bf16.msra.mxu0 0
        %1337 = vmatprep.subr.bf16.mxu0 0
        %1338 = vmatpush1.bf16.msra.mxu0 0
        %1339 = vmatprep.subr.bf16.mxu0 0
        %1340 = vmatpush1.bf16.msra.mxu0 0
        %1341 = vmatprep.subr.bf16.mxu0 0
        %1342 = vmatpush1.bf16.msra.mxu0 0
        %1343 = vmatprep.subr.bf16.mxu0 0
        %1344 = vmatpush1.bf16.msra.mxu0 0
        %1345 = vmatprep.subr.bf16.mxu0 0
        %1346 = vmatpush1.bf16.msra.mxu0 0
        %1347 = vmatprep.subr.bf16.mxu0 0
        %1348 = vmatpush1.bf16.msra.mxu0 0
        %1349 = vmatprep.subr.bf16.mxu0 0
        %1350 = vmatpush1.bf16.msra.mxu0 0
        %1351 = vmatprep.subr.bf16.mxu0 0
        %1352 = vmatpush1.bf16.msra.mxu0 0
        %1353 = vmatprep.mubr.bf16.mxu0 0
        %1354 = vmatmul.mubr.bf16.gmra.mrb[0].mxu0 %v1316
        %v1355 = vpop.f32.mrb[0].mxu0
        %v1356 = vadd.f32 0.0, %v1355
        %v1357 = vpop.f32.mrb[0].mxu0
        %v1358 = vpop.f32.mrb[0].mxu0
        %v1359 = vpop.f32.mrb[0].mxu0
        %1360 = vdwg.mxu0
        %v1361 = vpack.c.bf16 %v1356, %v1310
        %1362 = vrot.lane.b32.xlu0 %v1124, 96
        %v1363 = vpop.permute.xlu0 %1362
        %1364 = vrot.lane.b32.xlu0 %v1130, 96
        %v1365 = vpop.permute.xlu0 %1364
        %v1367 = vsel %vm1150, %v1363, 0
        %v1370 = vsel %vm1150, %v1365, 0
        %1372 = vmatprep.subr.bf16.mxu0 0
        %1373 = vmatpush1.bf16.xpose.msra.mxu0 %v1370
        %1374 = vmatprep.subr.bf16.mxu0 0
        %1375 = vmatpush1.bf16.xpose.msra.mxu0 0
        %1376 = vmatprep.subr.bf16.mxu0 0
        %1377 = vmatpush1.bf16.xpose.msra.mxu0 0
        %1378 = vmatprep.subr.bf16.mxu0 0
        %1379 = vmatpush1.bf16.xpose.msra.mxu0 0
        %1380 = vmatprep.subr.bf16.mxu0 0
        %1381 = vmatpush1.bf16.xpose.msra.mxu0 0
        %1382 = vmatprep.subr.bf16.mxu0 0
        %1383 = vmatpush1.bf16.xpose.msra.mxu0 0
        %1384 = vmatprep.subr.bf16.mxu0 0
        %1385 = vmatpush1.bf16.xpose.msra.mxu0 0
        %1386 = vmatprep.subr.bf16.mxu0 0
        %1387 = vmatpush1.bf16.xpose.msra.mxu0 0
        %1388 = vmatprep.subr.bf16.mxu0 0
        %1389 = vmatpush1.bf16.xpose.msra.mxu0 0
        %1390 = vmatprep.subr.bf16.mxu0 0
        %1391 = vmatpush1.bf16.xpose.msra.mxu0 0
        %1392 = vmatprep.subr.bf16.mxu0 0
        %1393 = vmatpush1.bf16.xpose.msra.mxu0 0
        %1394 = vmatprep.subr.bf16.mxu0 0
        %1395 = vmatpush1.bf16.xpose.msra.mxu0 0
        %1396 = vmatprep.subr.bf16.mxu0 0
        %1397 = vmatpush1.bf16.xpose.msra.mxu0 0
        %1398 = vmatprep.subr.bf16.mxu0 0
        %1399 = vmatpush1.bf16.xpose.msra.mxu0 0
        %1400 = vmatprep.subr.bf16.mxu0 0
        %1401 = vmatpush1.bf16.xpose.msra.mxu0 0
        %1402 = vmatprep.subr.bf16.mxu0 0
        %1403 = vmatpush1.bf16.xpose.msra.mxu0 0
        %1404 = vmatprep.mubr.bf16.mxu0 0
        %1405 = vmatmul.mubr.bf16.gmra.mrb[0].mxu0 %v1367
        %v1406 = vpop.f32.mrb[0].mxu0
        %v1407 = vadd.f32 %v1143, %v1406
        %v1408 = vpop.f32.mrb[0].mxu0
        %v1409 = vpop.f32.mrb[0].mxu0
        %v1410 = vpop.f32.mrb[0].mxu0
        %1411 = vdwg.mxu0
        %1412 = vrot.lane.b32.xlu0 %v1125, 96
        %v1413 = vpop.permute.xlu0 %1412
        %1414 = vrot.lane.b32.xlu0 %v1131, 96
        %v1415 = vpop.permute.xlu0 %1414
        %v1417 = vsel %vm1150, %v1413, 0
        %v1420 = vsel %vm1150, %v1415, 0
        %1422 = vmatprep.subr.bf16.mxu0 0
        %1423 = vmatpush1.bf16.xpose.msra.mxu0 %v1420
        %1424 = vmatprep.subr.bf16.mxu0 0
        %1425 = vmatpush1.bf16.xpose.msra.mxu0 0
        %1426 = vmatprep.subr.bf16.mxu0 0
        %1427 = vmatpush1.bf16.xpose.msra.mxu0 0
        %1428 = vmatprep.subr.bf16.mxu0 0
        %1429 = vmatpush1.bf16.xpose.msra.mxu0 0
        %1430 = vmatprep.subr.bf16.mxu0 0
        %1431 = vmatpush1.bf16.xpose.msra.mxu0 0
        %1432 = vmatprep.subr.bf16.mxu0 0
        %1433 = vmatpush1.bf16.xpose.msra.mxu0 0
        %1434 = vmatprep.subr.bf16.mxu0 0
        %1435 = vmatpush1.bf16.xpose.msra.mxu0 0
        %1436 = vmatprep.subr.bf16.mxu0 0
        %1437 = vmatpush1.bf16.xpose.msra.mxu0 0
        %1438 = vmatprep.subr.bf16.mxu0 0
        %1439 = vmatpush1.bf16.xpose.msra.mxu0 0
        %1440 = vmatprep.subr.bf16.mxu0 0
        %1441 = vmatpush1.bf16.xpose.msra.mxu0 0
        %1442 = vmatprep.subr.bf16.mxu0 0
        %1443 = vmatpush1.bf16.xpose.msra.mxu0 0
        %1444 = vmatprep.subr.bf16.mxu0 0
        %1445 = vmatpush1.bf16.xpose.msra.mxu0 0
        %1446 = vmatprep.subr.bf16.mxu0 0
        %1447 = vmatpush1.bf16.xpose.msra.mxu0 0
        %1448 = vmatprep.subr.bf16.mxu0 0
        %1449 = vmatpush1.bf16.xpose.msra.mxu0 0
        %1450 = vmatprep.subr.bf16.mxu0 0
        %1451 = vmatpush1.bf16.xpose.msra.mxu0 0
        %1452 = vmatprep.subr.bf16.mxu0 0
        %1453 = vmatpush1.bf16.xpose.msra.mxu0 0
        %1454 = vmatprep.mubr.bf16.mxu0 0
        %1455 = vmatmul.mubr.bf16.gmra.mrb[0].mxu0 %v1417
        %v1456 = vpop.f32.mrb[0].mxu0
        %v1457 = vadd.f32 %v1147, %v1456
        %v1458 = vpop.f32.mrb[0].mxu0
        %v1459 = vpop.f32.mrb[0].mxu0
        %v1460 = vpop.f32.mrb[0].mxu0
        %1461 = vdwg.mxu0
        %v1462 = vsel %vm1243, %v1407, -inf
        %1463 = vmax.xlane.f32.xlu0 %v1462
        %v1464 = vpop.xlane.xlu0 %1463
        %v1465 = vsel %vm1243, %v1457, -inf
        %1466 = vmax.xlane.f32.xlu0 %v1465
        %v1467 = vpop.xlane.xlu0 %1466
        %v1468 = vsub.f32 %v1407, %v1464
        %v1469 = vsub.f32 %v1457, %v1467
        %v1470 = vmul.f32 %v1468, 1.442695
        %v1471 = vpow.pop %v1470
        %v1472 = vmul.f32 %v1469, 1.442695
        %v1473 = vpow.pop %v1472
        %v1474 = vsel %vm1243, %v1471, 0.0
        %1475 = vadd.xlane.f32.xlu0 %v1474
        %v1476 = vpop.xlane.xlu0 %1475
        %v1477 = vsel %vm1243, %v1473, 0.0
        %1478 = vadd.xlane.f32.xlu0 %v1477
        %v1479 = vpop.xlane.xlu0 %1478
        %v1480 = vrcp.pop %v1476
        %v1481 = vrcp.pop %v1479
        %v1482 = vmul.f32 %v1471, %v1480
        %v1483 = vmul.f32 %v1473, %v1481
        %v1484 = vpack.c.bf16 %v1482, %v1482
        %v1485 = vpack.c.bf16 %v1483, %v1483
        %1486 = vrot.lane.b32.xlu0 %v1136, 96
        %v1487 = vpop.permute.xlu0 %1486
        %v1489 = vsel %vm1243, %v1484, 0
        %v1492 = vsel %vm1271, %v1487, 0
        %1494 = vmatprep.subr.bf16.mxu0 0
        %1495 = vmatpush1.bf16.msra.mxu0 %v1492
        %1496 = vmatprep.subr.bf16.mxu0 0
        %1497 = vmatpush1.bf16.msra.mxu0 0
        %1498 = vmatprep.subr.bf16.mxu0 0
        %1499 = vmatpush1.bf16.msra.mxu0 0
        %1500 = vmatprep.subr.bf16.mxu0 0
        %1501 = vmatpush1.bf16.msra.mxu0 0
        %1502 = vmatprep.subr.bf16.mxu0 0
        %1503 = vmatpush1.bf16.msra.mxu0 0
        %1504 = vmatprep.subr.bf16.mxu0 0
        %1505 = vmatpush1.bf16.msra.mxu0 0
        %1506 = vmatprep.subr.bf16.mxu0 0
        %1507 = vmatpush1.bf16.msra.mxu0 0
        %1508 = vmatprep.subr.bf16.mxu0 0
        %1509 = vmatpush1.bf16.msra.mxu0 0
        %1510 = vmatprep.subr.bf16.mxu0 0
        %1511 = vmatpush1.bf16.msra.mxu0 0
        %1512 = vmatprep.subr.bf16.mxu0 0
        %1513 = vmatpush1.bf16.msra.mxu0 0
        %1514 = vmatprep.subr.bf16.mxu0 0
        %1515 = vmatpush1.bf16.msra.mxu0 0
        %1516 = vmatprep.subr.bf16.mxu0 0
        %1517 = vmatpush1.bf16.msra.mxu0 0
        %1518 = vmatprep.subr.bf16.mxu0 0
        %1519 = vmatpush1.bf16.msra.mxu0 0
        %1520 = vmatprep.subr.bf16.mxu0 0
        %1521 = vmatpush1.bf16.msra.mxu0 0
        %1522 = vmatprep.subr.bf16.mxu0 0
        %1523 = vmatpush1.bf16.msra.mxu0 0
        %1524 = vmatprep.subr.bf16.mxu0 0
        %1525 = vmatpush1.bf16.msra.mxu0 0
        %1526 = vmatprep.mubr.bf16.mxu0 0
        %1527 = vmatmul.mubr.bf16.gmra.mrb[0].mxu0 %v1489
        %v1528 = vpop.f32.mrb[0].mxu0
        %v1529 = vadd.f32 0.0, %v1528
        %v1530 = vpop.f32.mrb[0].mxu0
        %v1531 = vpop.f32.mrb[0].mxu0
        %v1532 = vpop.f32.mrb[0].mxu0
        %1533 = vdwg.mxu0
        %1534 = vrot.lane.b32.xlu0 %v1137, 96
        %v1535 = vpop.permute.xlu0 %1534
        %v1537 = vsel %vm1243, %v1485, 0
        %v1540 = vsel %vm1271, %v1535, 0
        %1542 = vmatprep.subr.bf16.mxu0 0
        %1543 = vmatpush1.bf16.msra.mxu0 %v1540
        %1544 = vmatprep.subr.bf16.mxu0 0
        %1545 = vmatpush1.bf16.msra.mxu0 0
        %1546 = vmatprep.subr.bf16.mxu0 0
        %1547 = vmatpush1.bf16.msra.mxu0 0
        %1548 = vmatprep.subr.bf16.mxu0 0
        %1549 = vmatpush1.bf16.msra.mxu0 0
        %1550 = vmatprep.subr.bf16.mxu0 0
        %1551 = vmatpush1.bf16.msra.mxu0 0
        %1552 = vmatprep.subr.bf16.mxu0 0
        %1553 = vmatpush1.bf16.msra.mxu0 0
        %1554 = vmatprep.subr.bf16.mxu0 0
        %1555 = vmatpush1.bf16.msra.mxu0 0
        %1556 = vmatprep.subr.bf16.mxu0 0
        %1557 = vmatpush1.bf16.msra.mxu0 0
        %1558 = vmatprep.subr.bf16.mxu0 0
        %1559 = vmatpush1.bf16.msra.mxu0 0
        %1560 = vmatprep.subr.bf16.mxu0 0
        %1561 = vmatpush1.bf16.msra.mxu0 0
        %1562 = vmatprep.subr.bf16.mxu0 0
        %1563 = vmatpush1.bf16.msra.mxu0 0
        %1564 = vmatprep.subr.bf16.mxu0 0
        %1565 = vmatpush1.bf16.msra.mxu0 0
        %1566 = vmatprep.subr.bf16.mxu0 0
        %1567 = vmatpush1.bf16.msra.mxu0 0
        %1568 = vmatprep.subr.bf16.mxu0 0
        %1569 = vmatpush1.bf16.msra.mxu0 0
        %1570 = vmatprep.subr.bf16.mxu0 0
        %1571 = vmatpush1.bf16.msra.mxu0 0
        %1572 = vmatprep.subr.bf16.mxu0 0
        %1573 = vmatpush1.bf16.msra.mxu0 0
        %1574 = vmatprep.mubr.bf16.mxu0 0
        %1575 = vmatmul.mubr.bf16.gmra.mrb[0].mxu0 %v1537
        %v1576 = vpop.f32.mrb[0].mxu0
        %v1577 = vadd.f32 0.0, %v1576
        %v1578 = vpop.f32.mrb[0].mxu0
        %v1579 = vpop.f32.mrb[0].mxu0
        %v1580 = vpop.f32.mrb[0].mxu0
        %1581 = vdwg.mxu0
        %v1582 = vpack.c.bf16 %v1577, %v1529
        %v1587 = vunpack.c.l.b16 %v1108
        %v1588 = vunpack.c.l.b16 %v1109
        %v1589 = vunpack.c.l.b16 %v1110
        %v1590 = vunpack.c.l.b16 %v1111
        %v1591 = vpack.c.b16 %v1588, %v1587
        %v1592 = vpack.c.b16 %v1590, %v1589
        %v1596 = vsel %vm1150, %v1582, 0
        %1598 = vmatprep.subr.bf16.mxu0 0
        %1599 = vmatpush1.bf16.msra.mxu0 %v1591
        %1600 = vmatprep.subr.bf16.mxu0 0
        %1601 = vmatpush1.bf16.msra.mxu0 %v1592
        %1602 = vmatprep.subr.bf16.mxu0 0
        %1603 = vmatpush1.bf16.msra.mxu0 0
        %1604 = vmatprep.subr.bf16.mxu0 0
        %1605 = vmatpush1.bf16.msra.mxu0 0
        %1606 = vmatprep.subr.bf16.mxu0 0
        %1607 = vmatpush1.bf16.msra.mxu0 0
        %1608 = vmatprep.subr.bf16.mxu0 0
        %1609 = vmatpush1.bf16.msra.mxu0 0
        %1610 = vmatprep.subr.bf16.mxu0 0
        %1611 = vmatpush1.bf16.msra.mxu0 0
        %1612 = vmatprep.subr.bf16.mxu0 0
        %1613 = vmatpush1.bf16.msra.mxu0 0
        %1614 = vmatprep.subr.bf16.mxu0 0
        %1615 = vmatpush1.bf16.msra.mxu0 0
        %1616 = vmatprep.subr.bf16.mxu0 0
        %1617 = vmatpush1.bf16.msra.mxu0 0
        %1618 = vmatprep.subr.bf16.mxu0 0
        %1619 = vmatpush1.bf16.msra.mxu0 0
        %1620 = vmatprep.subr.bf16.mxu0 0
        %1621 = vmatpush1.bf16.msra.mxu0 0
        %1622 = vmatprep.subr.bf16.mxu0 0
        %1623 = vmatpush1.bf16.msra.mxu0 0
        %1624 = vmatprep.subr.bf16.mxu0 0
        %1625 = vmatpush1.bf16.msra.mxu0 0
        %1626 = vmatprep.subr.bf16.mxu0 0
        %1627 = vmatpush1.bf16.msra.mxu0 0
        %1628 = vmatprep.subr.bf16.mxu0 0
        %1629 = vmatpush1.bf16.msra.mxu0 0
        %1630 = vmatprep.mubr.bf16.mxu0 0
        %1631 = vmatmul.mubr.bf16.gmra.mrb[0].mxu0 %v1596
        %v1632 = vpop.f32.mrb[0].mxu0
        %v1633 = vadd.f32 0.0, %v1632
        %v1634 = vpop.f32.mrb[0].mxu0
        %v1635 = vpop.f32.mrb[0].mxu0
        %v1636 = vadd.f32 0.0, %v1635
        %v1637 = vpop.f32.mrb[0].mxu0
        %1638 = vdwg.mxu0
        %v1643 = vunpack.c.l.b16 %v1104
        %v1644 = vunpack.c.l.b16 %v1105
        %v1645 = vunpack.c.l.b16 %v1106
        %v1646 = vunpack.c.l.b16 %v1107
        %v1647 = vpack.c.b16 %v1644, %v1643
        %v1648 = vpack.c.b16 %v1646, %v1645
        %v1652 = vsel %vm1150, %v1361, 0
        %1654 = vmatprep.subr.bf16.mxu0 0
        %1655 = vmatpush1.bf16.msra.mxu0 %v1647
        %1656 = vmatprep.subr.bf16.mxu0 0
        %1657 = vmatpush1.bf16.msra.mxu0 %v1648
        %1658 = vmatprep.subr.bf16.mxu0 0
        %1659 = vmatpush1.bf16.msra.mxu0 0
        %1660 = vmatprep.subr.bf16.mxu0 0
        %1661 = vmatpush1.bf16.msra.mxu0 0
        %1662 = vmatprep.subr.bf16.mxu0 0
        %1663 = vmatpush1.bf16.msra.mxu0 0
        %1664 = vmatprep.subr.bf16.mxu0 0
        %1665 = vmatpush1.bf16.msra.mxu0 0
        %1666 = vmatprep.subr.bf16.mxu0 0
        %1667 = vmatpush1.bf16.msra.mxu0 0
        %1668 = vmatprep.subr.bf16.mxu0 0
        %1669 = vmatpush1.bf16.msra.mxu0 0
        %1670 = vmatprep.subr.bf16.mxu0 0
        %1671 = vmatpush1.bf16.msra.mxu0 0
        %1672 = vmatprep.subr.bf16.mxu0 0
        %1673 = vmatpush1.bf16.msra.mxu0 0
        %1674 = vmatprep.subr.bf16.mxu0 0
        %1675 = vmatpush1.bf16.msra.mxu0 0
        %1676 = vmatprep.subr.bf16.mxu0 0
        %1677 = vmatpush1.bf16.msra.mxu0 0
        %1678 = vmatprep.subr.bf16.mxu0 0
        %1679 = vmatpush1.bf16.msra.mxu0 0
        %1680 = vmatprep.subr.bf16.mxu0 0
        %1681 = vmatpush1.bf16.msra.mxu0 0
        %1682 = vmatprep.subr.bf16.mxu0 0
        %1683 = vmatpush1.bf16.msra.mxu0 0
        %1684 = vmatprep.subr.bf16.mxu0 0
        %1685 = vmatpush1.bf16.msra.mxu0 0
        %1686 = vmatprep.mubr.bf16.mxu0 0
        %1687 = vmatmul.mubr.bf16.gmra.mrb[0].mxu0 %v1652
        %v1688 = vpop.f32.mrb[0].mxu0
        %v1689 = vadd.f32 %v1633, %v1688
        %v1690 = vpop.f32.mrb[0].mxu0
        %v1691 = vpop.f32.mrb[0].mxu0
        %v1692 = vadd.f32 %v1636, %v1691
        %v1693 = vpop.f32.mrb[0].mxu0
        %1694 = vdwg.mxu0
        %1695 = vrot.lane.b32.xlu0 %v1124, 64
        %v1696 = vpop.permute.xlu0 %1695
        %1697 = vrot.lane.b32.xlu0 %v1130, 64
        %v1698 = vpop.permute.xlu0 %1697
        %v1700 = vsel %vm1150, %v1696, 0
        %v1703 = vsel %vm1150, %v1698, 0
        %1705 = vmatprep.subr.bf16.mxu0 0
        %1706 = vmatpush1.bf16.xpose.msra.mxu0 %v1703
        %1707 = vmatprep.subr.bf16.mxu0 0
        %1708 = vmatpush1.bf16.xpose.msra.mxu0 0
        %1709 = vmatprep.subr.bf16.mxu0 0
        %1710 = vmatpush1.bf16.xpose.msra.mxu0 0
        %1711 = vmatprep.subr.bf16.mxu0 0
        %1712 = vmatpush1.bf16.xpose.msra.mxu0 0
        %1713 = vmatprep.subr.bf16.mxu0 0
        %1714 = vmatpush1.bf16.xpose.msra.mxu0 0
        %1715 = vmatprep.subr.bf16.mxu0 0
        %1716 = vmatpush1.bf16.xpose.msra.mxu0 0
        %1717 = vmatprep.subr.bf16.mxu0 0
        %1718 = vmatpush1.bf16.xpose.msra.mxu0 0
        %1719 = vmatprep.subr.bf16.mxu0 0
        %1720 = vmatpush1.bf16.xpose.msra.mxu0 0
        %1721 = vmatprep.subr.bf16.mxu0 0
        %1722 = vmatpush1.bf16.xpose.msra.mxu0 0
        %1723 = vmatprep.subr.bf16.mxu0 0
        %1724 = vmatpush1.bf16.xpose.msra.mxu0 0
        %1725 = vmatprep.subr.bf16.mxu0 0
        %1726 = vmatpush1.bf16.xpose.msra.mxu0 0
        %1727 = vmatprep.subr.bf16.mxu0 0
        %1728 = vmatpush1.bf16.xpose.msra.mxu0 0
        %1729 = vmatprep.subr.bf16.mxu0 0
        %1730 = vmatpush1.bf16.xpose.msra.mxu0 0
        %1731 = vmatprep.subr.bf16.mxu0 0
        %1732 = vmatpush1.bf16.xpose.msra.mxu0 0
        %1733 = vmatprep.subr.bf16.mxu0 0
        %1734 = vmatpush1.bf16.xpose.msra.mxu0 0
        %1735 = vmatprep.subr.bf16.mxu0 0
        %1736 = vmatpush1.bf16.xpose.msra.mxu0 0
        %1737 = vmatprep.mubr.bf16.mxu0 0
        %1738 = vmatmul.mubr.bf16.gmra.mrb[0].mxu0 %v1700
        %v1739 = vpop.f32.mrb[0].mxu0
        %v1740 = vadd.f32 %v1143, %v1739
        %v1741 = vpop.f32.mrb[0].mxu0
        %v1742 = vpop.f32.mrb[0].mxu0
        %v1743 = vpop.f32.mrb[0].mxu0
        %1744 = vdwg.mxu0
        %1745 = vrot.lane.b32.xlu0 %v1125, 64
        %v1746 = vpop.permute.xlu0 %1745
        %1747 = vrot.lane.b32.xlu0 %v1131, 64
        %v1748 = vpop.permute.xlu0 %1747
        %v1750 = vsel %vm1150, %v1746, 0
        %v1753 = vsel %vm1150, %v1748, 0
        %1755 = vmatprep.subr.bf16.mxu0 0
        %1756 = vmatpush1.bf16.xpose.msra.mxu0 %v1753
        %1757 = vmatprep.subr.bf16.mxu0 0
        %1758 = vmatpush1.bf16.xpose.msra.mxu0 0
        %1759 = vmatprep.subr.bf16.mxu0 0
        %1760 = vmatpush1.bf16.xpose.msra.mxu0 0
        %1761 = vmatprep.subr.bf16.mxu0 0
        %1762 = vmatpush1.bf16.xpose.msra.mxu0 0
        %1763 = vmatprep.subr.bf16.mxu0 0
        %1764 = vmatpush1.bf16.xpose.msra.mxu0 0
        %1765 = vmatprep.subr.bf16.mxu0 0
        %1766 = vmatpush1.bf16.xpose.msra.mxu0 0
        %1767 = vmatprep.subr.bf16.mxu0 0
        %1768 = vmatpush1.bf16.xpose.msra.mxu0 0
        %1769 = vmatprep.subr.bf16.mxu0 0
        %1770 = vmatpush1.bf16.xpose.msra.mxu0 0
        %1771 = vmatprep.subr.bf16.mxu0 0
        %1772 = vmatpush1.bf16.xpose.msra.mxu0 0
        %1773 = vmatprep.subr.bf16.mxu0 0
        %1774 = vmatpush1.bf16.xpose.msra.mxu0 0
        %1775 = vmatprep.subr.bf16.mxu0 0
        %1776 = vmatpush1.bf16.xpose.msra.mxu0 0
        %1777 = vmatprep.subr.bf16.mxu0 0
        %1778 = vmatpush1.bf16.xpose.msra.mxu0 0
        %1779 = vmatprep.subr.bf16.mxu0 0
        %1780 = vmatpush1.bf16.xpose.msra.mxu0 0
        %1781 = vmatprep.subr.bf16.mxu0 0
        %1782 = vmatpush1.bf16.xpose.msra.mxu0 0
        %1783 = vmatprep.subr.bf16.mxu0 0
        %1784 = vmatpush1.bf16.xpose.msra.mxu0 0
        %1785 = vmatprep.subr.bf16.mxu0 0
        %1786 = vmatpush1.bf16.xpose.msra.mxu0 0
        %1787 = vmatprep.mubr.bf16.mxu0 0
        %1788 = vmatmul.mubr.bf16.gmra.mrb[0].mxu0 %v1750
        %v1789 = vpop.f32.mrb[0].mxu0
        %v1790 = vadd.f32 %v1147, %v1789
        %v1791 = vpop.f32.mrb[0].mxu0
        %v1792 = vpop.f32.mrb[0].mxu0
        %v1793 = vpop.f32.mrb[0].mxu0
        %1794 = vdwg.mxu0
        %v1795 = vsel %vm1243, %v1740, -inf
        %1796 = vmax.xlane.f32.xlu0 %v1795
        %v1797 = vpop.xlane.xlu0 %1796
        %v1798 = vsel %vm1243, %v1790, -inf
        %1799 = vmax.xlane.f32.xlu0 %v1798
        %v1800 = vpop.xlane.xlu0 %1799
        %v1801 = vsub.f32 %v1740, %v1797
        %v1802 = vsub.f32 %v1790, %v1800
        %v1803 = vmul.f32 %v1801, 1.442695
        %v1804 = vpow.pop %v1803
        %v1805 = vmul.f32 %v1802, 1.442695
        %v1806 = vpow.pop %v1805
        %v1807 = vsel %vm1243, %v1804, 0.0
        %1808 = vadd.xlane.f32.xlu0 %v1807
        %v1809 = vpop.xlane.xlu0 %1808
        %v1810 = vsel %vm1243, %v1806, 0.0
        %1811 = vadd.xlane.f32.xlu0 %v1810
        %v1812 = vpop.xlane.xlu0 %1811
        %v1813 = vrcp.pop %v1809
        %v1814 = vrcp.pop %v1812
        %v1815 = vmul.f32 %v1804, %v1813
        %v1816 = vmul.f32 %v1806, %v1814
        %v1817 = vpack.c.bf16 %v1815, %v1815
        %v1818 = vpack.c.bf16 %v1816, %v1816
        %1819 = vrot.lane.b32.xlu0 %v1136, 64
        %v1820 = vpop.permute.xlu0 %1819
        %v1822 = vsel %vm1243, %v1817, 0
        %v1825 = vsel %vm1271, %v1820, 0
        %1827 = vmatprep.subr.bf16.mxu0 0
        %1828 = vmatpush1.bf16.msra.mxu0 %v1825
        %1829 = vmatprep.subr.bf16.mxu0 0
        %1830 = vmatpush1.bf16.msra.mxu0 0
        %1831 = vmatprep.subr.bf16.mxu0 0
        %1832 = vmatpush1.bf16.msra.mxu0 0
        %1833 = vmatprep.subr.bf16.mxu0 0
        %1834 = vmatpush1.bf16.msra.mxu0 0
        %1835 = vmatprep.subr.bf16.mxu0 0
        %1836 = vmatpush1.bf16.msra.mxu0 0
        %1837 = vmatprep.subr.bf16.mxu0 0
        %1838 = vmatpush1.bf16.msra.mxu0 0
        %1839 = vmatprep.subr.bf16.mxu0 0
        %1840 = vmatpush1.bf16.msra.mxu0 0
        %1841 = vmatprep.subr.bf16.mxu0 0
        %1842 = vmatpush1.bf16.msra.mxu0 0
        %1843 = vmatprep.subr.bf16.mxu0 0
        %1844 = vmatpush1.bf16.msra.mxu0 0
        %1845 = vmatprep.subr.bf16.mxu0 0
        %1846 = vmatpush1.bf16.msra.mxu0 0
        %1847 = vmatprep.subr.bf16.mxu0 0
        %1848 = vmatpush1.bf16.msra.mxu0 0
        %1849 = vmatprep.subr.bf16.mxu0 0
        %1850 = vmatpush1.bf16.msra.mxu0 0
        %1851 = vmatprep.subr.bf16.mxu0 0
        %1852 = vmatpush1.bf16.msra.mxu0 0
        %1853 = vmatprep.subr.bf16.mxu0 0
        %1854 = vmatpush1.bf16.msra.mxu0 0
        %1855 = vmatprep.subr.bf16.mxu0 0
        %1856 = vmatpush1.bf16.msra.mxu0 0
        %1857 = vmatprep.subr.bf16.mxu0 0
        %1858 = vmatpush1.bf16.msra.mxu0 0
        %1859 = vmatprep.mubr.bf16.mxu0 0
        %1860 = vmatmul.mubr.bf16.gmra.mrb[0].mxu0 %v1822
        %v1861 = vpop.f32.mrb[0].mxu0
        %v1862 = vadd.f32 0.0, %v1861
        %v1863 = vpop.f32.mrb[0].mxu0
        %v1864 = vpop.f32.mrb[0].mxu0
        %v1865 = vpop.f32.mrb[0].mxu0
        %1866 = vdwg.mxu0
        %1867 = vrot.lane.b32.xlu0 %v1137, 64
        %v1868 = vpop.permute.xlu0 %1867
        %v1870 = vsel %vm1243, %v1818, 0
        %v1873 = vsel %vm1271, %v1868, 0
        %1875 = vmatprep.subr.bf16.mxu0 0
        %1876 = vmatpush1.bf16.msra.mxu0 %v1873
        %1877 = vmatprep.subr.bf16.mxu0 0
        %1878 = vmatpush1.bf16.msra.mxu0 0
        %1879 = vmatprep.subr.bf16.mxu0 0
        %1880 = vmatpush1.bf16.msra.mxu0 0
        %1881 = vmatprep.subr.bf16.mxu0 0
        %1882 = vmatpush1.bf16.msra.mxu0 0
        %1883 = vmatprep.subr.bf16.mxu0 0
        %1884 = vmatpush1.bf16.msra.mxu0 0
        %1885 = vmatprep.subr.bf16.mxu0 0
        %1886 = vmatpush1.bf16.msra.mxu0 0
        %1887 = vmatprep.subr.bf16.mxu0 0
        %1888 = vmatpush1.bf16.msra.mxu0 0
        %1889 = vmatprep.subr.bf16.mxu0 0
        %1890 = vmatpush1.bf16.msra.mxu0 0
        %1891 = vmatprep.subr.bf16.mxu0 0
        %1892 = vmatpush1.bf16.msra.mxu0 0
        %1893 = vmatprep.subr.bf16.mxu0 0
        %1894 = vmatpush1.bf16.msra.mxu0 0
        %1895 = vmatprep.subr.bf16.mxu0 0
        %1896 = vmatpush1.bf16.msra.mxu0 0
        %1897 = vmatprep.subr.bf16.mxu0 0
        %1898 = vmatpush1.bf16.msra.mxu0 0
        %1899 = vmatprep.subr.bf16.mxu0 0
        %1900 = vmatpush1.bf16.msra.mxu0 0
        %1901 = vmatprep.subr.bf16.mxu0 0
        %1902 = vmatpush1.bf16.msra.mxu0 0
        %1903 = vmatprep.subr.bf16.mxu0 0
        %1904 = vmatpush1.bf16.msra.mxu0 0
        %1905 = vmatprep.subr.bf16.mxu0 0
        %1906 = vmatpush1.bf16.msra.mxu0 0
        %1907 = vmatprep.mubr.bf16.mxu0 0
        %1908 = vmatmul.mubr.bf16.gmra.mrb[0].mxu0 %v1870
        %v1909 = vpop.f32.mrb[0].mxu0
        %v1910 = vadd.f32 0.0, %v1909
        %v1911 = vpop.f32.mrb[0].mxu0
        %v1912 = vpop.f32.mrb[0].mxu0
        %v1913 = vpop.f32.mrb[0].mxu0
        %1914 = vdwg.mxu0
        %v1915 = vpack.c.bf16 %v1910, %v1862
        %v1920 = vunpack.c.l.b16 %v1112
        %v1921 = vunpack.c.l.b16 %v1113
        %v1922 = vunpack.c.l.b16 %v1114
        %v1923 = vunpack.c.l.b16 %v1115
        %v1924 = vpack.c.b16 %v1921, %v1920
        %v1925 = vpack.c.b16 %v1923, %v1922
        %v1929 = vsel %vm1150, %v1915, 0
        %1931 = vmatprep.subr.bf16.mxu0 0
        %1932 = vmatpush1.bf16.msra.mxu0 %v1924
        %1933 = vmatprep.subr.bf16.mxu0 0
        %1934 = vmatpush1.bf16.msra.mxu0 %v1925
        %1935 = vmatprep.subr.bf16.mxu0 0
        %1936 = vmatpush1.bf16.msra.mxu0 0
        %1937 = vmatprep.subr.bf16.mxu0 0
        %1938 = vmatpush1.bf16.msra.mxu0 0
        %1939 = vmatprep.subr.bf16.mxu0 0
        %1940 = vmatpush1.bf16.msra.mxu0 0
        %1941 = vmatprep.subr.bf16.mxu0 0
        %1942 = vmatpush1.bf16.msra.mxu0 0
        %1943 = vmatprep.subr.bf16.mxu0 0
        %1944 = vmatpush1.bf16.msra.mxu0 0
        %1945 = vmatprep.subr.bf16.mxu0 0
        %1946 = vmatpush1.bf16.msra.mxu0 0
        %1947 = vmatprep.subr.bf16.mxu0 0
        %1948 = vmatpush1.bf16.msra.mxu0 0
        %1949 = vmatprep.subr.bf16.mxu0 0
        %1950 = vmatpush1.bf16.msra.mxu0 0
        %1951 = vmatprep.subr.bf16.mxu0 0
        %1952 = vmatpush1.bf16.msra.mxu0 0
        %1953 = vmatprep.subr.bf16.mxu0 0
        %1954 = vmatpush1.bf16.msra.mxu0 0
        %1955 = vmatprep.subr.bf16.mxu0 0
        %1956 = vmatpush1.bf16.msra.mxu0 0
        %1957 = vmatprep.subr.bf16.mxu0 0
        %1958 = vmatpush1.bf16.msra.mxu0 0
        %1959 = vmatprep.subr.bf16.mxu0 0
        %1960 = vmatpush1.bf16.msra.mxu0 0
        %1961 = vmatprep.subr.bf16.mxu0 0
        %1962 = vmatpush1.bf16.msra.mxu0 0
        %1963 = vmatprep.mubr.bf16.mxu0 0
        %1964 = vmatmul.mubr.bf16.gmra.mrb[0].mxu0 %v1929
        %v1965 = vpop.f32.mrb[0].mxu0
        %v1966 = vadd.f32 0.0, %v1965
        %v1967 = vpop.f32.mrb[0].mxu0
        %v1968 = vpop.f32.mrb[0].mxu0
        %v1969 = vadd.f32 0.0, %v1968
        %v1970 = vpop.f32.mrb[0].mxu0
        %1971 = vdwg.mxu0
        %v1972 = vadd.f32 %v1689, %v1966
        %v1973 = vadd.f32 %v1692, %v1969
        %1974 = vrot.lane.b32.xlu0 %v1124, 32
        %v1975 = vpop.permute.xlu0 %1974
        %1976 = vrot.lane.b32.xlu0 %v1130, 32
        %v1977 = vpop.permute.xlu0 %1976
        %v1979 = vsel %vm1150, %v1975, 0
        %v1982 = vsel %vm1150, %v1977, 0
        %1984 = vmatprep.subr.bf16.mxu0 0
        %1985 = vmatpush1.bf16.xpose.msra.mxu0 %v1982
        %1986 = vmatprep.subr.bf16.mxu0 0
        %1987 = vmatpush1.bf16.xpose.msra.mxu0 0
        %1988 = vmatprep.subr.bf16.mxu0 0
        %1989 = vmatpush1.bf16.xpose.msra.mxu0 0
        %1990 = vmatprep.subr.bf16.mxu0 0
        %1991 = vmatpush1.bf16.xpose.msra.mxu0 0
        %1992 = vmatprep.subr.bf16.mxu0 0
        %1993 = vmatpush1.bf16.xpose.msra.mxu0 0
        %1994 = vmatprep.subr.bf16.mxu0 0
        %1995 = vmatpush1.bf16.xpose.msra.mxu0 0
        %1996 = vmatprep.subr.bf16.mxu0 0
        %1997 = vmatpush1.bf16.xpose.msra.mxu0 0
        %1998 = vmatprep.subr.bf16.mxu0 0
        %1999 = vmatpush1.bf16.xpose.msra.mxu0 0
        %2000 = vmatprep.subr.bf16.mxu0 0
        %2001 = vmatpush1.bf16.xpose.msra.mxu0 0
        %2002 = vmatprep.subr.bf16.mxu0 0
        %2003 = vmatpush1.bf16.xpose.msra.mxu0 0
        %2004 = vmatprep.subr.bf16.mxu0 0
        %2005 = vmatpush1.bf16.xpose.msra.mxu0 0
        %2006 = vmatprep.subr.bf16.mxu0 0
        %2007 = vmatpush1.bf16.xpose.msra.mxu0 0
        %2008 = vmatprep.subr.bf16.mxu0 0
        %2009 = vmatpush1.bf16.xpose.msra.mxu0 0
        %2010 = vmatprep.subr.bf16.mxu0 0
        %2011 = vmatpush1.bf16.xpose.msra.mxu0 0
        %2012 = vmatprep.subr.bf16.mxu0 0
        %2013 = vmatpush1.bf16.xpose.msra.mxu0 0
        %2014 = vmatprep.subr.bf16.mxu0 0
        %2015 = vmatpush1.bf16.xpose.msra.mxu0 0
        %2016 = vmatprep.mubr.bf16.mxu0 0
        %2017 = vmatmul.mubr.bf16.gmra.mrb[0].mxu0 %v1979
        %v2018 = vpop.f32.mrb[0].mxu0
        %v2019 = vadd.f32 %v1143, %v2018
        %v2020 = vpop.f32.mrb[0].mxu0
        %v2021 = vpop.f32.mrb[0].mxu0
        %v2022 = vpop.f32.mrb[0].mxu0
        %2023 = vdwg.mxu0
        %2024 = vrot.lane.b32.xlu0 %v1125, 32
        %v2025 = vpop.permute.xlu0 %2024
        %2026 = vrot.lane.b32.xlu0 %v1131, 32
        %v2027 = vpop.permute.xlu0 %2026
        %v2029 = vsel %vm1150, %v2025, 0
        %v2032 = vsel %vm1150, %v2027, 0
        %2034 = vmatprep.subr.bf16.mxu0 0
        %2035 = vmatpush1.bf16.xpose.msra.mxu0 %v2032
        %2036 = vmatprep.subr.bf16.mxu0 0
        %2037 = vmatpush1.bf16.xpose.msra.mxu0 0
        %2038 = vmatprep.subr.bf16.mxu0 0
        %2039 = vmatpush1.bf16.xpose.msra.mxu0 0
        %2040 = vmatprep.subr.bf16.mxu0 0
        %2041 = vmatpush1.bf16.xpose.msra.mxu0 0
        %2042 = vmatprep.subr.bf16.mxu0 0
        %2043 = vmatpush1.bf16.xpose.msra.mxu0 0
        %2044 = vmatprep.subr.bf16.mxu0 0
        %2045 = vmatpush1.bf16.xpose.msra.mxu0 0
        %2046 = vmatprep.subr.bf16.mxu0 0
        %2047 = vmatpush1.bf16.xpose.msra.mxu0 0
        %2048 = vmatprep.subr.bf16.mxu0 0
        %2049 = vmatpush1.bf16.xpose.msra.mxu0 0
        %2050 = vmatprep.subr.bf16.mxu0 0
        %2051 = vmatpush1.bf16.xpose.msra.mxu0 0
        %2052 = vmatprep.subr.bf16.mxu0 0
        %2053 = vmatpush1.bf16.xpose.msra.mxu0 0
        %2054 = vmatprep.subr.bf16.mxu0 0
        %2055 = vmatpush1.bf16.xpose.msra.mxu0 0
        %2056 = vmatprep.subr.bf16.mxu0 0
        %2057 = vmatpush1.bf16.xpose.msra.mxu0 0
        %2058 = vmatprep.subr.bf16.mxu0 0
        %2059 = vmatpush1.bf16.xpose.msra.mxu0 0
        %2060 = vmatprep.subr.bf16.mxu0 0
        %2061 = vmatpush1.bf16.xpose.msra.mxu0 0
        %2062 = vmatprep.subr.bf16.mxu0 0
        %2063 = vmatpush1.bf16.xpose.msra.mxu0 0
        %2064 = vmatprep.subr.bf16.mxu0 0
        %2065 = vmatpush1.bf16.xpose.msra.mxu0 0
        %2066 = vmatprep.mubr.bf16.mxu0 0
        %2067 = vmatmul.mubr.bf16.gmra.mrb[0].mxu0 %v2029
        %v2068 = vpop.f32.mrb[0].mxu0
        %v2069 = vadd.f32 %v1147, %v2068
        %v2070 = vpop.f32.mrb[0].mxu0
        %v2071 = vpop.f32.mrb[0].mxu0
        %v2072 = vpop.f32.mrb[0].mxu0
        %2073 = vdwg.mxu0
        %v2074 = vsel %vm1243, %v2019, -inf
        %2075 = vmax.xlane.f32.xlu0 %v2074
        %v2076 = vpop.xlane.xlu0 %2075
        %v2077 = vsel %vm1243, %v2069, -inf
        %2078 = vmax.xlane.f32.xlu0 %v2077
        %v2079 = vpop.xlane.xlu0 %2078
        %v2080 = vsub.f32 %v2019, %v2076
        %v2081 = vsub.f32 %v2069, %v2079
        %v2082 = vmul.f32 %v2080, 1.442695
        %v2083 = vpow.pop %v2082
        %v2084 = vmul.f32 %v2081, 1.442695
        %v2085 = vpow.pop %v2084
        %v2086 = vsel %vm1243, %v2083, 0.0
        %2087 = vadd.xlane.f32.xlu0 %v2086
        %v2088 = vpop.xlane.xlu0 %2087
        %v2089 = vsel %vm1243, %v2085, 0.0
        %2090 = vadd.xlane.f32.xlu0 %v2089
        %v2091 = vpop.xlane.xlu0 %2090
        %v2092 = vrcp.pop %v2088
        %v2093 = vrcp.pop %v2091
        %v2094 = vmul.f32 %v2083, %v2092
        %v2095 = vmul.f32 %v2085, %v2093
        %v2096 = vpack.c.bf16 %v2094, %v2094
        %v2097 = vpack.c.bf16 %v2095, %v2095
        %2098 = vrot.lane.b32.xlu0 %v1136, 32
        %v2099 = vpop.permute.xlu0 %2098
        %v2101 = vsel %vm1243, %v2096, 0
        %v2104 = vsel %vm1271, %v2099, 0
        %2106 = vmatprep.subr.bf16.mxu0 0
        %2107 = vmatpush1.bf16.msra.mxu0 %v2104
        %2108 = vmatprep.subr.bf16.mxu0 0
        %2109 = vmatpush1.bf16.msra.mxu0 0
        %2110 = vmatprep.subr.bf16.mxu0 0
        %2111 = vmatpush1.bf16.msra.mxu0 0
        %2112 = vmatprep.subr.bf16.mxu0 0
        %2113 = vmatpush1.bf16.msra.mxu0 0
        %2114 = vmatprep.subr.bf16.mxu0 0
        %2115 = vmatpush1.bf16.msra.mxu0 0
        %2116 = vmatprep.subr.bf16.mxu0 0
        %2117 = vmatpush1.bf16.msra.mxu0 0
        %2118 = vmatprep.subr.bf16.mxu0 0
        %2119 = vmatpush1.bf16.msra.mxu0 0
        %2120 = vmatprep.subr.bf16.mxu0 0
        %2121 = vmatpush1.bf16.msra.mxu0 0
        %2122 = vmatprep.subr.bf16.mxu0 0
        %2123 = vmatpush1.bf16.msra.mxu0 0
        %2124 = vmatprep.subr.bf16.mxu0 0
        %2125 = vmatpush1.bf16.msra.mxu0 0
        %2126 = vmatprep.subr.bf16.mxu0 0
        %2127 = vmatpush1.bf16.msra.mxu0 0
        %2128 = vmatprep.subr.bf16.mxu0 0
        %2129 = vmatpush1.bf16.msra.mxu0 0
        %2130 = vmatprep.subr.bf16.mxu0 0
        %2131 = vmatpush1.bf16.msra.mxu0 0
        %2132 = vmatprep.subr.bf16.mxu0 0
        %2133 = vmatpush1.bf16.msra.mxu0 0
        %2134 = vmatprep.subr.bf16.mxu0 0
        %2135 = vmatpush1.bf16.msra.mxu0 0
        %2136 = vmatprep.subr.bf16.mxu0 0
        %2137 = vmatpush1.bf16.msra.mxu0 0
        %2138 = vmatprep.mubr.bf16.mxu0 0
        %2139 = vmatmul.mubr.bf16.gmra.mrb[0].mxu0 %v2101
        %v2140 = vpop.f32.mrb[0].mxu0
        %v2141 = vadd.f32 0.0, %v2140
        %v2142 = vpop.f32.mrb[0].mxu0
        %v2143 = vpop.f32.mrb[0].mxu0
        %v2144 = vpop.f32.mrb[0].mxu0
        %2145 = vdwg.mxu0
        %2146 = vrot.lane.b32.xlu0 %v1137, 32
        %v2147 = vpop.permute.xlu0 %2146
        %v2149 = vsel %vm1243, %v2097, 0
        %v2152 = vsel %vm1271, %v2147, 0
        %2154 = vmatprep.subr.bf16.mxu0 0
        %2155 = vmatpush1.bf16.msra.mxu0 %v2152
        %2156 = vmatprep.subr.bf16.mxu0 0
        %2157 = vmatpush1.bf16.msra.mxu0 0
        %2158 = vmatprep.subr.bf16.mxu0 0
        %2159 = vmatpush1.bf16.msra.mxu0 0
        %2160 = vmatprep.subr.bf16.mxu0 0
        %2161 = vmatpush1.bf16.msra.mxu0 0
        %2162 = vmatprep.subr.bf16.mxu0 0
        %2163 = vmatpush1.bf16.msra.mxu0 0
        %2164 = vmatprep.subr.bf16.mxu0 0
        %2165 = vmatpush1.bf16.msra.mxu0 0
        %2166 = vmatprep.subr.bf16.mxu0 0
        %2167 = vmatpush1.bf16.msra.mxu0 0
        %2168 = vmatprep.subr.bf16.mxu0 0
        %2169 = vmatpush1.bf16.msra.mxu0 0
        %2170 = vmatprep.subr.bf16.mxu0 0
        %2171 = vmatpush1.bf16.msra.mxu0 0
        %2172 = vmatprep.subr.bf16.mxu0 0
        %2173 = vmatpush1.bf16.msra.mxu0 0
        %2174 = vmatprep.subr.bf16.mxu0 0
        %2175 = vmatpush1.bf16.msra.mxu0 0
        %2176 = vmatprep.subr.bf16.mxu0 0
        %2177 = vmatpush1.bf16.msra.mxu0 0
        %2178 = vmatprep.subr.bf16.mxu0 0
        %2179 = vmatpush1.bf16.msra.mxu0 0
        %2180 = vmatprep.subr.bf16.mxu0 0
        %2181 = vmatpush1.bf16.msra.mxu0 0
        %2182 = vmatprep.subr.bf16.mxu0 0
        %2183 = vmatpush1.bf16.msra.mxu0 0
        %2184 = vmatprep.subr.bf16.mxu0 0
        %2185 = vmatpush1.bf16.msra.mxu0 0
        %2186 = vmatprep.mubr.bf16.mxu0 0
        %2187 = vmatmul.mubr.bf16.gmra.mrb[0].mxu0 %v2149
        %v2188 = vpop.f32.mrb[0].mxu0
        %v2189 = vadd.f32 0.0, %v2188
        %v2190 = vpop.f32.mrb[0].mxu0
        %v2191 = vpop.f32.mrb[0].mxu0
        %v2192 = vpop.f32.mrb[0].mxu0
        %2193 = vdwg.mxu0
        %v2194 = vpack.c.bf16 %v2189, %v2141
        %v2199 = vunpack.c.l.b16 %v1116
        %v2200 = vunpack.c.l.b16 %v1117
        %v2201 = vunpack.c.l.b16 %v1118
        %v2202 = vunpack.c.l.b16 %v1119
        %v2203 = vpack.c.b16 %v2200, %v2199
        %v2204 = vpack.c.b16 %v2202, %v2201
        %v2208 = vsel %vm1150, %v2194, 0
        %2210 = vmatprep.subr.bf16.mxu0 0
        %2211 = vmatpush1.bf16.msra.mxu0 %v2203
        %2212 = vmatprep.subr.bf16.mxu0 0
        %2213 = vmatpush1.bf16.msra.mxu0 %v2204
        %2214 = vmatprep.subr.bf16.mxu0 0
        %2215 = vmatpush1.bf16.msra.mxu0 0
        %2216 = vmatprep.subr.bf16.mxu0 0
        %2217 = vmatpush1.bf16.msra.mxu0 0
        %2218 = vmatprep.subr.bf16.mxu0 0
        %2219 = vmatpush1.bf16.msra.mxu0 0
        %2220 = vmatprep.subr.bf16.mxu0 0
        %2221 = vmatpush1.bf16.msra.mxu0 0
        %2222 = vmatprep.subr.bf16.mxu0 0
        %2223 = vmatpush1.bf16.msra.mxu0 0
        %2224 = vmatprep.subr.bf16.mxu0 0
        %2225 = vmatpush1.bf16.msra.mxu0 0
        %2226 = vmatprep.subr.bf16.mxu0 0
        %2227 = vmatpush1.bf16.msra.mxu0 0
        %2228 = vmatprep.subr.bf16.mxu0 0
        %2229 = vmatpush1.bf16.msra.mxu0 0
        %2230 = vmatprep.subr.bf16.mxu0 0
        %2231 = vmatpush1.bf16.msra.mxu0 0
        %2232 = vmatprep.subr.bf16.mxu0 0
        %2233 = vmatpush1.bf16.msra.mxu0 0
        %2234 = vmatprep.subr.bf16.mxu0 0
        %2235 = vmatpush1.bf16.msra.mxu0 0
        %2236 = vmatprep.subr.bf16.mxu0 0
        %2237 = vmatpush1.bf16.msra.mxu0 0
        %2238 = vmatprep.subr.bf16.mxu0 0
        %2239 = vmatpush1.bf16.msra.mxu0 0
        %2240 = vmatprep.subr.bf16.mxu0 0
        %2241 = vmatpush1.bf16.msra.mxu0 0
        %2242 = vmatprep.mubr.bf16.mxu0 0
        %2243 = vmatmul.mubr.bf16.gmra.mrb[0].mxu0 %v2208
        %v2244 = vpop.f32.mrb[0].mxu0
        %v2245 = vadd.f32 0.0, %v2244
        %v2246 = vpop.f32.mrb[0].mxu0
        %v2247 = vpop.f32.mrb[0].mxu0
        %v2248 = vadd.f32 0.0, %v2247
        %v2249 = vpop.f32.mrb[0].mxu0
        %2250 = vdwg.mxu0
        %v2251 = vadd.f32 %v1972, %v2245
        %v2252 = vadd.f32 %v1973, %v2248
        %v2253 = vld [vmem:[%s758] sm:$0x1]
        %v2255 = vlaneseq
        %v2256 = vshrl.u32 %v2255, 7
        %v2257 = vsub.s32 0, %v2256
        %v2258 = vrot.slane %v2253, %v2257
        %v2260 = vadd.f32 %v2251, %v2258
        %v2261 = vadd.f32 %v2252, %v2258
        %v2262 = vadd.f32 %v838, %v2260
        %v2263 = vadd.f32 %v839, %v2261
        %v2264 = vld [vmem:[%s761] sm:$0x1]
        %v2265 = vld [vmem:[%s764] sm:$0x1]
        %2266 = vadd.xlane.f32.xlu0 %v2262
        %v2267 = vpop.xlane.xlu0 %2266
        %2268 = vadd.xlane.f32.xlu0 %v2263
        %v2269 = vpop.xlane.xlu0 %2268
        %v2270 = vrcp.pop 128.0
        %v2271 = vmul.f32 %v2267, %v2270
        %v2272 = vmul.f32 %v2269, %v2270
        %v2273 = vsub.f32 %v2262, %v2271
        %v2274 = vsub.f32 %v2263, %v2272
        %v2275 = vmul.f32 %v2273, %v2273
        %v2276 = vmul.f32 %v2274, %v2274
        %2277 = vadd.xlane.f32.xlu0 %v2275
        %v2278 = vpop.xlane.xlu0 %2277
        %2279 = vadd.xlane.f32.xlu0 %v2276
        %v2280 = vpop.xlane.xlu0 %2279
        %v2281 = vmul.f32 %v2278, %v2270
        %v2282 = vmul.f32 %v2280, %v2270
        %v2283 = vadd.f32 %v2281, 1e-12
        %v2284 = vadd.f32 %v2282, 1e-12
        %v2285 = vrsqrt.pop %v2283
        %v2286 = vrsqrt.pop %v2284
        %v2287 = vmul.f32 %v2273, %v2285
        %v2288 = vmul.f32 %v2274, %v2286
        %v2290 = vlaneseq
        %v2291 = vshrl.u32 %v2290, 7
        %v2292 = vsub.s32 0, %v2291
        %v2293 = vrot.slane %v2264, %v2292
        %v2295 = vmul.f32 %v2287, %v2293
        %v2296 = vmul.f32 %v2288, %v2293
        %v2298 = vlaneseq
        %v2299 = vshrl.u32 %v2298, 7
        %v2300 = vsub.s32 0, %v2299
        %v2301 = vrot.slane %v2265, %v2300
        %v2303 = vadd.f32 %v2295, %v2301
        %v2304 = vadd.f32 %v2296, %v2301
        %v2305 = vpack.c.bf16 %v2304, %v2303
        %v2306 = vld [vmem:[%s769] sm:$0xff]
        %v2307 = vld [vmem:[%s769 + $0x8] sm:$0xff]
        %v2308 = vld [vmem:[%s769 + $0x10] sm:$0xff]
        %v2309 = vld [vmem:[%s769 + $0x18] sm:$0xff]
        %v2310 = vld [vmem:[%s769 + $0x20] sm:$0xff]
        %v2311 = vld [vmem:[%s769 + $0x28] sm:$0xff]
        %v2312 = vld [vmem:[%s769 + $0x30] sm:$0xff]
        %v2313 = vld [vmem:[%s769 + $0x38] sm:$0xff]
        %v2314 = vld [vmem:[%s769 + $0x40] sm:$0xff]
        %v2315 = vld [vmem:[%s769 + $0x48] sm:$0xff]
        %v2316 = vld [vmem:[%s769 + $0x50] sm:$0xff]
        %v2317 = vld [vmem:[%s769 + $0x58] sm:$0xff]
        %v2318 = vld [vmem:[%s769 + $0x60] sm:$0xff]
        %v2319 = vld [vmem:[%s769 + $0x68] sm:$0xff]
        %v2320 = vld [vmem:[%s769 + $0x70] sm:$0xff]
        %v2321 = vld [vmem:[%s769 + $0x78] sm:$0xff]
        %v2322 = vld [vmem:[%s769 + $0x80] sm:$0xff]
        %v2323 = vld [vmem:[%s769 + $0x88] sm:$0xff]
        %v2324 = vld [vmem:[%s769 + $0x90] sm:$0xff]
        %v2325 = vld [vmem:[%s769 + $0x98] sm:$0xff]
        %v2326 = vld [vmem:[%s769 + $0xa0] sm:$0xff]
        %v2327 = vld [vmem:[%s769 + $0xa8] sm:$0xff]
        %v2328 = vld [vmem:[%s769 + $0xb0] sm:$0xff]
        %v2329 = vld [vmem:[%s769 + $0xb8] sm:$0xff]
        %v2330 = vld [vmem:[%s769 + $0xc0] sm:$0xff]
        %v2331 = vld [vmem:[%s769 + $0xc8] sm:$0xff]
        %v2332 = vld [vmem:[%s769 + $0xd0] sm:$0xff]
        %v2333 = vld [vmem:[%s769 + $0xd8] sm:$0xff]
        %v2334 = vld [vmem:[%s769 + $0xe0] sm:$0xff]
        %v2335 = vld [vmem:[%s769 + $0xe8] sm:$0xff]
        %v2336 = vld [vmem:[%s769 + $0xf0] sm:$0xff]
        %v2337 = vld [vmem:[%s769 + $0xf8] sm:$0xff]
        %v2338 = vld [vmem:[%s773] sm:$0xf]
        %v2340 = vlaneseq
        %v2341 = vshrl.u32 %v2340, 7
        %v2342 = vsub.s32 0, %v2341
        %v2343 = vrot.slane %v2338, %v2342
        %v2344 = vlaneseq
        %v2345 = vshrl.u32 %v2344, 7
        %v2346 = vsub.s32 1, %v2345
        %v2347 = vrot.slane %v2338, %v2346
        %v2348 = vlaneseq
        %v2349 = vshrl.u32 %v2348, 7
        %v2350 = vsub.s32 2, %v2349
        %v2351 = vrot.slane %v2338, %v2350
        %v2352 = vlaneseq
        %v2353 = vshrl.u32 %v2352, 7
        %v2354 = vsub.s32 3, %v2353
        %v2355 = vrot.slane %v2338, %v2354
        %v2392 = vunpack.c.l.b16 %v2306
        %v2393 = vunpack.c.h.b16 %v2306
        %v2394 = vunpack.c.l.b16 %v2307
        %v2395 = vunpack.c.h.b16 %v2307
        %v2396 = vunpack.c.l.b16 %v2308
        %v2397 = vunpack.c.h.b16 %v2308
        %v2398 = vunpack.c.l.b16 %v2309
        %v2399 = vunpack.c.h.b16 %v2309
        %v2400 = vunpack.c.l.b16 %v2310
        %v2401 = vunpack.c.h.b16 %v2310
        %v2402 = vunpack.c.l.b16 %v2311
        %v2403 = vunpack.c.h.b16 %v2311
        %v2404 = vunpack.c.l.b16 %v2312
        %v2405 = vunpack.c.h.b16 %v2312
        %v2406 = vunpack.c.l.b16 %v2313
        %v2407 = vunpack.c.h.b16 %v2313
        %v2408 = vunpack.c.l.b16 %v2314
        %v2409 = vunpack.c.h.b16 %v2314
        %v2410 = vunpack.c.l.b16 %v2315
        %v2411 = vunpack.c.h.b16 %v2315
        %v2412 = vunpack.c.l.b16 %v2316
        %v2413 = vunpack.c.h.b16 %v2316
        %v2414 = vunpack.c.l.b16 %v2317
        %v2415 = vunpack.c.h.b16 %v2317
        %v2416 = vunpack.c.l.b16 %v2318
        %v2417 = vunpack.c.h.b16 %v2318
        %v2418 = vunpack.c.l.b16 %v2319
        %v2419 = vunpack.c.h.b16 %v2319
        %v2420 = vunpack.c.l.b16 %v2320
        %v2421 = vunpack.c.h.b16 %v2320
        %v2422 = vunpack.c.l.b16 %v2321
        %v2423 = vunpack.c.h.b16 %v2321
        %v2424 = vunpack.c.l.b16 %v2322
        %v2425 = vunpack.c.h.b16 %v2322
        %v2426 = vunpack.c.l.b16 %v2323
        %v2427 = vunpack.c.h.b16 %v2323
        %v2428 = vunpack.c.l.b16 %v2324
        %v2429 = vunpack.c.h.b16 %v2324
        %v2430 = vunpack.c.l.b16 %v2325
        %v2431 = vunpack.c.h.b16 %v2325
        %v2432 = vunpack.c.l.b16 %v2326
        %v2433 = vunpack.c.h.b16 %v2326
        %v2434 = vunpack.c.l.b16 %v2327
        %v2435 = vunpack.c.h.b16 %v2327
        %v2436 = vunpack.c.l.b16 %v2328
        %v2437 = vunpack.c.h.b16 %v2328
        %v2438 = vunpack.c.l.b16 %v2329
        %v2439 = vunpack.c.h.b16 %v2329
        %v2440 = vunpack.c.l.b16 %v2330
        %v2441 = vunpack.c.h.b16 %v2330
        %v2442 = vunpack.c.l.b16 %v2331
        %v2443 = vunpack.c.h.b16 %v2331
        %v2444 = vunpack.c.l.b16 %v2332
        %v2445 = vunpack.c.h.b16 %v2332
        %v2446 = vunpack.c.l.b16 %v2333
        %v2447 = vunpack.c.h.b16 %v2333
        %v2448 = vunpack.c.l.b16 %v2334
        %v2449 = vunpack.c.h.b16 %v2334
        %v2450 = vunpack.c.l.b16 %v2335
        %v2451 = vunpack.c.h.b16 %v2335
        %v2452 = vunpack.c.l.b16 %v2336
        %v2453 = vunpack.c.h.b16 %v2336
        %v2454 = vunpack.c.l.b16 %v2337
        %v2455 = vunpack.c.h.b16 %v2337
        %v2456 = vpack.c.b16 %v2396, %v2392
        %v2457 = vpack.c.b16 %v2397, %v2393
        %v2458 = vpack.c.b16 %v2398, %v2394
        %v2459 = vpack.c.b16 %v2399, %v2395
        %v2460 = vpack.c.b16 %v2404, %v2400
        %v2461 = vpack.c.b16 %v2405, %v2401
        %v2462 = vpack.c.b16 %v2406, %v2402
        %v2463 = vpack.c.b16 %v2407, %v2403
        %v2464 = vpack.c.b16 %v2412, %v2408
        %v2465 = vpack.c.b16 %v2413, %v2409
        %v2466 = vpack.c.b16 %v2414, %v2410
        %v2467 = vpack.c.b16 %v2415, %v2411
        %v2468 = vpack.c.b16 %v2420, %v2416
        %v2469 = vpack.c.b16 %v2421, %v2417
        %v2470 = vpack.c.b16 %v2422, %v2418
        %v2471 = vpack.c.b16 %v2423, %v2419
        %v2472 = vpack.c.b16 %v2428, %v2424
        %v2473 = vpack.c.b16 %v2429, %v2425
        %v2474 = vpack.c.b16 %v2430, %v2426
        %v2475 = vpack.c.b16 %v2431, %v2427
        %v2476 = vpack.c.b16 %v2436, %v2432
        %v2477 = vpack.c.b16 %v2437, %v2433
        %v2478 = vpack.c.b16 %v2438, %v2434
        %v2479 = vpack.c.b16 %v2439, %v2435
        %v2480 = vpack.c.b16 %v2444, %v2440
        %v2481 = vpack.c.b16 %v2445, %v2441
        %v2482 = vpack.c.b16 %v2446, %v2442
        %v2483 = vpack.c.b16 %v2447, %v2443
        %v2484 = vpack.c.b16 %v2452, %v2448
        %v2485 = vpack.c.b16 %v2453, %v2449
        %v2486 = vpack.c.b16 %v2454, %v2450
        %v2487 = vpack.c.b16 %v2455, %v2451
        %2520 = vmatprep.subr.bf16.mxu0 %v2457
        %2521 = vmatpush1.bf16.msra.mxu0 %v2456
        %2522 = vmatprep.subr.bf16.mxu0 %v2461
        %2523 = vmatpush1.bf16.msra.mxu0 %v2460
        %2524 = vmatprep.subr.bf16.mxu0 %v2465
        %2525 = vmatpush1.bf16.msra.mxu0 %v2464
        %2526 = vmatprep.subr.bf16.mxu0 %v2469
        %2527 = vmatpush1.bf16.msra.mxu0 %v2468
        %2528 = vmatprep.subr.bf16.mxu0 %v2473
        %2529 = vmatpush1.bf16.msra.mxu0 %v2472
        %2530 = vmatprep.subr.bf16.mxu0 %v2477
        %2531 = vmatpush1.bf16.msra.mxu0 %v2476
        %2532 = vmatprep.subr.bf16.mxu0 %v2481
        %2533 = vmatpush1.bf16.msra.mxu0 %v2480
        %2534 = vmatprep.subr.bf16.mxu0 %v2485
        %2535 = vmatpush1.bf16.msra.mxu0 %v2484
        %2536 = vmatprep.subr.bf16.mxu0 0
        %2537 = vmatpush1.bf16.msra.mxu0 0
        %2538 = vmatprep.subr.bf16.mxu0 0
        %2539 = vmatpush1.bf16.msra.mxu0 0
        %2540 = vmatprep.subr.bf16.mxu0 0
        %2541 = vmatpush1.bf16.msra.mxu0 0
        %2542 = vmatprep.subr.bf16.mxu0 0
        %2543 = vmatpush1.bf16.msra.mxu0 0
        %2544 = vmatprep.subr.bf16.mxu0 0
        %2545 = vmatpush1.bf16.msra.mxu0 0
        %2546 = vmatprep.subr.bf16.mxu0 0
        %2547 = vmatpush1.bf16.msra.mxu0 0
        %2548 = vmatprep.subr.bf16.mxu0 0
        %2549 = vmatpush1.bf16.msra.mxu0 0
        %2550 = vmatprep.subr.bf16.mxu0 0
        %2551 = vmatpush1.bf16.msra.mxu0 0
        %2552 = vmatprep.mubr.bf16.mxu0 0
        %2553 = vmatmul.mubr.bf16.gmra.mrb[0].mxu0 %v2305
        %v2554 = vpop.f32.mrb[0].mxu0
        %v2555 = vadd.f32 %v2343, %v2554
        %v2556 = vpop.f32.mrb[0].mxu0
        %v2557 = vadd.f32 %v2347, %v2556
        %v2558 = vpop.f32.mrb[0].mxu0
        %v2559 = vadd.f32 %v2343, %v2558
        %v2560 = vpop.f32.mrb[0].mxu0
        %v2561 = vadd.f32 %v2347, %v2560
        %2562 = vdwg.mxu0
        %2563 = vmatprep.subr.bf16.mxu0 %v2459
        %2564 = vmatpush1.bf16.msra.mxu0 %v2458
        %2565 = vmatprep.subr.bf16.mxu0 %v2463
        %2566 = vmatpush1.bf16.msra.mxu0 %v2462
        %2567 = vmatprep.subr.bf16.mxu0 %v2467
        %2568 = vmatpush1.bf16.msra.mxu0 %v2466
        %2569 = vmatprep.subr.bf16.mxu0 %v2471
        %2570 = vmatpush1.bf16.msra.mxu0 %v2470
        %2571 = vmatprep.subr.bf16.mxu0 %v2475
        %2572 = vmatpush1.bf16.msra.mxu0 %v2474
        %2573 = vmatprep.subr.bf16.mxu0 %v2479
        %2574 = vmatpush1.bf16.msra.mxu0 %v2478
        %2575 = vmatprep.subr.bf16.mxu0 %v2483
        %2576 = vmatpush1.bf16.msra.mxu0 %v2482
        %2577 = vmatprep.subr.bf16.mxu0 %v2487
        %2578 = vmatpush1.bf16.msra.mxu0 %v2486
        %2579 = vmatprep.subr.bf16.mxu0 0
        %2580 = vmatpush1.bf16.msra.mxu0 0
        %2581 = vmatprep.subr.bf16.mxu0 0
        %2582 = vmatpush1.bf16.msra.mxu0 0
        %2583 = vmatprep.subr.bf16.mxu0 0
        %2584 = vmatpush1.bf16.msra.mxu0 0
        %2585 = vmatprep.subr.bf16.mxu0 0
        %2586 = vmatpush1.bf16.msra.mxu0 0
        %2587 = vmatprep.subr.bf16.mxu0 0
        %2588 = vmatpush1.bf16.msra.mxu0 0
        %2589 = vmatprep.subr.bf16.mxu0 0
        %2590 = vmatpush1.bf16.msra.mxu0 0
        %2591 = vmatprep.subr.bf16.mxu0 0
        %2592 = vmatpush1.bf16.msra.mxu0 0
        %2593 = vmatprep.subr.bf16.mxu0 0
        %2594 = vmatpush1.bf16.msra.mxu0 0
        %2595 = vmatprep.mubr.bf16.mxu0 0
        %2596 = vmatmul.mubr.bf16.gmra.mrb[0].mxu0 %v2305
        %v2597 = vpop.f32.mrb[0].mxu0
        %v2598 = vadd.f32 %v2351, %v2597
        %v2599 = vpop.f32.mrb[0].mxu0
        %v2600 = vadd.f32 %v2355, %v2599
        %v2601 = vpop.f32.mrb[0].mxu0
        %v2602 = vadd.f32 %v2351, %v2601
        %v2603 = vpop.f32.mrb[0].mxu0
        %v2604 = vadd.f32 %v2355, %v2603
        %2605 = vdwg.mxu0
        %v2606 = vmul.f32 %v2555, 0.5
        %v2607 = vmul.f32 %v2557, 0.5
        %v2608 = vmul.f32 %v2598, 0.5
        %v2609 = vmul.f32 %v2600, 0.5
        %v2610 = vmul.f32 %v2559, 0.5
        %v2611 = vmul.f32 %v2561, 0.5
        %v2612 = vmul.f32 %v2602, 0.5
        %v2613 = vmul.f32 %v2604, 0.5
        %v2614 = vmul.f32 %v2555, 0.044715
        %v2615 = vmul.f32 %v2557, 0.044715
        %v2616 = vmul.f32 %v2598, 0.044715
        %v2617 = vmul.f32 %v2600, 0.044715
        %v2618 = vmul.f32 %v2559, 0.044715
        %v2619 = vmul.f32 %v2561, 0.044715
        %v2620 = vmul.f32 %v2602, 0.044715
        %v2621 = vmul.f32 %v2604, 0.044715
        %v2622 = vmul.f32 %v2614, %v2555
        %v2623 = vmul.f32 %v2615, %v2557
        %v2624 = vmul.f32 %v2616, %v2598
        %v2625 = vmul.f32 %v2617, %v2600
        %v2626 = vmul.f32 %v2618, %v2559
        %v2627 = vmul.f32 %v2619, %v2561
        %v2628 = vmul.f32 %v2620, %v2602
        %v2629 = vmul.f32 %v2621, %v2604
        %v2630 = vmul.f32 %v2622, %v2555
        %v2631 = vmul.f32 %v2623, %v2557
        %v2632 = vmul.f32 %v2624, %v2598
        %v2633 = vmul.f32 %v2625, %v2600
        %v2634 = vmul.f32 %v2626, %v2559
        %v2635 = vmul.f32 %v2627, %v2561
        %v2636 = vmul.f32 %v2628, %v2602
        %v2637 = vmul.f32 %v2629, %v2604
        %v2638 = vadd.f32 %v2555, %v2630
        %v2639 = vadd.f32 %v2557, %v2631
        %v2640 = vadd.f32 %v2598, %v2632
        %v2641 = vadd.f32 %v2600, %v2633
        %v2642 = vadd.f32 %v2559, %v2634
        %v2643 = vadd.f32 %v2561, %v2635
        %v2644 = vadd.f32 %v2602, %v2636
        %v2645 = vadd.f32 %v2604, %v2637
        %v2646 = vmul.f32 %v2638, 0.7978846
        %v2647 = vmul.f32 %v2639, 0.7978846
        %v2648 = vmul.f32 %v2640, 0.7978846
        %v2649 = vmul.f32 %v2641, 0.7978846
        %v2650 = vmul.f32 %v2642, 0.7978846
        %v2651 = vmul.f32 %v2643, 0.7978846
        %v2652 = vmul.f32 %v2644, 0.7978846
        %v2653 = vmul.f32 %v2645, 0.7978846
        %v2654 = vtanh.pop %v2646
        %v2655 = vtanh.pop %v2647
        %v2656 = vtanh.pop %v2648
        %v2657 = vtanh.pop %v2649
        %v2658 = vtanh.pop %v2650
        %v2659 = vtanh.pop %v2651
        %v2660 = vtanh.pop %v2652
        %v2661 = vtanh.pop %v2653
        %v2662 = vadd.f32 %v2654, 1.0
        %v2663 = vadd.f32 %v2655, 1.0
        %v2664 = vadd.f32 %v2656, 1.0
        %v2665 = vadd.f32 %v2657, 1.0
        %v2666 = vadd.f32 %v2658, 1.0
        %v2667 = vadd.f32 %v2659, 1.0
        %v2668 = vadd.f32 %v2660, 1.0
        %v2669 = vadd.f32 %v2661, 1.0
        %v2670 = vmul.f32 %v2606, %v2662
        %v2671 = vmul.f32 %v2607, %v2663
        %v2672 = vmul.f32 %v2608, %v2664
        %v2673 = vmul.f32 %v2609, %v2665
        %v2674 = vmul.f32 %v2610, %v2666
        %v2675 = vmul.f32 %v2611, %v2667
        %v2676 = vmul.f32 %v2612, %v2668
        %v2677 = vmul.f32 %v2613, %v2669
        %v2678 = vpack.c.bf16 %v2674, %v2670
        %v2679 = vpack.c.bf16 %v2675, %v2671
        %v2680 = vpack.c.bf16 %v2676, %v2672
        %v2681 = vpack.c.bf16 %v2677, %v2673
        %v2682 = vld [vmem:[%s778] sm:$0xf]
        %v2683 = vld [vmem:[%s778 + $0x4] sm:$0xf]
        %v2684 = vld [vmem:[%s778 + $0x8] sm:$0xf]
        %v2685 = vld [vmem:[%s778 + $0xc] sm:$0xf]
        %v2686 = vld [vmem:[%s778 + $0x10] sm:$0xf]
        %v2687 = vld [vmem:[%s778 + $0x14] sm:$0xf]
        %v2688 = vld [vmem:[%s778 + $0x18] sm:$0xf]
        %v2689 = vld [vmem:[%s778 + $0x1c] sm:$0xf]
        %v2690 = vld [vmem:[%s778 + $0x20] sm:$0xf]
        %v2691 = vld [vmem:[%s778 + $0x24] sm:$0xf]
        %v2692 = vld [vmem:[%s778 + $0x28] sm:$0xf]
        %v2693 = vld [vmem:[%s778 + $0x2c] sm:$0xf]
        %v2694 = vld [vmem:[%s778 + $0x30] sm:$0xf]
        %v2695 = vld [vmem:[%s778 + $0x34] sm:$0xf]
        %v2696 = vld [vmem:[%s778 + $0x38] sm:$0xf]
        %v2697 = vld [vmem:[%s778 + $0x3c] sm:$0xf]
        %v2698 = vld [vmem:[%s778 + $0x40] sm:$0xf]
        %v2699 = vld [vmem:[%s778 + $0x44] sm:$0xf]
        %v2700 = vld [vmem:[%s778 + $0x48] sm:$0xf]
        %v2701 = vld [vmem:[%s778 + $0x4c] sm:$0xf]
        %v2702 = vld [vmem:[%s778 + $0x50] sm:$0xf]
        %v2703 = vld [vmem:[%s778 + $0x54] sm:$0xf]
        %v2704 = vld [vmem:[%s778 + $0x58] sm:$0xf]
        %v2705 = vld [vmem:[%s778 + $0x5c] sm:$0xf]
        %v2706 = vld [vmem:[%s778 + $0x60] sm:$0xf]
        %v2707 = vld [vmem:[%s778 + $0x64] sm:$0xf]
        %v2708 = vld [vmem:[%s778 + $0x68] sm:$0xf]
        %v2709 = vld [vmem:[%s778 + $0x6c] sm:$0xf]
        %v2710 = vld [vmem:[%s778 + $0x70] sm:$0xf]
        %v2711 = vld [vmem:[%s778 + $0x74] sm:$0xf]
        %v2712 = vld [vmem:[%s778 + $0x78] sm:$0xf]
        %v2713 = vld [vmem:[%s778 + $0x7c] sm:$0xf]
        %v2714 = vld [vmem:[%s778 + $0x80] sm:$0xf]
        %v2715 = vld [vmem:[%s778 + $0x84] sm:$0xf]
        %v2716 = vld [vmem:[%s778 + $0x88] sm:$0xf]
        %v2717 = vld [vmem:[%s778 + $0x8c] sm:$0xf]
        %v2718 = vld [vmem:[%s778 + $0x90] sm:$0xf]
        %v2719 = vld [vmem:[%s778 + $0x94] sm:$0xf]
        %v2720 = vld [vmem:[%s778 + $0x98] sm:$0xf]
        %v2721 = vld [vmem:[%s778 + $0x9c] sm:$0xf]
        %v2722 = vld [vmem:[%s778 + $0xa0] sm:$0xf]
        %v2723 = vld [vmem:[%s778 + $0xa4] sm:$0xf]
        %v2724 = vld [vmem:[%s778 + $0xa8] sm:$0xf]
        %v2725 = vld [vmem:[%s778 + $0xac] sm:$0xf]
        %v2726 = vld [vmem:[%s778 + $0xb0] sm:$0xf]
        %v2727 = vld [vmem:[%s778 + $0xb4] sm:$0xf]
        %v2728 = vld [vmem:[%s778 + $0xb8] sm:$0xf]
        %v2729 = vld [vmem:[%s778 + $0xbc] sm:$0xf]
        %v2730 = vld [vmem:[%s778 + $0xc0] sm:$0xf]
        %v2731 = vld [vmem:[%s778 + $0xc4] sm:$0xf]
        %v2732 = vld [vmem:[%s778 + $0xc8] sm:$0xf]
        %v2733 = vld [vmem:[%s778 + $0xcc] sm:$0xf]
        %v2734 = vld [vmem:[%s778 + $0xd0] sm:$0xf]
        %v2735 = vld [vmem:[%s778 + $0xd4] sm:$0xf]
        %v2736 = vld [vmem:[%s778 + $0xd8] sm:$0xf]
        %v2737 = vld [vmem:[%s778 + $0xdc] sm:$0xf]
        %v2738 = vld [vmem:[%s778 + $0xe0] sm:$0xf]
        %v2739 = vld [vmem:[%s778 + $0xe4] sm:$0xf]
        %v2740 = vld [vmem:[%s778 + $0xe8] sm:$0xf]
        %v2741 = vld [vmem:[%s778 + $0xec] sm:$0xf]
        %v2742 = vld [vmem:[%s778 + $0xf0] sm:$0xf]
        %v2743 = vld [vmem:[%s778 + $0xf4] sm:$0xf]
        %v2744 = vld [vmem:[%s778 + $0xf8] sm:$0xf]
        %v2745 = vld [vmem:[%s778 + $0xfc] sm:$0xf]
        %v2746 = vld [vmem:[%s781] sm:$0x1]
        %v2748 = vlaneseq
        %v2749 = vshrl.u32 %v2748, 7
        %v2750 = vsub.s32 0, %v2749
        %v2751 = vrot.slane %v2746, %v2750
        %v2817 = vunpack.c.l.b16 %v2682
        %v2818 = vunpack.c.l.b16 %v2683
        %v2819 = vunpack.c.l.b16 %v2684
        %v2820 = vunpack.c.l.b16 %v2685
        %v2821 = vunpack.c.l.b16 %v2686
        %v2822 = vunpack.c.l.b16 %v2687
        %v2823 = vunpack.c.l.b16 %v2688
        %v2824 = vunpack.c.l.b16 %v2689
        %v2825 = vunpack.c.l.b16 %v2690
        %v2826 = vunpack.c.l.b16 %v2691
        %v2827 = vunpack.c.l.b16 %v2692
        %v2828 = vunpack.c.l.b16 %v2693
        %v2829 = vunpack.c.l.b16 %v2694
        %v2830 = vunpack.c.l.b16 %v2695
        %v2831 = vunpack.c.l.b16 %v2696
        %v2832 = vunpack.c.l.b16 %v2697
        %v2833 = vunpack.c.l.b16 %v2698
        %v2834 = vunpack.c.l.b16 %v2699
        %v2835 = vunpack.c.l.b16 %v2700
        %v2836 = vunpack.c.l.b16 %v2701
        %v2837 = vunpack.c.l.b16 %v2702
        %v2838 = vunpack.c.l.b16 %v2703
        %v2839 = vunpack.c.l.b16 %v2704
        %v2840 = vunpack.c.l.b16 %v2705
        %v2841 = vunpack.c.l.b16 %v2706
        %v2842 = vunpack.c.l.b16 %v2707
        %v2843 = vunpack.c.l.b16 %v2708
        %v2844 = vunpack.c.l.b16 %v2709
        %v2845 = vunpack.c.l.b16 %v2710
        %v2846 = vunpack.c.l.b16 %v2711
        %v2847 = vunpack.c.l.b16 %v2712
        %v2848 = vunpack.c.l.b16 %v2713
        %v2849 = vunpack.c.l.b16 %v2714
        %v2850 = vunpack.c.l.b16 %v2715
        %v2851 = vunpack.c.l.b16 %v2716
        %v2852 = vunpack.c.l.b16 %v2717
        %v2853 = vunpack.c.l.b16 %v2718
        %v2854 = vunpack.c.l.b16 %v2719
        %v2855 = vunpack.c.l.b16 %v2720
        %v2856 = vunpack.c.l.b16 %v2721
        %v2857 = vunpack.c.l.b16 %v2722
        %v2858 = vunpack.c.l.b16 %v2723
        %v2859 = vunpack.c.l.b16 %v2724
        %v2860 = vunpack.c.l.b16 %v2725
        %v2861 = vunpack.c.l.b16 %v2726
        %v2862 = vunpack.c.l.b16 %v2727
        %v2863 = vunpack.c.l.b16 %v2728
        %v2864 = vunpack.c.l.b16 %v2729
        %v2865 = vunpack.c.l.b16 %v2730
        %v2866 = vunpack.c.l.b16 %v2731
        %v2867 = vunpack.c.l.b16 %v2732
        %v2868 = vunpack.c.l.b16 %v2733
        %v2869 = vunpack.c.l.b16 %v2734
        %v2870 = vunpack.c.l.b16 %v2735
        %v2871 = vunpack.c.l.b16 %v2736
        %v2872 = vunpack.c.l.b16 %v2737
        %v2873 = vunpack.c.l.b16 %v2738
        %v2874 = vunpack.c.l.b16 %v2739
        %v2875 = vunpack.c.l.b16 %v2740
        %v2876 = vunpack.c.l.b16 %v2741
        %v2877 = vunpack.c.l.b16 %v2742
        %v2878 = vunpack.c.l.b16 %v2743
        %v2879 = vunpack.c.l.b16 %v2744
        %v2880 = vunpack.c.l.b16 %v2745
        %v2881 = vpack.c.b16 %v2818, %v2817
        %v2882 = vpack.c.b16 %v2820, %v2819
        %v2883 = vpack.c.b16 %v2822, %v2821
        %v2884 = vpack.c.b16 %v2824, %v2823
        %v2885 = vpack.c.b16 %v2826, %v2825
        %v2886 = vpack.c.b16 %v2828, %v2827
        %v2887 = vpack.c.b16 %v2830, %v2829
        %v2888 = vpack.c.b16 %v2832, %v2831
        %v2889 = vpack.c.b16 %v2834, %v2833
        %v2890 = vpack.c.b16 %v2836, %v2835
        %v2891 = vpack.c.b16 %v2838, %v2837
        %v2892 = vpack.c.b16 %v2840, %v2839
        %v2893 = vpack.c.b16 %v2842, %v2841
        %v2894 = vpack.c.b16 %v2844, %v2843
        %v2895 = vpack.c.b16 %v2846, %v2845
        %v2896 = vpack.c.b16 %v2848, %v2847
        %v2897 = vpack.c.b16 %v2850, %v2849
        %v2898 = vpack.c.b16 %v2852, %v2851
        %v2899 = vpack.c.b16 %v2854, %v2853
        %v2900 = vpack.c.b16 %v2856, %v2855
        %v2901 = vpack.c.b16 %v2858, %v2857
        %v2902 = vpack.c.b16 %v2860, %v2859
        %v2903 = vpack.c.b16 %v2862, %v2861
        %v2904 = vpack.c.b16 %v2864, %v2863
        %v2905 = vpack.c.b16 %v2866, %v2865
        %v2906 = vpack.c.b16 %v2868, %v2867
        %v2907 = vpack.c.b16 %v2870, %v2869
        %v2908 = vpack.c.b16 %v2872, %v2871
        %v2909 = vpack.c.b16 %v2874, %v2873
        %v2910 = vpack.c.b16 %v2876, %v2875
        %v2911 = vpack.c.b16 %v2878, %v2877
        %v2912 = vpack.c.b16 %v2880, %v2879
        %2945 = vmatprep.subr.bf16.mxu0 0
        %2946 = vmatpush1.bf16.msra.mxu0 %v2881
        %2947 = vmatprep.subr.bf16.mxu0 0
        %2948 = vmatpush1.bf16.msra.mxu0 %v2882
        %2949 = vmatprep.subr.bf16.mxu0 0
        %2950 = vmatpush1.bf16.msra.mxu0 %v2883
        %2951 = vmatprep.subr.bf16.mxu0 0
        %2952 = vmatpush1.bf16.msra.mxu0 %v2884
        %2953 = vmatprep.subr.bf16.mxu0 0
        %2954 = vmatpush1.bf16.msra.mxu0 %v2885
        %2955 = vmatprep.subr.bf16.mxu0 0
        %2956 = vmatpush1.bf16.msra.mxu0 %v2886
        %2957 = vmatprep.subr.bf16.mxu0 0
        %2958 = vmatpush1.bf16.msra.mxu0 %v2887
        %2959 = vmatprep.subr.bf16.mxu0 0
        %2960 = vmatpush1.bf16.msra.mxu0 %v2888
        %2961 = vmatprep.subr.bf16.mxu0 0
        %2962 = vmatpush1.bf16.msra.mxu0 %v2889
        %2963 = vmatprep.subr.bf16.mxu0 0
        %2964 = vmatpush1.bf16.msra.mxu0 %v2890
        %2965 = vmatprep.subr.bf16.mxu0 0
        %2966 = vmatpush1.bf16.msra.mxu0 %v2891
        %2967 = vmatprep.subr.bf16.mxu0 0
        %2968 = vmatpush1.bf16.msra.mxu0 %v2892
        %2969 = vmatprep.subr.bf16.mxu0 0
        %2970 = vmatpush1.bf16.msra.mxu0 %v2893
        %2971 = vmatprep.subr.bf16.mxu0 0
        %2972 = vmatpush1.bf16.msra.mxu0 %v2894
        %2973 = vmatprep.subr.bf16.mxu0 0
        %2974 = vmatpush1.bf16.msra.mxu0 %v2895
        %2975 = vmatprep.subr.bf16.mxu0 0
        %2976 = vmatpush1.bf16.msra.mxu0 %v2896
        %2977 = vmatprep.mubr.bf16.mxu0 %v2679
        %2978 = vmatmul.mubr.bf16.gmra.mrb[0].mxu0 %v2678
        %v2979 = vpop.f32.mrb[0].mxu0
        %v2980 = vadd.f32 %v2751, %v2979
        %v2981 = vpop.f32.mrb[0].mxu0
        %v2982 = vpop.f32.mrb[0].mxu0
        %v2983 = vadd.f32 %v2751, %v2982
        %v2984 = vpop.f32.mrb[0].mxu0
        %2985 = vdwg.mxu0
        %2986 = vmatprep.subr.bf16.mxu0 0
        %2987 = vmatpush1.bf16.msra.mxu0 %v2897
        %2988 = vmatprep.subr.bf16.mxu0 0
        %2989 = vmatpush1.bf16.msra.mxu0 %v2898
        %2990 = vmatprep.subr.bf16.mxu0 0
        %2991 = vmatpush1.bf16.msra.mxu0 %v2899
        %2992 = vmatprep.subr.bf16.mxu0 0
        %2993 = vmatpush1.bf16.msra.mxu0 %v2900
        %2994 = vmatprep.subr.bf16.mxu0 0
        %2995 = vmatpush1.bf16.msra.mxu0 %v2901
        %2996 = vmatprep.subr.bf16.mxu0 0
        %2997 = vmatpush1.bf16.msra.mxu0 %v2902
        %2998 = vmatprep.subr.bf16.mxu0 0
        %2999 = vmatpush1.bf16.msra.mxu0 %v2903
        %3000 = vmatprep.subr.bf16.mxu0 0
        %3001 = vmatpush1.bf16.msra.mxu0 %v2904
        %3002 = vmatprep.subr.bf16.mxu0 0
        %3003 = vmatpush1.bf16.msra.mxu0 %v2905
        %3004 = vmatprep.subr.bf16.mxu0 0
        %3005 = vmatpush1.bf16.msra.mxu0 %v2906
        %3006 = vmatprep.subr.bf16.mxu0 0
        %3007 = vmatpush1.bf16.msra.mxu0 %v2907
        %3008 = vmatprep.subr.bf16.mxu0 0
        %3009 = vmatpush1.bf16.msra.mxu0 %v2908
        %3010 = vmatprep.subr.bf16.mxu0 0
        %3011 = vmatpush1.bf16.msra.mxu0 %v2909
        %3012 = vmatprep.subr.bf16.mxu0 0
        %3013 = vmatpush1.bf16.msra.mxu0 %v2910
        %3014 = vmatprep.subr.bf16.mxu0 0
        %3015 = vmatpush1.bf16.msra.mxu0 %v2911
        %3016 = vmatprep.subr.bf16.mxu0 0
        %3017 = vmatpush1.bf16.msra.mxu0 %v2912
        %3018 = vmatprep.mubr.bf16.mxu0 %v2681
        %3019 = vmatmul.mubr.bf16.gmra.mrb[0].mxu0 %v2680
        %v3020 = vpop.f32.mrb[0].mxu0
        %v3021 = vadd.f32 %v2980, %v3020
        %v3022 = vpop.f32.mrb[0].mxu0
        %v3023 = vpop.f32.mrb[0].mxu0
        %v3024 = vadd.f32 %v2983, %v3023
        %v3025 = vpop.f32.mrb[0].mxu0
        %3026 = vdwg.mxu0
        %v3027 = vadd.f32 %v2303, %v3021
        %v3028 = vadd.f32 %v2304, %v3024
        %v3029 = vld [vmem:[%s784] sm:$0x1]
        %v3030 = vld [vmem:[%s787] sm:$0x1]
        %3031 = vadd.xlane.f32.xlu0 %v3027
        %v3032 = vpop.xlane.xlu0 %3031
        %3033 = vadd.xlane.f32.xlu0 %v3028
        %v3034 = vpop.xlane.xlu0 %3033
        %v3035 = vmul.f32 %v3032, %v2270
        %v3036 = vmul.f32 %v3034, %v2270
        %v3037 = vsub.f32 %v3027, %v3035
        %v3038 = vsub.f32 %v3028, %v3036
        %v3039 = vmul.f32 %v3037, %v3037
        %v3040 = vmul.f32 %v3038, %v3038
        %3041 = vadd.xlane.f32.xlu0 %v3039
        %v3042 = vpop.xlane.xlu0 %3041
        %3043 = vadd.xlane.f32.xlu0 %v3040
        %v3044 = vpop.xlane.xlu0 %3043
        %v3045 = vmul.f32 %v3042, %v2270
        %v3046 = vmul.f32 %v3044, %v2270
        %v3047 = vadd.f32 %v3045, 1e-12
        %v3048 = vadd.f32 %v3046, 1e-12
        %v3049 = vrsqrt.pop %v3047
        %v3050 = vrsqrt.pop %v3048
        %v3051 = vmul.f32 %v3037, %v3049
        %v3052 = vmul.f32 %v3038, %v3050
        %v3054 = vlaneseq
        %v3055 = vshrl.u32 %v3054, 7
        %v3056 = vsub.s32 0, %v3055
        %v3057 = vrot.slane %v3029, %v3056
        %v3059 = vmul.f32 %v3051, %v3057
        %v3060 = vmul.f32 %v3052, %v3057
        %v3062 = vlaneseq
        %v3063 = vshrl.u32 %v3062, 7
        %v3064 = vsub.s32 0, %v3063
        %v3065 = vrot.slane %v3030, %v3064
        %v3067 = vadd.f32 %v3059, %v3065
        %v3068 = vadd.f32 %v3060, %v3065
        %3069 = vst [vmem:[#allocation2] sm:$0xff] %v3067
        %3070 = vst [vmem:[#allocation2 + $0x8] sm:$0xff] %v3068
        %p3071 = scmp.eq.s32.totalorder %s34, 1
        // Predicated region
        $region93: #{behrt_demo_forward.1} parent=87 // pred_check
          %p3072 = pneg %p3071
        $region94: #{behrt_demo_forward.1} parent=87 // pred_check_branch
          %3074 = sbr.rel (%p3072) target = $region96
        $region95: #{behrt_demo_forward.1} parent=87 // pred_region
          %v3075 = vld [vmem:[%s741] sm:$0x3]
          %v3077 = vrot.slane %v3075, 1
          %v3080 = vadd.f32 %v3067, %v3075
          %v3081 = vadd.f32 %v3068, %v3077
          %v3084 = vrot.slane %v3081, 7
          %vm3085 = vcmask 1041409
          %v3086 = vsel %vm3085, %v3084, %v3080
          %3088 = vst [vmem:[#allocation3] sm:$0x3] %v3086
        $region96: #{behrt_demo_forward.1} parent=87 // pred_fallthru
          _
        // Predicated region
        $region97: #{behrt_demo_forward.1} parent=87 // pred_check
          %p3089 = pneg %p491
        $region98: #{behrt_demo_forward.1} parent=87 // pred_check_branch
          %3091 = sbr.rel (%p3089) target = $region100
        $region99: #{behrt_demo_forward.1} parent=87 // pred_region
          %s3093 = ssub.s32 32, 32
          %3094 = vsyncadd [#allocation4], %s3093
          %s3095 = smul.addr %s33, 32
          %s3096 = scalar_lea.hbm %s17, %s3095
          %s3098 = sshll.u32 [#allocation3], 4
          %s3099 = int_to_ptr.vmem [resolvable:$true] %s3098
          %3101 = dma.vmem_to_hbm [thread:$0]  %s3099, 32, %s3096, [#allocation4]
        $region100: #{behrt_demo_forward.1} parent=87 // pred_fallthru
          _
        // Predicated region
        $region101: #{behrt_demo_forward.1} parent=87 // pred_check
          %p3102 = pneg %p491
        $region102: #{behrt_demo_forward.1} parent=87 // pred_check_branch
          %3104 = sbr.rel (%p3102) target = $region104
        $region103: #{behrt_demo_forward.1} parent=87 // pred_region
          %3105 = dma.done [#allocation4], 32
        $region104: #{behrt_demo_forward.1} parent=87 // pred_fallthru
          _
      $region88: #{behrt_demo_forward.1} parent=5 // pred_fallthru
        _
      %p3106 = scmp.le.s32.totalorder 2, %s24
      // Predicated region
      $region105: #{behrt_demo_forward.1} parent=5 // pred_check
        %p3107 = pneg %p3106
      $region106: #{behrt_demo_forward.1} parent=5 // pred_check_branch
        %3109 = sbr.rel (%p3107) target = $region108
      $region107: #{behrt_demo_forward.1} parent=5 // pred_region
        %s3110 = ssub.s32 %s24, 2
      $region108: #{behrt_demo_forward.1} parent=5 // pred_fallthru
        _
    $region6: #{behrt_demo_forward.1} parent=1 // loop_footer
      %s28 = sadd.s32 1, %s24
    $region7: #{behrt_demo_forward.1} parent=1 // loop_footer_branch
      %23 = sbr.rel target = $region3
    $region8: #{behrt_demo_forward.1} parent=1 // loop_exit
      _
    %3111 = vsyncpa [#allocation4], 1
    %s3112 = scalar_lea.sflag [#allocation4], 1
    %3113 = vsyncpa %s3112, 1

</llo_original>
